<compile_context>
chip_gen: v7x
topology: tpu7x:2x2x1
jax: 0.10.0
libtpu: 0.0.40
codegen_flags: <defaults>
</compile_context>

<pallas_src>
import functools
import math

import jax
import jax.numpy as jnp
from jax.experimental import pallas as pl
from jax.experimental.pallas import tpu as pltpu


CONFIG = {
    'input_size': 8,          # sliding window length
    'output_size': 4,         # forecast horizon
    'state_hsize': 32,        # LSTM hidden size
    'num_of_categories': 2,   # width of info_cat one-hot
    'dilations': [[1, 2], [2]],   # 2 DRNN groups
    'rnn_cell_type': 'LSTM',
    'add_nl_layer': True,
    'seasonality': 4,
}

_OPAD = 128   # lane-dense padded width for the scoring-head output


# ---------------------------------------------------------------------------
# Fused Pallas kernel: DRNN stack (dilated LSTM layers + residual adds) + head
# ---------------------------------------------------------------------------
def _fused_forward_kernel(dilations, batch, add_nl, *refs):
    """Whole ResidualDRNN stack + head in one kernel invocation.

    Static args:
      dilations: tuple of tuples, per-group layer dilations.
      batch:     B (rows per timestep in the flat slabs).
      add_nl:    whether the Linear(H,H)+tanh nl_layer is applied.

    Ref layout (all 2-D, row index = t*B + b):
      x_ref                                   (T_pad*B, F0)
      per layer: wih_t (F,4H), whh_t (H,4H), b (1,4H)
      wnl_t (H,H), bnl (1,H), wsc_t (H,OPAD), bsc (1,OPAD)
      out_ref                                 (T_pad*B, OPAD)
      scratch: gx_buf (T_pad*B,4H), buf_a/buf_b/resid_buf (T_pad*B, H)

    Gate order follows PyTorch nn.LSTM: i, f, g, o.  Dilation d means the
    state at step t comes from step t-d (zeros for t < d).
    """
    n_layers = sum(len(g) for g in dilations)
    idx = 0
    x_ref = refs[idx]; idx += 1
    layer_refs = []
    for _ in range(n_layers):
        layer_refs.append(tuple(refs[idx:idx + 3]))
        idx += 3
    wnl_ref, bnl_ref, wsc_ref, bsc_ref = refs[idx:idx + 4]; idx += 4
    out_ref = refs[idx]; idx += 1
    gx_buf, buf_a, buf_b, resid_buf = refs[idx:idx + 4]

    B = batch
    H = layer_refs[0][1].shape[0]          # whh_t is (H, 4H)
    rows_total = x_ref.shape[0]
    T_pad = rows_total // B

    def run_layer(in_ref, wih_t_ref, whh_t_ref, b_ref, out_buf, d):
        # Hoisted input projection for the whole (padded) sequence:
        # one well-shaped (T_pad*B, F) x (F, 4H) matmul instead of T tiny ones.
        gx_buf[...] = (
            jnp.dot(in_ref[...], wih_t_ref[...],
                    preferred_element_type=jnp.float32) + b_ref[...])
        whh_t = whh_t_ref[...]
        rows = d * B
        h_prev = jnp.zeros((rows, H), jnp.float32)
        c_prev = jnp.zeros((rows, H), jnp.float32)
        # Dilation d => d independent chains; process d consecutive timesteps
        # (= `rows` contiguous buffer rows) per serial step: T_pad/d steps.
        # Static Python loop over a short, fixed trip count (<= T_pad).
        for s in range(T_pad // d):
            start = s * rows
            gates = gx_buf[pl.ds(start, rows), :] + jnp.dot(
                h_prev, whh_t, preferred_element_type=jnp.float32)
            i_g = jax.nn.sigmoid(gates[:, 0:H])
            f_g = jax.nn.sigmoid(gates[:, H:2 * H])
            g_g = jnp.tanh(gates[:, 2 * H:3 * H])
            o_g = jax.nn.sigmoid(gates[:, 3 * H:4 * H])
            c_prev = f_g * c_prev + i_g * g_g
            h_prev = o_g * jnp.tanh(c_prev)
            out_buf[pl.ds(start, rows), :] = h_prev

    # Static schedule over groups / layers (ping-pong between two VMEM bufs).
    bufs = (buf_a, buf_b)
    buf_sel = 0
    cur = None
    li = 0
    for g, group in enumerate(dilations):
        if g > 0:
            resid_buf[...] = cur[...]       # save group input for residual add
        for k, d in enumerate(group):
            wih, whh, b = layer_refs[li]; li += 1
            in_ref = x_ref if (g == 0 and k == 0) else cur
            out_buf = bufs[buf_sel]
            run_layer(in_ref, wih, whh, b, out_buf, int(d))
            cur = out_buf
            buf_sel = 1 - buf_sel
        if g > 0:
            cur[...] = cur[...] + resid_buf[...]

    # Head: optional (Linear(H,H) + tanh), then scoring Linear, written to a
    # lane-dense (OPAD = 128) padded output slab.
    h = cur[...]
    if add_nl:
        h = jnp.tanh(jnp.dot(h, wnl_ref[...],
                             preferred_element_type=jnp.float32) + bnl_ref[...])
    out_ref[...] = (jnp.dot(h, wsc_ref[...],
                            preferred_element_type=jnp.float32) + bsc_ref[...])


def fused_series_forward(packed, config, window_input):
    """window_input: (T, B, F0) -> scores (T, B, output_size)."""
    T, B, F0 = window_input.shape
    H = config['state_hsize']
    O = config['output_size']
    dils = tuple(tuple(int(d) for d in grp) for grp in config['dilations'])

    # Pad T to a multiple of every dilation so each layer's blocked recurrence
    # has whole blocks; pad rows never feed valid timesteps (causality) and are
    # sliced off below.
    lcm = 1
    for grp in dils:
        for d in grp:
            lcm = lcm * d // math.gcd(lcm, d)
    T_pad = ((T + lcm - 1) // lcm) * lcm

    x = jnp.pad(window_input.astype(jnp.float32),
                ((0, T_pad - T), (0, 0), (0, 0)))
    x2d = x.reshape(T_pad * B, F0)

    inputs = [x2d]
    for layer in packed['layers']:
        inputs += [layer['wih_t'], layer['whh_t'], layer['b']]
    inputs += [packed['wnl_t'], packed['bnl'], packed['wsc_t'], packed['bsc']]

    kernel = functools.partial(_fused_forward_kernel, dils, B,
                               bool(config['add_nl_layer']))
    # TODO(synk): for production batch sizes add a 'parallel' grid over B
    # (B_tile sized against v7x's 64 MiB VMEM); pointless at B=2.
    out2d = pl.pallas_call(
        kernel,
        out_shape=jax.ShapeDtypeStruct((T_pad * B, _OPAD), jnp.float32),
        in_specs=[pl.BlockSpec(memory_space=pltpu.MemorySpace.VMEM)] * len(inputs),
        out_specs=pl.BlockSpec(memory_space=pltpu.MemorySpace.VMEM),
        scratch_shapes=[
            pltpu.VMEM((T_pad * B, 4 * H), jnp.float32),   # hoisted input gates
            pltpu.VMEM((T_pad * B, H), jnp.float32),       # ping buffer
            pltpu.VMEM((T_pad * B, H), jnp.float32),       # pong buffer
            pltpu.VMEM((T_pad * B, H), jnp.float32),       # residual save
        ],
    )(*inputs)
    return out2d.reshape(T_pad, B, _OPAD)[:T, :, :O]


# ---------------------------------------------------------------------------
# Parameters (PyTorch-equivalent init) + one-time packing for the kernel
# ---------------------------------------------------------------------------
def init_params(key, config):
    H = config['state_hsize']
    bound = float(1.0 / (H ** 0.5))

    def uni(k, shape):
        return jax.random.uniform(k, shape, jnp.float32, -bound, bound)

    keys = iter(jax.random.split(key, 64))
    params = {'drnn': []}
    for grp_num, dils in enumerate(config['dilations']):
        grp_in = (config['input_size'] + config['num_of_categories']
                  if grp_num == 0 else H)
        group = []
        for li, d in enumerate(dils):
            in_sz = grp_in if li == 0 else H
            w_ih = uni(next(keys), (4 * H, in_sz))
            w_hh = uni(next(keys), (4 * H, H))
            b_ih = uni(next(keys), (4 * H,))
            b_hh = uni(next(keys), (4 * H,))
            group.append({'w_ih': w_ih, 'w_hh': w_hh,
                          'b': b_ih + b_hh, 'dilation': d})
        params['drnn'].append(group)
    params['w_nl'] = uni(next(keys), (H, H))
    params['b_nl'] = uni(next(keys), (H,))
    params['w_sc'] = uni(next(keys), (config['output_size'], H))
    params['b_sc'] = uni(next(keys), (config['output_size'],))
    return params


def pack_params(params, config):
    """One-time transpose / pad of weights into the kernel's layout."""
    H = config['state_hsize']
    O = config['output_size']
    layers = []
    for group in params['drnn']:
        for layer in group:
            layers.append({
                'wih_t': jnp.asarray(layer['w_ih'].T, jnp.float32),
                'whh_t': jnp.asarray(layer['w_hh'].T, jnp.float32),
                'b': jnp.asarray(layer['b'].reshape(1, -1), jnp.float32),
            })
    wsc_t = jnp.zeros((H, _OPAD), jnp.float32).at[:, :O].set(
        jnp.asarray(params['w_sc'].T, jnp.float32))
    bsc = jnp.zeros((1, _OPAD), jnp.float32).at[0, :O].set(
        jnp.asarray(params['b_sc'], jnp.float32))
    return {
        'layers': layers,
        'wnl_t': jnp.asarray(params['w_nl'].T, jnp.float32),
        'bnl': jnp.asarray(params['b_nl'].reshape(1, -1), jnp.float32),
        'wsc_t': wsc_t,
        'bsc': bsc,
    }


# ---------------------------------------------------------------------------
# Full ResidualDRNN_Main forward (glue in plain JAX, hot path in the kernel)
# ---------------------------------------------------------------------------
def residual_drnn_main_forward(packed, config, train, resid, trend, seasonal,
                               mean, std, val, info_cat):
    del train  # not used by this forward (matches the reference behaviour)
    resid = resid.astype(jnp.float32)
    trend = trend.astype(jnp.float32)
    seasonal = seasonal.astype(jnp.float32)
    mean = mean.astype(jnp.float32)
    std = std.astype(jnp.float32)
    info_cat = info_cat.astype(jnp.float32)

    isz = config['input_size']
    osz = config['output_size']
    B, L = resid.shape
    T_full = L - isz + 1
    T_train = T_full - osz

    # Sliding windows via a single gather (replaces the per-i Python loop).
    win_idx = jnp.arange(T_full)[:, None] + jnp.arange(isz)[None, :]
    windows = jnp.transpose(resid[:, win_idx], (1, 0, 2))         # (T, B, isz)
    info = jnp.broadcast_to(info_cat[None, :, :],
                            (T_full, B, info_cat.shape[1]))
    window_input = jnp.concatenate([windows, info], axis=2)        # (T, B, F0)

    out_idx = isz + jnp.arange(T_train)[:, None] + jnp.arange(osz)[None, :]
    network_act = jnp.transpose(resid[:, out_idx], (1, 0, 2))      # (T-osz,B,osz)

    # Single fused forward pass; network_pred is just a causal slice of it
    # (the reference module's second series_forward call is redundant).
    # NOTE: self.train()/self.eval() are no-ops here (no dropout / batchnorm).
    network_output_non_train = fused_series_forward(packed, config,
                                                    window_input)
    network_pred = network_output_non_train[:T_train]

    hold_out_pred = network_output_non_train[-1]                   # (B, osz)
    hold_out_pred = hold_out_pred * std.reshape(-1, 1) + mean.reshape(-1, 1)
    # `last_step = trend[:,-1:] - trend[:,-2:-1]` is computed but unused in the
    # reference module, so it is intentionally omitted.
    hold_out_pred = hold_out_pred + trend[:, -1:]
    last_season = seasonal[:, -config['seasonality']:]
    season_idx = jnp.arange(osz) % config['seasonality']
    hold_out_pred = hold_out_pred + last_season[:, season_idx]
    hold_out_act = val

    return (network_pred, network_act, network_output_non_train,
            hold_out_pred, hold_out_act)


# ---------------------------------------------------------------------------
if __name__ == "__main__":
    key = jax.random.PRNGKey(0)
    kp, k1, k2, k3, k4, k5, k6, k7 = jax.random.split(key, 8)

    B, L = 2, 16
    train = jax.random.normal(k1, (B, L), jnp.float32)
    resid = jax.random.normal(k2, (B, L), jnp.float32)
    trend = jax.random.normal(k3, (B, L), jnp.float32)
    seasonal = jax.random.normal(k4, (B, L), jnp.float32)
    mean = jax.random.normal(k5, (B,), jnp.float32)
    std = jax.random.uniform(k6, (B,), jnp.float32, 0.5, 1.5)
    val = jax.random.normal(k7, (B, CONFIG['output_size']), jnp.float32)
    info_cat = jnp.eye(CONFIG['num_of_categories'], dtype=jnp.float32)[
        jnp.arange(B) % CONFIG['num_of_categories']]

    params = init_params(kp, CONFIG)
    packed = pack_params(params, CONFIG)   # weights packed once, not per call

    @jax.jit
    def fwd(packed, train, resid, trend, seasonal, mean, std, val, info_cat):
        return residual_drnn_main_forward(packed, CONFIG, train, resid, trend,
                                          seasonal, mean, std, val, info_cat)

    outs = fwd(packed, train, resid, trend, seasonal, mean, std, val, info_cat)
    outs = jax.block_until_ready(outs)

    net_pred, net_act, net_out_nt, ho_pred, ho_act = outs
    T_full = L - CONFIG['input_size'] + 1
    assert net_pred.shape == (T_full - CONFIG['output_size'], B,
                              CONFIG['output_size'])
    assert net_act.shape == net_pred.shape
    assert net_out_nt.shape == (T_full, B, CONFIG['output_size'])
    assert ho_pred.shape == (B, CONFIG['output_size'])
    assert ho_act.shape == (B, CONFIG['output_size'])
    assert all(bool(jnp.all(jnp.isfinite(o))) for o in
               (net_pred, net_act, net_out_nt, ho_pred, ho_act))
    print("KERNEL_OK")
</pallas_src>

<mosaic_0001>
module attributes {stable_mosaic.version = 11 : i64} {
  func.func @_fused_forward_kernel(%arg0: memref<20x10xf32, #tpu.memory_space<vmem>>, %arg1: memref<10x128xf32, #tpu.memory_space<vmem>>, %arg2: memref<32x128xf32, #tpu.memory_space<vmem>>, %arg3: memref<1x128xf32, #tpu.memory_space<vmem>>, %arg4: memref<32x128xf32, #tpu.memory_space<vmem>>, %arg5: memref<32x128xf32, #tpu.memory_space<vmem>>, %arg6: memref<1x128xf32, #tpu.memory_space<vmem>>, %arg7: memref<32x128xf32, #tpu.memory_space<vmem>>, %arg8: memref<32x128xf32, #tpu.memory_space<vmem>>, %arg9: memref<1x128xf32, #tpu.memory_space<vmem>>, %arg10: memref<32x32xf32, #tpu.memory_space<vmem>>, %arg11: memref<1x32xf32, #tpu.memory_space<vmem>>, %arg12: memref<32x128xf32, #tpu.memory_space<vmem>>, %arg13: memref<1x128xf32, #tpu.memory_space<vmem>>, %arg14: memref<20x128xf32, #tpu.memory_space<vmem>>, %arg15: memref<20x128xf32, #tpu.memory_space<vmem>>, %arg16: memref<20x32xf32, #tpu.memory_space<vmem>>, %arg17: memref<20x32xf32, #tpu.memory_space<vmem>>, %arg18: memref<20x32xf32, #tpu.memory_space<vmem>>) attributes {dimension_semantics = [], scalar_prefetch = 0 : i64, scratch_operands = 4 : i64, tpu.core_type = #tpu.core_type<tc>} {
    %c0 = arith.constant 0 : index
    %c0_0 = arith.constant 0 : index
    %0 = vector.load %arg0[%c0, %c0_0] : memref<20x10xf32, #tpu.memory_space<vmem>>, vector<20x10xf32>
    %c0_1 = arith.constant 0 : index
    %c0_2 = arith.constant 0 : index
    %1 = vector.load %arg1[%c0_1, %c0_2] : memref<10x128xf32, #tpu.memory_space<vmem>>, vector<10x128xf32>
    %cst = arith.constant dense<0.000000e+00> : vector<20x128xf32>
    %2 = tpu.matmul %0, %1, %cst {dimension_numbers = #tpu.dot_dimension_numbers<[1], [0], [0], [1], [0, 0, 1, 1], [], []>} : vector<20x10xf32>, vector<10x128xf32>, vector<20x128xf32> -> vector<20x128xf32>
    %c0_3 = arith.constant 0 : index
    %c0_4 = arith.constant 0 : index
    %3 = vector.load %arg3[%c0_3, %c0_4] : memref<1x128xf32, #tpu.memory_space<vmem>>, vector<1x128xf32>
    %4 = vector.broadcast %3 : vector<1x128xf32> to vector<20x128xf32>
    %5 = arith.addf %2, %4 : vector<20x128xf32>
    %c0_5 = arith.constant 0 : index
    %c0_6 = arith.constant 0 : index
    %6 = vector.load %arg15[%c0_5, %c0_6] : memref<20x128xf32, #tpu.memory_space<vmem>>, vector<20x128xf32>
    tpu.vector_store %arg15[%c0_5, %c0_6], %5 {strides = array<i32>} : memref<20x128xf32, #tpu.memory_space<vmem>>, vector<20x128xf32>,
    %c0_7 = arith.constant 0 : index
    %c0_8 = arith.constant 0 : index
    %7 = vector.load %arg2[%c0_7, %c0_8] : memref<32x128xf32, #tpu.memory_space<vmem>>, vector<32x128xf32>
    %cst_9 = arith.constant 0.000000e+00 : f32
    %8 = vector.broadcast %cst_9 : f32 to vector<2x32xf32>
    %cst_10 = arith.constant 0.000000e+00 : f32
    %9 = vector.broadcast %cst_10 : f32 to vector<2x32xf32>
    %c0_11 = arith.constant 0 : index
    %c0_12 = arith.constant 0 : index
    %10 = vector.load %arg15[%c0_11, %c0_12] : memref<20x128xf32, #tpu.memory_space<vmem>>, vector<2x128xf32>
    %cst_13 = arith.constant dense<0.000000e+00> : vector<2x128xf32>
    %11 = tpu.matmul %8, %7, %cst_13 {dimension_numbers = #tpu.dot_dimension_numbers<[1], [0], [0], [1], [0, 0, 1, 1], [], []>} : vector<2x32xf32>, vector<32x128xf32>, vector<2x128xf32> -> vector<2x128xf32>
    %12 = arith.addf %10, %11 : vector<2x128xf32>
    %13 = vector.extract_strided_slice %12 {offsets = [0, 0], sizes = [2, 32], strides = [1, 1]} : vector<2x128xf32> to vector<2x32xf32>
    %14 = arith.negf %13 : vector<2x32xf32>
    %15 = math.exp %14 : vector<2x32xf32>
    %cst_14 = arith.constant 1.000000e+00 : f32
    %16 = vector.broadcast %cst_14 : f32 to vector<2x32xf32>
    %17 = arith.addf %16, %15 : vector<2x32xf32>
    %18 = arith.divf %16, %17 : vector<2x32xf32>
    %19 = vector.extract_strided_slice %12 {offsets = [0, 32], sizes = [2, 32], strides = [1, 1]} : vector<2x128xf32> to vector<2x32xf32>
    %20 = arith.negf %19 : vector<2x32xf32>
    %21 = math.exp %20 : vector<2x32xf32>
    %cst_15 = arith.constant 1.000000e+00 : f32
    %22 = vector.broadcast %cst_15 : f32 to vector<2x32xf32>
    %23 = arith.addf %22, %21 : vector<2x32xf32>
    %24 = arith.divf %22, %23 : vector<2x32xf32>
    %25 = vector.extract_strided_slice %12 {offsets = [0, 64], sizes = [2, 32], strides = [1, 1]} : vector<2x128xf32> to vector<2x32xf32>
    %26 = math.tanh %25 : vector<2x32xf32>
    %27 = vector.extract_strided_slice %12 {offsets = [0, 96], sizes = [2, 32], strides = [1, 1]} : vector<2x128xf32> to vector<2x32xf32>
    %28 = arith.negf %27 : vector<2x32xf32>
    %29 = math.exp %28 : vector<2x32xf32>
    %cst_16 = arith.constant 1.000000e+00 : f32
    %30 = vector.broadcast %cst_16 : f32 to vector<2x32xf32>
    %31 = arith.addf %30, %29 : vector<2x32xf32>
    %32 = arith.divf %30, %31 : vector<2x32xf32>
    %33 = arith.mulf %24, %9 : vector<2x32xf32>
    %34 = arith.mulf %18, %26 : vector<2x32xf32>
    %35 = arith.addf %33, %34 : vector<2x32xf32>
    %36 = math.tanh %35 : vector<2x32xf32>
    %37 = arith.mulf %32, %36 : vector<2x32xf32>
    %c0_17 = arith.constant 0 : index
    %c0_18 = arith.constant 0 : index
    %38 = vector.load %arg16[%c0_17, %c0_18] : memref<20x32xf32, #tpu.memory_space<vmem>>, vector<2x32xf32>
    tpu.vector_store %arg16[%c0_17, %c0_18], %37 {strides = array<i32>} : memref<20x32xf32, #tpu.memory_space<vmem>>, vector<2x32xf32>,
    %c2 = arith.constant 2 : index
    %c0_19 = arith.constant 0 : index
    %39 = vector.load %arg15[%c2, %c0_19] : memref<20x128xf32, #tpu.memory_space<vmem>>, vector<2x128xf32>
    %cst_20 = arith.constant dense<0.000000e+00> : vector<2x128xf32>
    %40 = tpu.matmul %37, %7, %cst_20 {dimension_numbers = #tpu.dot_dimension_numbers<[1], [0], [0], [1], [0, 0, 1, 1], [], []>} : vector<2x32xf32>, vector<32x128xf32>, vector<2x128xf32> -> vector<2x128xf32>
    %41 = arith.addf %39, %40 : vector<2x128xf32>
    %42 = vector.extract_strided_slice %41 {offsets = [0, 0], sizes = [2, 32], strides = [1, 1]} : vector<2x128xf32> to vector<2x32xf32>
    %43 = arith.negf %42 : vector<2x32xf32>
    %44 = math.exp %43 : vector<2x32xf32>
    %cst_21 = arith.constant 1.000000e+00 : f32
    %45 = vector.broadcast %cst_21 : f32 to vector<2x32xf32>
    %46 = arith.addf %45, %44 : vector<2x32xf32>
    %47 = arith.divf %45, %46 : vector<2x32xf32>
    %48 = vector.extract_strided_slice %41 {offsets = [0, 32], sizes = [2, 32], strides = [1, 1]} : vector<2x128xf32> to vector<2x32xf32>
    %49 = arith.negf %48 : vector<2x32xf32>
    %50 = math.exp %49 : vector<2x32xf32>
    %cst_22 = arith.constant 1.000000e+00 : f32
    %51 = vector.broadcast %cst_22 : f32 to vector<2x32xf32>
    %52 = arith.addf %51, %50 : vector<2x32xf32>
    %53 = arith.divf %51, %52 : vector<2x32xf32>
    %54 = vector.extract_strided_slice %41 {offsets = [0, 64], sizes = [2, 32], strides = [1, 1]} : vector<2x128xf32> to vector<2x32xf32>
    %55 = math.tanh %54 : vector<2x32xf32>
    %56 = vector.extract_strided_slice %41 {offsets = [0, 96], sizes = [2, 32], strides = [1, 1]} : vector<2x128xf32> to vector<2x32xf32>
    %57 = arith.negf %56 : vector<2x32xf32>
    %58 = math.exp %57 : vector<2x32xf32>
    %cst_23 = arith.constant 1.000000e+00 : f32
    %59 = vector.broadcast %cst_23 : f32 to vector<2x32xf32>
    %60 = arith.addf %59, %58 : vector<2x32xf32>
    %61 = arith.divf %59, %60 : vector<2x32xf32>
    %62 = arith.mulf %53, %35 : vector<2x32xf32>
    %63 = arith.mulf %47, %55 : vector<2x32xf32>
    %64 = arith.addf %62, %63 : vector<2x32xf32>
    %65 = math.tanh %64 : vector<2x32xf32>
    %66 = arith.mulf %61, %65 : vector<2x32xf32>
    %c2_24 = arith.constant 2 : index
    %c0_25 = arith.constant 0 : index
    %67 = vector.load %arg16[%c2_24, %c0_25] : memref<20x32xf32, #tpu.memory_space<vmem>>, vector<2x32xf32>
    tpu.vector_store %arg16[%c2_24, %c0_25], %66 {strides = array<i32>} : memref<20x32xf32, #tpu.memory_space<vmem>>, vector<2x32xf32>,
    %c4 = arith.constant 4 : index
    %c0_26 = arith.constant 0 : index
    %68 = vector.load %arg15[%c4, %c0_26] : memref<20x128xf32, #tpu.memory_space<vmem>>, vector<2x128xf32>
    %cst_27 = arith.constant dense<0.000000e+00> : vector<2x128xf32>
    %69 = tpu.matmul %66, %7, %cst_27 {dimension_numbers = #tpu.dot_dimension_numbers<[1], [0], [0], [1], [0, 0, 1, 1], [], []>} : vector<2x32xf32>, vector<32x128xf32>, vector<2x128xf32> -> vector<2x128xf32>
    %70 = arith.addf %68, %69 : vector<2x128xf32>
    %71 = vector.extract_strided_slice %70 {offsets = [0, 0], sizes = [2, 32], strides = [1, 1]} : vector<2x128xf32> to vector<2x32xf32>
    %72 = arith.negf %71 : vector<2x32xf32>
    %73 = math.exp %72 : vector<2x32xf32>
    %cst_28 = arith.constant 1.000000e+00 : f32
    %74 = vector.broadcast %cst_28 : f32 to vector<2x32xf32>
    %75 = arith.addf %74, %73 : vector<2x32xf32>
    %76 = arith.divf %74, %75 : vector<2x32xf32>
    %77 = vector.extract_strided_slice %70 {offsets = [0, 32], sizes = [2, 32], strides = [1, 1]} : vector<2x128xf32> to vector<2x32xf32>
    %78 = arith.negf %77 : vector<2x32xf32>
    %79 = math.exp %78 : vector<2x32xf32>
    %cst_29 = arith.constant 1.000000e+00 : f32
    %80 = vector.broadcast %cst_29 : f32 to vector<2x32xf32>
    %81 = arith.addf %80, %79 : vector<2x32xf32>
    %82 = arith.divf %80, %81 : vector<2x32xf32>
    %83 = vector.extract_strided_slice %70 {offsets = [0, 64], sizes = [2, 32], strides = [1, 1]} : vector<2x128xf32> to vector<2x32xf32>
    %84 = math.tanh %83 : vector<2x32xf32>
    %85 = vector.extract_strided_slice %70 {offsets = [0, 96], sizes = [2, 32], strides = [1, 1]} : vector<2x128xf32> to vector<2x32xf32>
    %86 = arith.negf %85 : vector<2x32xf32>
    %87 = math.exp %86 : vector<2x32xf32>
    %cst_30 = arith.constant 1.000000e+00 : f32
    %88 = vector.broadcast %cst_30 : f32 to vector<2x32xf32>
    %89 = arith.addf %88, %87 : vector<2x32xf32>
    %90 = arith.divf %88, %89 : vector<2x32xf32>
    %91 = arith.mulf %82, %64 : vector<2x32xf32>
    %92 = arith.mulf %76, %84 : vector<2x32xf32>
    %93 = arith.addf %91, %92 : vector<2x32xf32>
    %94 = math.tanh %93 : vector<2x32xf32>
    %95 = arith.mulf %90, %94 : vector<2x32xf32>
    %c4_31 = arith.constant 4 : index
    %c0_32 = arith.constant 0 : index
    %96 = vector.load %arg16[%c4_31, %c0_32] : memref<20x32xf32, #tpu.memory_space<vmem>>, vector<2x32xf32>
    tpu.vector_store %arg16[%c4_31, %c0_32], %95 {strides = array<i32>} : memref<20x32xf32, #tpu.memory_space<vmem>>, vector<2x32xf32>,
    %c6 = arith.constant 6 : index
    %c0_33 = arith.constant 0 : index
    %97 = vector.load %arg15[%c6, %c0_33] : memref<20x128xf32, #tpu.memory_space<vmem>>, vector<2x128xf32>
    %cst_34 = arith.constant dense<0.000000e+00> : vector<2x128xf32>
    %98 = tpu.matmul %95, %7, %cst_34 {dimension_numbers = #tpu.dot_dimension_numbers<[1], [0], [0], [1], [0, 0, 1, 1], [], []>} : vector<2x32xf32>, vector<32x128xf32>, vector<2x128xf32> -> vector<2x128xf32>
    %99 = arith.addf %97, %98 : vector<2x128xf32>
    %100 = vector.extract_strided_slice %99 {offsets = [0, 0], sizes = [2, 32], strides = [1, 1]} : vector<2x128xf32> to vector<2x32xf32>
    %101 = arith.negf %100 : vector<2x32xf32>
    %102 = math.exp %101 : vector<2x32xf32>
    %cst_35 = arith.constant 1.000000e+00 : f32
    %103 = vector.broadcast %cst_35 : f32 to vector<2x32xf32>
    %104 = arith.addf %103, %102 : vector<2x32xf32>
    %105 = arith.divf %103, %104 : vector<2x32xf32>
    %106 = vector.extract_strided_slice %99 {offsets = [0, 32], sizes = [2, 32], strides = [1, 1]} : vector<2x128xf32> to vector<2x32xf32>
    %107 = arith.negf %106 : vector<2x32xf32>
    %108 = math.exp %107 : vector<2x32xf32>
    %cst_36 = arith.constant 1.000000e+00 : f32
    %109 = vector.broadcast %cst_36 : f32 to vector<2x32xf32>
    %110 = arith.addf %109, %108 : vector<2x32xf32>
    %111 = arith.divf %109, %110 : vector<2x32xf32>
    %112 = vector.extract_strided_slice %99 {offsets = [0, 64], sizes = [2, 32], strides = [1, 1]} : vector<2x128xf32> to vector<2x32xf32>
    %113 = math.tanh %112 : vector<2x32xf32>
    %114 = vector.extract_strided_slice %99 {offsets = [0, 96], sizes = [2, 32], strides = [1, 1]} : vector<2x128xf32> to vector<2x32xf32>
    %115 = arith.negf %114 : vector<2x32xf32>
    %116 = math.exp %115 : vector<2x32xf32>
    %cst_37 = arith.constant 1.000000e+00 : f32
    %117 = vector.broadcast %cst_37 : f32 to vector<2x32xf32>
    %118 = arith.addf %117, %116 : vector<2x32xf32>
    %119 = arith.divf %117, %118 : vector<2x32xf32>
    %120 = arith.mulf %111, %93 : vector<2x32xf32>
    %121 = arith.mulf %105, %113 : vector<2x32xf32>
    %122 = arith.addf %120, %121 : vector<2x32xf32>
    %123 = math.tanh %122 : vector<2x32xf32>
    %124 = arith.mulf %119, %123 : vector<2x32xf32>
    %c6_38 = arith.constant 6 : index
    %c0_39 = arith.constant 0 : index
    %125 = vector.load %arg16[%c6_38, %c0_39] : memref<20x32xf32, #tpu.memory_space<vmem>>, vector<2x32xf32>
    tpu.vector_store %arg16[%c6_38, %c0_39], %124 {strides = array<i32>} : memref<20x32xf32, #tpu.memory_space<vmem>>, vector<2x32xf32>,
    %c8 = arith.constant 8 : index
    %c0_40 = arith.constant 0 : index
    %126 = vector.load %arg15[%c8, %c0_40] : memref<20x128xf32, #tpu.memory_space<vmem>>, vector<2x128xf32>
    %cst_41 = arith.constant dense<0.000000e+00> : vector<2x128xf32>
    %127 = tpu.matmul %124, %7, %cst_41 {dimension_numbers = #tpu.dot_dimension_numbers<[1], [0], [0], [1], [0, 0, 1, 1], [], []>} : vector<2x32xf32>, vector<32x128xf32>, vector<2x128xf32> -> vector<2x128xf32>
    %128 = arith.addf %126, %127 : vector<2x128xf32>
    %129 = vector.extract_strided_slice %128 {offsets = [0, 0], sizes = [2, 32], strides = [1, 1]} : vector<2x128xf32> to vector<2x32xf32>
    %130 = arith.negf %129 : vector<2x32xf32>
    %131 = math.exp %130 : vector<2x32xf32>
    %cst_42 = arith.constant 1.000000e+00 : f32
    %132 = vector.broadcast %cst_42 : f32 to vector<2x32xf32>
    %133 = arith.addf %132, %131 : vector<2x32xf32>
    %134 = arith.divf %132, %133 : vector<2x32xf32>
    %135 = vector.extract_strided_slice %128 {offsets = [0, 32], sizes = [2, 32], strides = [1, 1]} : vector<2x128xf32> to vector<2x32xf32>
    %136 = arith.negf %135 : vector<2x32xf32>
    %137 = math.exp %136 : vector<2x32xf32>
    %cst_43 = arith.constant 1.000000e+00 : f32
    %138 = vector.broadcast %cst_43 : f32 to vector<2x32xf32>
    %139 = arith.addf %138, %137 : vector<2x32xf32>
    %140 = arith.divf %138, %139 : vector<2x32xf32>
    %141 = vector.extract_strided_slice %128 {offsets = [0, 64], sizes = [2, 32], strides = [1, 1]} : vector<2x128xf32> to vector<2x32xf32>
    %142 = math.tanh %141 : vector<2x32xf32>
    %143 = vector.extract_strided_slice %128 {offsets = [0, 96], sizes = [2, 32], strides = [1, 1]} : vector<2x128xf32> to vector<2x32xf32>
    %144 = arith.negf %143 : vector<2x32xf32>
    %145 = math.exp %144 : vector<2x32xf32>
    %cst_44 = arith.constant 1.000000e+00 : f32
    %146 = vector.broadcast %cst_44 : f32 to vector<2x32xf32>
    %147 = arith.addf %146, %145 : vector<2x32xf32>
    %148 = arith.divf %146, %147 : vector<2x32xf32>
    %149 = arith.mulf %140, %122 : vector<2x32xf32>
    %150 = arith.mulf %134, %142 : vector<2x32xf32>
    %151 = arith.addf %149, %150 : vector<2x32xf32>
    %152 = math.tanh %151 : vector<2x32xf32>
    %153 = arith.mulf %148, %152 : vector<2x32xf32>
    %c8_45 = arith.constant 8 : index
    %c0_46 = arith.constant 0 : index
    %154 = vector.load %arg16[%c8_45, %c0_46] : memref<20x32xf32, #tpu.memory_space<vmem>>, vector<2x32xf32>
    tpu.vector_store %arg16[%c8_45, %c0_46], %153 {strides = array<i32>} : memref<20x32xf32, #tpu.memory_space<vmem>>, vector<2x32xf32>,
    %c10 = arith.constant 10 : index
    %c0_47 = arith.constant 0 : index
    %155 = vector.load %arg15[%c10, %c0_47] : memref<20x128xf32, #tpu.memory_space<vmem>>, vector<2x128xf32>
    %cst_48 = arith.constant dense<0.000000e+00> : vector<2x128xf32>
    %156 = tpu.matmul %153, %7, %cst_48 {dimension_numbers = #tpu.dot_dimension_numbers<[1], [0], [0], [1], [0, 0, 1, 1], [], []>} : vector<2x32xf32>, vector<32x128xf32>, vector<2x128xf32> -> vector<2x128xf32>
    %157 = arith.addf %155, %156 : vector<2x128xf32>
    %158 = vector.extract_strided_slice %157 {offsets = [0, 0], sizes = [2, 32], strides = [1, 1]} : vector<2x128xf32> to vector<2x32xf32>
    %159 = arith.negf %158 : vector<2x32xf32>
    %160 = math.exp %159 : vector<2x32xf32>
    %cst_49 = arith.constant 1.000000e+00 : f32
    %161 = vector.broadcast %cst_49 : f32 to vector<2x32xf32>
    %162 = arith.addf %161, %160 : vector<2x32xf32>
    %163 = arith.divf %161, %162 : vector<2x32xf32>
    %164 = vector.extract_strided_slice %157 {offsets = [0, 32], sizes = [2, 32], strides = [1, 1]} : vector<2x128xf32> to vector<2x32xf32>
    %165 = arith.negf %164 : vector<2x32xf32>
    %166 = math.exp %165 : vector<2x32xf32>
    %cst_50 = arith.constant 1.000000e+00 : f32
    %167 = vector.broadcast %cst_50 : f32 to vector<2x32xf32>
    %168 = arith.addf %167, %166 : vector<2x32xf32>
    %169 = arith.divf %167, %168 : vector<2x32xf32>
    %170 = vector.extract_strided_slice %157 {offsets = [0, 64], sizes = [2, 32], strides = [1, 1]} : vector<2x128xf32> to vector<2x32xf32>
    %171 = math.tanh %170 : vector<2x32xf32>
    %172 = vector.extract_strided_slice %157 {offsets = [0, 96], sizes = [2, 32], strides = [1, 1]} : vector<2x128xf32> to vector<2x32xf32>
    %173 = arith.negf %172 : vector<2x32xf32>
    %174 = math.exp %173 : vector<2x32xf32>
    %cst_51 = arith.constant 1.000000e+00 : f32
    %175 = vector.broadcast %cst_51 : f32 to vector<2x32xf32>
    %176 = arith.addf %175, %174 : vector<2x32xf32>
    %177 = arith.divf %175, %176 : vector<2x32xf32>
    %178 = arith.mulf %169, %151 : vector<2x32xf32>
    %179 = arith.mulf %163, %171 : vector<2x32xf32>
    %180 = arith.addf %178, %179 : vector<2x32xf32>
    %181 = math.tanh %180 : vector<2x32xf32>
    %182 = arith.mulf %177, %181 : vector<2x32xf32>
    %c10_52 = arith.constant 10 : index
    %c0_53 = arith.constant 0 : index
    %183 = vector.load %arg16[%c10_52, %c0_53] : memref<20x32xf32, #tpu.memory_space<vmem>>, vector<2x32xf32>
    tpu.vector_store %arg16[%c10_52, %c0_53], %182 {strides = array<i32>} : memref<20x32xf32, #tpu.memory_space<vmem>>, vector<2x32xf32>,
    %c12 = arith.constant 12 : index
    %c0_54 = arith.constant 0 : index
    %184 = vector.load %arg15[%c12, %c0_54] : memref<20x128xf32, #tpu.memory_space<vmem>>, vector<2x128xf32>
    %cst_55 = arith.constant dense<0.000000e+00> : vector<2x128xf32>
    %185 = tpu.matmul %182, %7, %cst_55 {dimension_numbers = #tpu.dot_dimension_numbers<[1], [0], [0], [1], [0, 0, 1, 1], [], []>} : vector<2x32xf32>, vector<32x128xf32>, vector<2x128xf32> -> vector<2x128xf32>
    %186 = arith.addf %184, %185 : vector<2x128xf32>
    %187 = vector.extract_strided_slice %186 {offsets = [0, 0], sizes = [2, 32], strides = [1, 1]} : vector<2x128xf32> to vector<2x32xf32>
    %188 = arith.negf %187 : vector<2x32xf32>
    %189 = math.exp %188 : vector<2x32xf32>
    %cst_56 = arith.constant 1.000000e+00 : f32
    %190 = vector.broadcast %cst_56 : f32 to vector<2x32xf32>
    %191 = arith.addf %190, %189 : vector<2x32xf32>
    %192 = arith.divf %190, %191 : vector<2x32xf32>
    %193 = vector.extract_strided_slice %186 {offsets = [0, 32], sizes = [2, 32], strides = [1, 1]} : vector<2x128xf32> to vector<2x32xf32>
    %194 = arith.negf %193 : vector<2x32xf32>
    %195 = math.exp %194 : vector<2x32xf32>
    %cst_57 = arith.constant 1.000000e+00 : f32
    %196 = vector.broadcast %cst_57 : f32 to vector<2x32xf32>
    %197 = arith.addf %196, %195 : vector<2x32xf32>
    %198 = arith.divf %196, %197 : vector<2x32xf32>
    %199 = vector.extract_strided_slice %186 {offsets = [0, 64], sizes = [2, 32], strides = [1, 1]} : vector<2x128xf32> to vector<2x32xf32>
    %200 = math.tanh %199 : vector<2x32xf32>
    %201 = vector.extract_strided_slice %186 {offsets = [0, 96], sizes = [2, 32], strides = [1, 1]} : vector<2x128xf32> to vector<2x32xf32>
    %202 = arith.negf %201 : vector<2x32xf32>
    %203 = math.exp %202 : vector<2x32xf32>
    %cst_58 = arith.constant 1.000000e+00 : f32
    %204 = vector.broadcast %cst_58 : f32 to vector<2x32xf32>
    %205 = arith.addf %204, %203 : vector<2x32xf32>
    %206 = arith.divf %204, %205 : vector<2x32xf32>
    %207 = arith.mulf %198, %180 : vector<2x32xf32>
    %208 = arith.mulf %192, %200 : vector<2x32xf32>
    %209 = arith.addf %207, %208 : vector<2x32xf32>
    %210 = math.tanh %209 : vector<2x32xf32>
    %211 = arith.mulf %206, %210 : vector<2x32xf32>
    %c12_59 = arith.constant 12 : index
    %c0_60 = arith.constant 0 : index
    %212 = vector.load %arg16[%c12_59, %c0_60] : memref<20x32xf32, #tpu.memory_space<vmem>>, vector<2x32xf32>
    tpu.vector_store %arg16[%c12_59, %c0_60], %211 {strides = array<i32>} : memref<20x32xf32, #tpu.memory_space<vmem>>, vector<2x32xf32>,
    %c14 = arith.constant 14 : index
    %c0_61 = arith.constant 0 : index
    %213 = vector.load %arg15[%c14, %c0_61] : memref<20x128xf32, #tpu.memory_space<vmem>>, vector<2x128xf32>
    %cst_62 = arith.constant dense<0.000000e+00> : vector<2x128xf32>
    %214 = tpu.matmul %211, %7, %cst_62 {dimension_numbers = #tpu.dot_dimension_numbers<[1], [0], [0], [1], [0, 0, 1, 1], [], []>} : vector<2x32xf32>, vector<32x128xf32>, vector<2x128xf32> -> vector<2x128xf32>
    %215 = arith.addf %213, %214 : vector<2x128xf32>
    %216 = vector.extract_strided_slice %215 {offsets = [0, 0], sizes = [2, 32], strides = [1, 1]} : vector<2x128xf32> to vector<2x32xf32>
    %217 = arith.negf %216 : vector<2x32xf32>
    %218 = math.exp %217 : vector<2x32xf32>
    %cst_63 = arith.constant 1.000000e+00 : f32
    %219 = vector.broadcast %cst_63 : f32 to vector<2x32xf32>
    %220 = arith.addf %219, %218 : vector<2x32xf32>
    %221 = arith.divf %219, %220 : vector<2x32xf32>
    %222 = vector.extract_strided_slice %215 {offsets = [0, 32], sizes = [2, 32], strides = [1, 1]} : vector<2x128xf32> to vector<2x32xf32>
    %223 = arith.negf %222 : vector<2x32xf32>
    %224 = math.exp %223 : vector<2x32xf32>
    %cst_64 = arith.constant 1.000000e+00 : f32
    %225 = vector.broadcast %cst_64 : f32 to vector<2x32xf32>
    %226 = arith.addf %225, %224 : vector<2x32xf32>
    %227 = arith.divf %225, %226 : vector<2x32xf32>
    %228 = vector.extract_strided_slice %215 {offsets = [0, 64], sizes = [2, 32], strides = [1, 1]} : vector<2x128xf32> to vector<2x32xf32>
    %229 = math.tanh %228 : vector<2x32xf32>
    %230 = vector.extract_strided_slice %215 {offsets = [0, 96], sizes = [2, 32], strides = [1, 1]} : vector<2x128xf32> to vector<2x32xf32>
    %231 = arith.negf %230 : vector<2x32xf32>
    %232 = math.exp %231 : vector<2x32xf32>
    %cst_65 = arith.constant 1.000000e+00 : f32
    %233 = vector.broadcast %cst_65 : f32 to vector<2x32xf32>
    %234 = arith.addf %233, %232 : vector<2x32xf32>
    %235 = arith.divf %233, %234 : vector<2x32xf32>
    %236 = arith.mulf %227, %209 : vector<2x32xf32>
    %237 = arith.mulf %221, %229 : vector<2x32xf32>
    %238 = arith.addf %236, %237 : vector<2x32xf32>
    %239 = math.tanh %238 : vector<2x32xf32>
    %240 = arith.mulf %235, %239 : vector<2x32xf32>
    %c14_66 = arith.constant 14 : index
    %c0_67 = arith.constant 0 : index
    %241 = vector.load %arg16[%c14_66, %c0_67] : memref<20x32xf32, #tpu.memory_space<vmem>>, vector<2x32xf32>
    tpu.vector_store %arg16[%c14_66, %c0_67], %240 {strides = array<i32>} : memref<20x32xf32, #tpu.memory_space<vmem>>, vector<2x32xf32>,
    %c16 = arith.constant 16 : index
    %c0_68 = arith.constant 0 : index
    %242 = vector.load %arg15[%c16, %c0_68] : memref<20x128xf32, #tpu.memory_space<vmem>>, vector<2x128xf32>
    %cst_69 = arith.constant dense<0.000000e+00> : vector<2x128xf32>
    %243 = tpu.matmul %240, %7, %cst_69 {dimension_numbers = #tpu.dot_dimension_numbers<[1], [0], [0], [1], [0, 0, 1, 1], [], []>} : vector<2x32xf32>, vector<32x128xf32>, vector<2x128xf32> -> vector<2x128xf32>
    %244 = arith.addf %242, %243 : vector<2x128xf32>
    %245 = vector.extract_strided_slice %244 {offsets = [0, 0], sizes = [2, 32], strides = [1, 1]} : vector<2x128xf32> to vector<2x32xf32>
    %246 = arith.negf %245 : vector<2x32xf32>
    %247 = math.exp %246 : vector<2x32xf32>
    %cst_70 = arith.constant 1.000000e+00 : f32
    %248 = vector.broadcast %cst_70 : f32 to vector<2x32xf32>
    %249 = arith.addf %248, %247 : vector<2x32xf32>
    %250 = arith.divf %248, %249 : vector<2x32xf32>
    %251 = vector.extract_strided_slice %244 {offsets = [0, 32], sizes = [2, 32], strides = [1, 1]} : vector<2x128xf32> to vector<2x32xf32>
    %252 = arith.negf %251 : vector<2x32xf32>
    %253 = math.exp %252 : vector<2x32xf32>
    %cst_71 = arith.constant 1.000000e+00 : f32
    %254 = vector.broadcast %cst_71 : f32 to vector<2x32xf32>
    %255 = arith.addf %254, %253 : vector<2x32xf32>
    %256 = arith.divf %254, %255 : vector<2x32xf32>
    %257 = vector.extract_strided_slice %244 {offsets = [0, 64], sizes = [2, 32], strides = [1, 1]} : vector<2x128xf32> to vector<2x32xf32>
    %258 = math.tanh %257 : vector<2x32xf32>
    %259 = vector.extract_strided_slice %244 {offsets = [0, 96], sizes = [2, 32], strides = [1, 1]} : vector<2x128xf32> to vector<2x32xf32>
    %260 = arith.negf %259 : vector<2x32xf32>
    %261 = math.exp %260 : vector<2x32xf32>
    %cst_72 = arith.constant 1.000000e+00 : f32
    %262 = vector.broadcast %cst_72 : f32 to vector<2x32xf32>
    %263 = arith.addf %262, %261 : vector<2x32xf32>
    %264 = arith.divf %262, %263 : vector<2x32xf32>
    %265 = arith.mulf %256, %238 : vector<2x32xf32>
    %266 = arith.mulf %250, %258 : vector<2x32xf32>
    %267 = arith.addf %265, %266 : vector<2x32xf32>
    %268 = math.tanh %267 : vector<2x32xf32>
    %269 = arith.mulf %264, %268 : vector<2x32xf32>
    %c16_73 = arith.constant 16 : index
    %c0_74 = arith.constant 0 : index
    %270 = vector.load %arg16[%c16_73, %c0_74] : memref<20x32xf32, #tpu.memory_space<vmem>>, vector<2x32xf32>
    tpu.vector_store %arg16[%c16_73, %c0_74], %269 {strides = array<i32>} : memref<20x32xf32, #tpu.memory_space<vmem>>, vector<2x32xf32>,
    %c18 = arith.constant 18 : index
    %c0_75 = arith.constant 0 : index
    %271 = vector.load %arg15[%c18, %c0_75] : memref<20x128xf32, #tpu.memory_space<vmem>>, vector<2x128xf32>
    %cst_76 = arith.constant dense<0.000000e+00> : vector<2x128xf32>
    %272 = tpu.matmul %269, %7, %cst_76 {dimension_numbers = #tpu.dot_dimension_numbers<[1], [0], [0], [1], [0, 0, 1, 1], [], []>} : vector<2x32xf32>, vector<32x128xf32>, vector<2x128xf32> -> vector<2x128xf32>
    %273 = arith.addf %271, %272 : vector<2x128xf32>
    %274 = vector.extract_strided_slice %273 {offsets = [0, 0], sizes = [2, 32], strides = [1, 1]} : vector<2x128xf32> to vector<2x32xf32>
    %275 = arith.negf %274 : vector<2x32xf32>
    %276 = math.exp %275 : vector<2x32xf32>
    %cst_77 = arith.constant 1.000000e+00 : f32
    %277 = vector.broadcast %cst_77 : f32 to vector<2x32xf32>
    %278 = arith.addf %277, %276 : vector<2x32xf32>
    %279 = arith.divf %277, %278 : vector<2x32xf32>
    %280 = vector.extract_strided_slice %273 {offsets = [0, 32], sizes = [2, 32], strides = [1, 1]} : vector<2x128xf32> to vector<2x32xf32>
    %281 = arith.negf %280 : vector<2x32xf32>
    %282 = math.exp %281 : vector<2x32xf32>
    %cst_78 = arith.constant 1.000000e+00 : f32
    %283 = vector.broadcast %cst_78 : f32 to vector<2x32xf32>
    %284 = arith.addf %283, %282 : vector<2x32xf32>
    %285 = arith.divf %283, %284 : vector<2x32xf32>
    %286 = vector.extract_strided_slice %273 {offsets = [0, 64], sizes = [2, 32], strides = [1, 1]} : vector<2x128xf32> to vector<2x32xf32>
    %287 = math.tanh %286 : vector<2x32xf32>
    %288 = vector.extract_strided_slice %273 {offsets = [0, 96], sizes = [2, 32], strides = [1, 1]} : vector<2x128xf32> to vector<2x32xf32>
    %289 = arith.negf %288 : vector<2x32xf32>
    %290 = math.exp %289 : vector<2x32xf32>
    %cst_79 = arith.constant 1.000000e+00 : f32
    %291 = vector.broadcast %cst_79 : f32 to vector<2x32xf32>
    %292 = arith.addf %291, %290 : vector<2x32xf32>
    %293 = arith.divf %291, %292 : vector<2x32xf32>
    %294 = arith.mulf %285, %267 : vector<2x32xf32>
    %295 = arith.mulf %279, %287 : vector<2x32xf32>
    %296 = arith.addf %294, %295 : vector<2x32xf32>
    %297 = math.tanh %296 : vector<2x32xf32>
    %298 = arith.mulf %293, %297 : vector<2x32xf32>
    %c18_80 = arith.constant 18 : index
    %c0_81 = arith.constant 0 : index
    %299 = vector.load %arg16[%c18_80, %c0_81] : memref<20x32xf32, #tpu.memory_space<vmem>>, vector<2x32xf32>
    tpu.vector_store %arg16[%c18_80, %c0_81], %298 {strides = array<i32>} : memref<20x32xf32, #tpu.memory_space<vmem>>, vector<2x32xf32>,
    %c0_82 = arith.constant 0 : index
    %c0_83 = arith.constant 0 : index
    %300 = vector.load %arg16[%c0_82, %c0_83] : memref<20x32xf32, #tpu.memory_space<vmem>>, vector<20x32xf32>
    %c0_84 = arith.constant 0 : index
    %c0_85 = arith.constant 0 : index
    %301 = vector.load %arg4[%c0_84, %c0_85] : memref<32x128xf32, #tpu.memory_space<vmem>>, vector<32x128xf32>
    %cst_86 = arith.constant dense<0.000000e+00> : vector<20x128xf32>
    %302 = tpu.matmul %300, %301, %cst_86 {dimension_numbers = #tpu.dot_dimension_numbers<[1], [0], [0], [1], [0, 0, 1, 1], [], []>} : vector<20x32xf32>, vector<32x128xf32>, vector<20x128xf32> -> vector<20x128xf32>
    %c0_87 = arith.constant 0 : index
    %c0_88 = arith.constant 0 : index
    %303 = vector.load %arg6[%c0_87, %c0_88] : memref<1x128xf32, #tpu.memory_space<vmem>>, vector<1x128xf32>
    %304 = vector.broadcast %303 : vector<1x128xf32> to vector<20x128xf32>
    %305 = arith.addf %302, %304 : vector<20x128xf32>
    %c0_89 = arith.constant 0 : index
    %c0_90 = arith.constant 0 : index
    %306 = vector.load %arg15[%c0_89, %c0_90] : memref<20x128xf32, #tpu.memory_space<vmem>>, vector<20x128xf32>
    tpu.vector_store %arg15[%c0_89, %c0_90], %305 {strides = array<i32>} : memref<20x128xf32, #tpu.memory_space<vmem>>, vector<20x128xf32>,
    %c0_91 = arith.constant 0 : index
    %c0_92 = arith.constant 0 : index
    %307 = vector.load %arg5[%c0_91, %c0_92] : memref<32x128xf32, #tpu.memory_space<vmem>>, vector<32x128xf32>
    %cst_93 = arith.constant 0.000000e+00 : f32
    %308 = vector.broadcast %cst_93 : f32 to vector<4x32xf32>
    %cst_94 = arith.constant 0.000000e+00 : f32
    %309 = vector.broadcast %cst_94 : f32 to vector<4x32xf32>
    %c0_95 = arith.constant 0 : index
    %c0_96 = arith.constant 0 : index
    %310 = vector.load %arg15[%c0_95, %c0_96] : memref<20x128xf32, #tpu.memory_space<vmem>>, vector<4x128xf32>
    %cst_97 = arith.constant dense<0.000000e+00> : vector<4x128xf32>
    %311 = tpu.matmul %308, %307, %cst_97 {dimension_numbers = #tpu.dot_dimension_numbers<[1], [0], [0], [1], [0, 0, 1, 1], [], []>} : vector<4x32xf32>, vector<32x128xf32>, vector<4x128xf32> -> vector<4x128xf32>
    %312 = arith.addf %310, %311 : vector<4x128xf32>
    %313 = vector.extract_strided_slice %312 {offsets = [0, 0], sizes = [4, 32], strides = [1, 1]} : vector<4x128xf32> to vector<4x32xf32>
    %314 = arith.negf %313 : vector<4x32xf32>
    %315 = math.exp %314 : vector<4x32xf32>
    %cst_98 = arith.constant 1.000000e+00 : f32
    %316 = vector.broadcast %cst_98 : f32 to vector<4x32xf32>
    %317 = arith.addf %316, %315 : vector<4x32xf32>
    %318 = arith.divf %316, %317 : vector<4x32xf32>
    %319 = vector.extract_strided_slice %312 {offsets = [0, 32], sizes = [4, 32], strides = [1, 1]} : vector<4x128xf32> to vector<4x32xf32>
    %320 = arith.negf %319 : vector<4x32xf32>
    %321 = math.exp %320 : vector<4x32xf32>
    %cst_99 = arith.constant 1.000000e+00 : f32
    %322 = vector.broadcast %cst_99 : f32 to vector<4x32xf32>
    %323 = arith.addf %322, %321 : vector<4x32xf32>
    %324 = arith.divf %322, %323 : vector<4x32xf32>
    %325 = vector.extract_strided_slice %312 {offsets = [0, 64], sizes = [4, 32], strides = [1, 1]} : vector<4x128xf32> to vector<4x32xf32>
    %326 = math.tanh %325 : vector<4x32xf32>
    %327 = vector.extract_strided_slice %312 {offsets = [0, 96], sizes = [4, 32], strides = [1, 1]} : vector<4x128xf32> to vector<4x32xf32>
    %328 = arith.negf %327 : vector<4x32xf32>
    %329 = math.exp %328 : vector<4x32xf32>
    %cst_100 = arith.constant 1.000000e+00 : f32
    %330 = vector.broadcast %cst_100 : f32 to vector<4x32xf32>
    %331 = arith.addf %330, %329 : vector<4x32xf32>
    %332 = arith.divf %330, %331 : vector<4x32xf32>
    %333 = arith.mulf %324, %309 : vector<4x32xf32>
    %334 = arith.mulf %318, %326 : vector<4x32xf32>
    %335 = arith.addf %333, %334 : vector<4x32xf32>
    %336 = math.tanh %335 : vector<4x32xf32>
    %337 = arith.mulf %332, %336 : vector<4x32xf32>
    %c0_101 = arith.constant 0 : index
    %c0_102 = arith.constant 0 : index
    %338 = vector.load %arg17[%c0_101, %c0_102] : memref<20x32xf32, #tpu.memory_space<vmem>>, vector<4x32xf32>
    tpu.vector_store %arg17[%c0_101, %c0_102], %337 {strides = array<i32>} : memref<20x32xf32, #tpu.memory_space<vmem>>, vector<4x32xf32>,
    %c4_103 = arith.constant 4 : index
    %c0_104 = arith.constant 0 : index
    %339 = vector.load %arg15[%c4_103, %c0_104] : memref<20x128xf32, #tpu.memory_space<vmem>>, vector<4x128xf32>
    %cst_105 = arith.constant dense<0.000000e+00> : vector<4x128xf32>
    %340 = tpu.matmul %337, %307, %cst_105 {dimension_numbers = #tpu.dot_dimension_numbers<[1], [0], [0], [1], [0, 0, 1, 1], [], []>} : vector<4x32xf32>, vector<32x128xf32>, vector<4x128xf32> -> vector<4x128xf32>
    %341 = arith.addf %339, %340 : vector<4x128xf32>
    %342 = vector.extract_strided_slice %341 {offsets = [0, 0], sizes = [4, 32], strides = [1, 1]} : vector<4x128xf32> to vector<4x32xf32>
    %343 = arith.negf %342 : vector<4x32xf32>
    %344 = math.exp %343 : vector<4x32xf32>
    %cst_106 = arith.constant 1.000000e+00 : f32
    %345 = vector.broadcast %cst_106 : f32 to vector<4x32xf32>
    %346 = arith.addf %345, %344 : vector<4x32xf32>
    %347 = arith.divf %345, %346 : vector<4x32xf32>
    %348 = vector.extract_strided_slice %341 {offsets = [0, 32], sizes = [4, 32], strides = [1, 1]} : vector<4x128xf32> to vector<4x32xf32>
    %349 = arith.negf %348 : vector<4x32xf32>
    %350 = math.exp %349 : vector<4x32xf32>
    %cst_107 = arith.constant 1.000000e+00 : f32
    %351 = vector.broadcast %cst_107 : f32 to vector<4x32xf32>
    %352 = arith.addf %351, %350 : vector<4x32xf32>
    %353 = arith.divf %351, %352 : vector<4x32xf32>
    %354 = vector.extract_strided_slice %341 {offsets = [0, 64], sizes = [4, 32], strides = [1, 1]} : vector<4x128xf32> to vector<4x32xf32>
    %355 = math.tanh %354 : vector<4x32xf32>
    %356 = vector.extract_strided_slice %341 {offsets = [0, 96], sizes = [4, 32], strides = [1, 1]} : vector<4x128xf32> to vector<4x32xf32>
    %357 = arith.negf %356 : vector<4x32xf32>
    %358 = math.exp %357 : vector<4x32xf32>
    %cst_108 = arith.constant 1.000000e+00 : f32
    %359 = vector.broadcast %cst_108 : f32 to vector<4x32xf32>
    %360 = arith.addf %359, %358 : vector<4x32xf32>
    %361 = arith.divf %359, %360 : vector<4x32xf32>
    %362 = arith.mulf %353, %335 : vector<4x32xf32>
    %363 = arith.mulf %347, %355 : vector<4x32xf32>
    %364 = arith.addf %362, %363 : vector<4x32xf32>
    %365 = math.tanh %364 : vector<4x32xf32>
    %366 = arith.mulf %361, %365 : vector<4x32xf32>
    %c4_109 = arith.constant 4 : index
    %c0_110 = arith.constant 0 : index
    %367 = vector.load %arg17[%c4_109, %c0_110] : memref<20x32xf32, #tpu.memory_space<vmem>>, vector<4x32xf32>
    tpu.vector_store %arg17[%c4_109, %c0_110], %366 {strides = array<i32>} : memref<20x32xf32, #tpu.memory_space<vmem>>, vector<4x32xf32>,
    %c8_111 = arith.constant 8 : index
    %c0_112 = arith.constant 0 : index
    %368 = vector.load %arg15[%c8_111, %c0_112] : memref<20x128xf32, #tpu.memory_space<vmem>>, vector<4x128xf32>
    %cst_113 = arith.constant dense<0.000000e+00> : vector<4x128xf32>
    %369 = tpu.matmul %366, %307, %cst_113 {dimension_numbers = #tpu.dot_dimension_numbers<[1], [0], [0], [1], [0, 0, 1, 1], [], []>} : vector<4x32xf32>, vector<32x128xf32>, vector<4x128xf32> -> vector<4x128xf32>
    %370 = arith.addf %368, %369 : vector<4x128xf32>
    %371 = vector.extract_strided_slice %370 {offsets = [0, 0], sizes = [4, 32], strides = [1, 1]} : vector<4x128xf32> to vector<4x32xf32>
    %372 = arith.negf %371 : vector<4x32xf32>
    %373 = math.exp %372 : vector<4x32xf32>
    %cst_114 = arith.constant 1.000000e+00 : f32
    %374 = vector.broadcast %cst_114 : f32 to vector<4x32xf32>
    %375 = arith.addf %374, %373 : vector<4x32xf32>
    %376 = arith.divf %374, %375 : vector<4x32xf32>
    %377 = vector.extract_strided_slice %370 {offsets = [0, 32], sizes = [4, 32], strides = [1, 1]} : vector<4x128xf32> to vector<4x32xf32>
    %378 = arith.negf %377 : vector<4x32xf32>
    %379 = math.exp %378 : vector<4x32xf32>
    %cst_115 = arith.constant 1.000000e+00 : f32
    %380 = vector.broadcast %cst_115 : f32 to vector<4x32xf32>
    %381 = arith.addf %380, %379 : vector<4x32xf32>
    %382 = arith.divf %380, %381 : vector<4x32xf32>
    %383 = vector.extract_strided_slice %370 {offsets = [0, 64], sizes = [4, 32], strides = [1, 1]} : vector<4x128xf32> to vector<4x32xf32>
    %384 = math.tanh %383 : vector<4x32xf32>
    %385 = vector.extract_strided_slice %370 {offsets = [0, 96], sizes = [4, 32], strides = [1, 1]} : vector<4x128xf32> to vector<4x32xf32>
    %386 = arith.negf %385 : vector<4x32xf32>
    %387 = math.exp %386 : vector<4x32xf32>
    %cst_116 = arith.constant 1.000000e+00 : f32
    %388 = vector.broadcast %cst_116 : f32 to vector<4x32xf32>
    %389 = arith.addf %388, %387 : vector<4x32xf32>
    %390 = arith.divf %388, %389 : vector<4x32xf32>
    %391 = arith.mulf %382, %364 : vector<4x32xf32>
    %392 = arith.mulf %376, %384 : vector<4x32xf32>
    %393 = arith.addf %391, %392 : vector<4x32xf32>
    %394 = math.tanh %393 : vector<4x32xf32>
    %395 = arith.mulf %390, %394 : vector<4x32xf32>
    %c8_117 = arith.constant 8 : index
    %c0_118 = arith.constant 0 : index
    %396 = vector.load %arg17[%c8_117, %c0_118] : memref<20x32xf32, #tpu.memory_space<vmem>>, vector<4x32xf32>
    tpu.vector_store %arg17[%c8_117, %c0_118], %395 {strides = array<i32>} : memref<20x32xf32, #tpu.memory_space<vmem>>, vector<4x32xf32>,
    %c12_119 = arith.constant 12 : index
    %c0_120 = arith.constant 0 : index
    %397 = vector.load %arg15[%c12_119, %c0_120] : memref<20x128xf32, #tpu.memory_space<vmem>>, vector<4x128xf32>
    %cst_121 = arith.constant dense<0.000000e+00> : vector<4x128xf32>
    %398 = tpu.matmul %395, %307, %cst_121 {dimension_numbers = #tpu.dot_dimension_numbers<[1], [0], [0], [1], [0, 0, 1, 1], [], []>} : vector<4x32xf32>, vector<32x128xf32>, vector<4x128xf32> -> vector<4x128xf32>
    %399 = arith.addf %397, %398 : vector<4x128xf32>
    %400 = vector.extract_strided_slice %399 {offsets = [0, 0], sizes = [4, 32], strides = [1, 1]} : vector<4x128xf32> to vector<4x32xf32>
    %401 = arith.negf %400 : vector<4x32xf32>
    %402 = math.exp %401 : vector<4x32xf32>
    %cst_122 = arith.constant 1.000000e+00 : f32
    %403 = vector.broadcast %cst_122 : f32 to vector<4x32xf32>
    %404 = arith.addf %403, %402 : vector<4x32xf32>
    %405 = arith.divf %403, %404 : vector<4x32xf32>
    %406 = vector.extract_strided_slice %399 {offsets = [0, 32], sizes = [4, 32], strides = [1, 1]} : vector<4x128xf32> to vector<4x32xf32>
    %407 = arith.negf %406 : vector<4x32xf32>
    %408 = math.exp %407 : vector<4x32xf32>
    %cst_123 = arith.constant 1.000000e+00 : f32
    %409 = vector.broadcast %cst_123 : f32 to vector<4x32xf32>
    %410 = arith.addf %409, %408 : vector<4x32xf32>
    %411 = arith.divf %409, %410 : vector<4x32xf32>
    %412 = vector.extract_strided_slice %399 {offsets = [0, 64], sizes = [4, 32], strides = [1, 1]} : vector<4x128xf32> to vector<4x32xf32>
    %413 = math.tanh %412 : vector<4x32xf32>
    %414 = vector.extract_strided_slice %399 {offsets = [0, 96], sizes = [4, 32], strides = [1, 1]} : vector<4x128xf32> to vector<4x32xf32>
    %415 = arith.negf %414 : vector<4x32xf32>
    %416 = math.exp %415 : vector<4x32xf32>
    %cst_124 = arith.constant 1.000000e+00 : f32
    %417 = vector.broadcast %cst_124 : f32 to vector<4x32xf32>
    %418 = arith.addf %417, %416 : vector<4x32xf32>
    %419 = arith.divf %417, %418 : vector<4x32xf32>
    %420 = arith.mulf %411, %393 : vector<4x32xf32>
    %421 = arith.mulf %405, %413 : vector<4x32xf32>
    %422 = arith.addf %420, %421 : vector<4x32xf32>
    %423 = math.tanh %422 : vector<4x32xf32>
    %424 = arith.mulf %419, %423 : vector<4x32xf32>
    %c12_125 = arith.constant 12 : index
    %c0_126 = arith.constant 0 : index
    %425 = vector.load %arg17[%c12_125, %c0_126] : memref<20x32xf32, #tpu.memory_space<vmem>>, vector<4x32xf32>
    tpu.vector_store %arg17[%c12_125, %c0_126], %424 {strides = array<i32>} : memref<20x32xf32, #tpu.memory_space<vmem>>, vector<4x32xf32>,
    %c16_127 = arith.constant 16 : index
    %c0_128 = arith.constant 0 : index
    %426 = vector.load %arg15[%c16_127, %c0_128] : memref<20x128xf32, #tpu.memory_space<vmem>>, vector<4x128xf32>
    %cst_129 = arith.constant dense<0.000000e+00> : vector<4x128xf32>
    %427 = tpu.matmul %424, %307, %cst_129 {dimension_numbers = #tpu.dot_dimension_numbers<[1], [0], [0], [1], [0, 0, 1, 1], [], []>} : vector<4x32xf32>, vector<32x128xf32>, vector<4x128xf32> -> vector<4x128xf32>
    %428 = arith.addf %426, %427 : vector<4x128xf32>
    %429 = vector.extract_strided_slice %428 {offsets = [0, 0], sizes = [4, 32], strides = [1, 1]} : vector<4x128xf32> to vector<4x32xf32>
    %430 = arith.negf %429 : vector<4x32xf32>
    %431 = math.exp %430 : vector<4x32xf32>
    %cst_130 = arith.constant 1.000000e+00 : f32
    %432 = vector.broadcast %cst_130 : f32 to vector<4x32xf32>
    %433 = arith.addf %432, %431 : vector<4x32xf32>
    %434 = arith.divf %432, %433 : vector<4x32xf32>
    %435 = vector.extract_strided_slice %428 {offsets = [0, 32], sizes = [4, 32], strides = [1, 1]} : vector<4x128xf32> to vector<4x32xf32>
    %436 = arith.negf %435 : vector<4x32xf32>
    %437 = math.exp %436 : vector<4x32xf32>
    %cst_131 = arith.constant 1.000000e+00 : f32
    %438 = vector.broadcast %cst_131 : f32 to vector<4x32xf32>
    %439 = arith.addf %438, %437 : vector<4x32xf32>
    %440 = arith.divf %438, %439 : vector<4x32xf32>
    %441 = vector.extract_strided_slice %428 {offsets = [0, 64], sizes = [4, 32], strides = [1, 1]} : vector<4x128xf32> to vector<4x32xf32>
    %442 = math.tanh %441 : vector<4x32xf32>
    %443 = vector.extract_strided_slice %428 {offsets = [0, 96], sizes = [4, 32], strides = [1, 1]} : vector<4x128xf32> to vector<4x32xf32>
    %444 = arith.negf %443 : vector<4x32xf32>
    %445 = math.exp %444 : vector<4x32xf32>
    %cst_132 = arith.constant 1.000000e+00 : f32
    %446 = vector.broadcast %cst_132 : f32 to vector<4x32xf32>
    %447 = arith.addf %446, %445 : vector<4x32xf32>
    %448 = arith.divf %446, %447 : vector<4x32xf32>
    %449 = arith.mulf %440, %422 : vector<4x32xf32>
    %450 = arith.mulf %434, %442 : vector<4x32xf32>
    %451 = arith.addf %449, %450 : vector<4x32xf32>
    %452 = math.tanh %451 : vector<4x32xf32>
    %453 = arith.mulf %448, %452 : vector<4x32xf32>
    %c16_133 = arith.constant 16 : index
    %c0_134 = arith.constant 0 : index
    %454 = vector.load %arg17[%c16_133, %c0_134] : memref<20x32xf32, #tpu.memory_space<vmem>>, vector<4x32xf32>
    tpu.vector_store %arg17[%c16_133, %c0_134], %453 {strides = array<i32>} : memref<20x32xf32, #tpu.memory_space<vmem>>, vector<4x32xf32>,
    %c0_135 = arith.constant 0 : index
    %c0_136 = arith.constant 0 : index
    %455 = vector.load %arg17[%c0_135, %c0_136] : memref<20x32xf32, #tpu.memory_space<vmem>>, vector<20x32xf32>
    %c0_137 = arith.constant 0 : index
    %c0_138 = arith.constant 0 : index
    %456 = vector.load %arg18[%c0_137, %c0_138] : memref<20x32xf32, #tpu.memory_space<vmem>>, vector<20x32xf32>
    tpu.vector_store %arg18[%c0_137, %c0_138], %455 {strides = array<i32>} : memref<20x32xf32, #tpu.memory_space<vmem>>, vector<20x32xf32>,
    %c0_139 = arith.constant 0 : index
    %c0_140 = arith.constant 0 : index
    %457 = vector.load %arg17[%c0_139, %c0_140] : memref<20x32xf32, #tpu.memory_space<vmem>>, vector<20x32xf32>
    %c0_141 = arith.constant 0 : index
    %c0_142 = arith.constant 0 : index
    %458 = vector.load %arg7[%c0_141, %c0_142] : memref<32x128xf32, #tpu.memory_space<vmem>>, vector<32x128xf32>
    %cst_143 = arith.constant dense<0.000000e+00> : vector<20x128xf32>
    %459 = tpu.matmul %457, %458, %cst_143 {dimension_numbers = #tpu.dot_dimension_numbers<[1], [0], [0], [1], [0, 0, 1, 1], [], []>} : vector<20x32xf32>, vector<32x128xf32>, vector<20x128xf32> -> vector<20x128xf32>
    %c0_144 = arith.constant 0 : index
    %c0_145 = arith.constant 0 : index
    %460 = vector.load %arg9[%c0_144, %c0_145] : memref<1x128xf32, #tpu.memory_space<vmem>>, vector<1x128xf32>
    %461 = vector.broadcast %460 : vector<1x128xf32> to vector<20x128xf32>
    %462 = arith.addf %459, %461 : vector<20x128xf32>
    %c0_146 = arith.constant 0 : index
    %c0_147 = arith.constant 0 : index
    %463 = vector.load %arg15[%c0_146, %c0_147] : memref<20x128xf32, #tpu.memory_space<vmem>>, vector<20x128xf32>
    tpu.vector_store %arg15[%c0_146, %c0_147], %462 {strides = array<i32>} : memref<20x128xf32, #tpu.memory_space<vmem>>, vector<20x128xf32>,
    %c0_148 = arith.constant 0 : index
    %c0_149 = arith.constant 0 : index
    %464 = vector.load %arg8[%c0_148, %c0_149] : memref<32x128xf32, #tpu.memory_space<vmem>>, vector<32x128xf32>
    %cst_150 = arith.constant 0.000000e+00 : f32
    %465 = vector.broadcast %cst_150 : f32 to vector<4x32xf32>
    %cst_151 = arith.constant 0.000000e+00 : f32
    %466 = vector.broadcast %cst_151 : f32 to vector<4x32xf32>
    %c0_152 = arith.constant 0 : index
    %c0_153 = arith.constant 0 : index
    %467 = vector.load %arg15[%c0_152, %c0_153] : memref<20x128xf32, #tpu.memory_space<vmem>>, vector<4x128xf32>
    %cst_154 = arith.constant dense<0.000000e+00> : vector<4x128xf32>
    %468 = tpu.matmul %465, %464, %cst_154 {dimension_numbers = #tpu.dot_dimension_numbers<[1], [0], [0], [1], [0, 0, 1, 1], [], []>} : vector<4x32xf32>, vector<32x128xf32>, vector<4x128xf32> -> vector<4x128xf32>
    %469 = arith.addf %467, %468 : vector<4x128xf32>
    %470 = vector.extract_strided_slice %469 {offsets = [0, 0], sizes = [4, 32], strides = [1, 1]} : vector<4x128xf32> to vector<4x32xf32>
    %471 = arith.negf %470 : vector<4x32xf32>
    %472 = math.exp %471 : vector<4x32xf32>
    %cst_155 = arith.constant 1.000000e+00 : f32
    %473 = vector.broadcast %cst_155 : f32 to vector<4x32xf32>
    %474 = arith.addf %473, %472 : vector<4x32xf32>
    %475 = arith.divf %473, %474 : vector<4x32xf32>
    %476 = vector.extract_strided_slice %469 {offsets = [0, 32], sizes = [4, 32], strides = [1, 1]} : vector<4x128xf32> to vector<4x32xf32>
    %477 = arith.negf %476 : vector<4x32xf32>
    %478 = math.exp %477 : vector<4x32xf32>
    %cst_156 = arith.constant 1.000000e+00 : f32
    %479 = vector.broadcast %cst_156 : f32 to vector<4x32xf32>
    %480 = arith.addf %479, %478 : vector<4x32xf32>
    %481 = arith.divf %479, %480 : vector<4x32xf32>
    %482 = vector.extract_strided_slice %469 {offsets = [0, 64], sizes = [4, 32], strides = [1, 1]} : vector<4x128xf32> to vector<4x32xf32>
    %483 = math.tanh %482 : vector<4x32xf32>
    %484 = vector.extract_strided_slice %469 {offsets = [0, 96], sizes = [4, 32], strides = [1, 1]} : vector<4x128xf32> to vector<4x32xf32>
    %485 = arith.negf %484 : vector<4x32xf32>
    %486 = math.exp %485 : vector<4x32xf32>
    %cst_157 = arith.constant 1.000000e+00 : f32
    %487 = vector.broadcast %cst_157 : f32 to vector<4x32xf32>
    %488 = arith.addf %487, %486 : vector<4x32xf32>
    %489 = arith.divf %487, %488 : vector<4x32xf32>
    %490 = arith.mulf %481, %466 : vector<4x32xf32>
    %491 = arith.mulf %475, %483 : vector<4x32xf32>
    %492 = arith.addf %490, %491 : vector<4x32xf32>
    %493 = math.tanh %492 : vector<4x32xf32>
    %494 = arith.mulf %489, %493 : vector<4x32xf32>
    %c0_158 = arith.constant 0 : index
    %c0_159 = arith.constant 0 : index
    %495 = vector.load %arg16[%c0_158, %c0_159] : memref<20x32xf32, #tpu.memory_space<vmem>>, vector<4x32xf32>
    tpu.vector_store %arg16[%c0_158, %c0_159], %494 {strides = array<i32>} : memref<20x32xf32, #tpu.memory_space<vmem>>, vector<4x32xf32>,
    %c4_160 = arith.constant 4 : index
    %c0_161 = arith.constant 0 : index
    %496 = vector.load %arg15[%c4_160, %c0_161] : memref<20x128xf32, #tpu.memory_space<vmem>>, vector<4x128xf32>
    %cst_162 = arith.constant dense<0.000000e+00> : vector<4x128xf32>
    %497 = tpu.matmul %494, %464, %cst_162 {dimension_numbers = #tpu.dot_dimension_numbers<[1], [0], [0], [1], [0, 0, 1, 1], [], []>} : vector<4x32xf32>, vector<32x128xf32>, vector<4x128xf32> -> vector<4x128xf32>
    %498 = arith.addf %496, %497 : vector<4x128xf32>
    %499 = vector.extract_strided_slice %498 {offsets = [0, 0], sizes = [4, 32], strides = [1, 1]} : vector<4x128xf32> to vector<4x32xf32>
    %500 = arith.negf %499 : vector<4x32xf32>
    %501 = math.exp %500 : vector<4x32xf32>
    %cst_163 = arith.constant 1.000000e+00 : f32
    %502 = vector.broadcast %cst_163 : f32 to vector<4x32xf32>
    %503 = arith.addf %502, %501 : vector<4x32xf32>
    %504 = arith.divf %502, %503 : vector<4x32xf32>
    %505 = vector.extract_strided_slice %498 {offsets = [0, 32], sizes = [4, 32], strides = [1, 1]} : vector<4x128xf32> to vector<4x32xf32>
    %506 = arith.negf %505 : vector<4x32xf32>
    %507 = math.exp %506 : vector<4x32xf32>
    %cst_164 = arith.constant 1.000000e+00 : f32
    %508 = vector.broadcast %cst_164 : f32 to vector<4x32xf32>
    %509 = arith.addf %508, %507 : vector<4x32xf32>
    %510 = arith.divf %508, %509 : vector<4x32xf32>
    %511 = vector.extract_strided_slice %498 {offsets = [0, 64], sizes = [4, 32], strides = [1, 1]} : vector<4x128xf32> to vector<4x32xf32>
    %512 = math.tanh %511 : vector<4x32xf32>
    %513 = vector.extract_strided_slice %498 {offsets = [0, 96], sizes = [4, 32], strides = [1, 1]} : vector<4x128xf32> to vector<4x32xf32>
    %514 = arith.negf %513 : vector<4x32xf32>
    %515 = math.exp %514 : vector<4x32xf32>
    %cst_165 = arith.constant 1.000000e+00 : f32
    %516 = vector.broadcast %cst_165 : f32 to vector<4x32xf32>
    %517 = arith.addf %516, %515 : vector<4x32xf32>
    %518 = arith.divf %516, %517 : vector<4x32xf32>
    %519 = arith.mulf %510, %492 : vector<4x32xf32>
    %520 = arith.mulf %504, %512 : vector<4x32xf32>
    %521 = arith.addf %519, %520 : vector<4x32xf32>
    %522 = math.tanh %521 : vector<4x32xf32>
    %523 = arith.mulf %518, %522 : vector<4x32xf32>
    %c4_166 = arith.constant 4 : index
    %c0_167 = arith.constant 0 : index
    %524 = vector.load %arg16[%c4_166, %c0_167] : memref<20x32xf32, #tpu.memory_space<vmem>>, vector<4x32xf32>
    tpu.vector_store %arg16[%c4_166, %c0_167], %523 {strides = array<i32>} : memref<20x32xf32, #tpu.memory_space<vmem>>, vector<4x32xf32>,
    %c8_168 = arith.constant 8 : index
    %c0_169 = arith.constant 0 : index
    %525 = vector.load %arg15[%c8_168, %c0_169] : memref<20x128xf32, #tpu.memory_space<vmem>>, vector<4x128xf32>
    %cst_170 = arith.constant dense<0.000000e+00> : vector<4x128xf32>
    %526 = tpu.matmul %523, %464, %cst_170 {dimension_numbers = #tpu.dot_dimension_numbers<[1], [0], [0], [1], [0, 0, 1, 1], [], []>} : vector<4x32xf32>, vector<32x128xf32>, vector<4x128xf32> -> vector<4x128xf32>
    %527 = arith.addf %525, %526 : vector<4x128xf32>
    %528 = vector.extract_strided_slice %527 {offsets = [0, 0], sizes = [4, 32], strides = [1, 1]} : vector<4x128xf32> to vector<4x32xf32>
    %529 = arith.negf %528 : vector<4x32xf32>
    %530 = math.exp %529 : vector<4x32xf32>
    %cst_171 = arith.constant 1.000000e+00 : f32
    %531 = vector.broadcast %cst_171 : f32 to vector<4x32xf32>
    %532 = arith.addf %531, %530 : vector<4x32xf32>
    %533 = arith.divf %531, %532 : vector<4x32xf32>
    %534 = vector.extract_strided_slice %527 {offsets = [0, 32], sizes = [4, 32], strides = [1, 1]} : vector<4x128xf32> to vector<4x32xf32>
    %535 = arith.negf %534 : vector<4x32xf32>
    %536 = math.exp %535 : vector<4x32xf32>
    %cst_172 = arith.constant 1.000000e+00 : f32
    %537 = vector.broadcast %cst_172 : f32 to vector<4x32xf32>
    %538 = arith.addf %537, %536 : vector<4x32xf32>
    %539 = arith.divf %537, %538 : vector<4x32xf32>
    %540 = vector.extract_strided_slice %527 {offsets = [0, 64], sizes = [4, 32], strides = [1, 1]} : vector<4x128xf32> to vector<4x32xf32>
    %541 = math.tanh %540 : vector<4x32xf32>
    %542 = vector.extract_strided_slice %527 {offsets = [0, 96], sizes = [4, 32], strides = [1, 1]} : vector<4x128xf32> to vector<4x32xf32>
    %543 = arith.negf %542 : vector<4x32xf32>
    %544 = math.exp %543 : vector<4x32xf32>
    %cst_173 = arith.constant 1.000000e+00 : f32
    %545 = vector.broadcast %cst_173 : f32 to vector<4x32xf32>
    %546 = arith.addf %545, %544 : vector<4x32xf32>
    %547 = arith.divf %545, %546 : vector<4x32xf32>
    %548 = arith.mulf %539, %521 : vector<4x32xf32>
    %549 = arith.mulf %533, %541 : vector<4x32xf32>
    %550 = arith.addf %548, %549 : vector<4x32xf32>
    %551 = math.tanh %550 : vector<4x32xf32>
    %552 = arith.mulf %547, %551 : vector<4x32xf32>
    %c8_174 = arith.constant 8 : index
    %c0_175 = arith.constant 0 : index
    %553 = vector.load %arg16[%c8_174, %c0_175] : memref<20x32xf32, #tpu.memory_space<vmem>>, vector<4x32xf32>
    tpu.vector_store %arg16[%c8_174, %c0_175], %552 {strides = array<i32>} : memref<20x32xf32, #tpu.memory_space<vmem>>, vector<4x32xf32>,
    %c12_176 = arith.constant 12 : index
    %c0_177 = arith.constant 0 : index
    %554 = vector.load %arg15[%c12_176, %c0_177] : memref<20x128xf32, #tpu.memory_space<vmem>>, vector<4x128xf32>
    %cst_178 = arith.constant dense<0.000000e+00> : vector<4x128xf32>
    %555 = tpu.matmul %552, %464, %cst_178 {dimension_numbers = #tpu.dot_dimension_numbers<[1], [0], [0], [1], [0, 0, 1, 1], [], []>} : vector<4x32xf32>, vector<32x128xf32>, vector<4x128xf32> -> vector<4x128xf32>
    %556 = arith.addf %554, %555 : vector<4x128xf32>
    %557 = vector.extract_strided_slice %556 {offsets = [0, 0], sizes = [4, 32], strides = [1, 1]} : vector<4x128xf32> to vector<4x32xf32>
    %558 = arith.negf %557 : vector<4x32xf32>
    %559 = math.exp %558 : vector<4x32xf32>
    %cst_179 = arith.constant 1.000000e+00 : f32
    %560 = vector.broadcast %cst_179 : f32 to vector<4x32xf32>
    %561 = arith.addf %560, %559 : vector<4x32xf32>
    %562 = arith.divf %560, %561 : vector<4x32xf32>
    %563 = vector.extract_strided_slice %556 {offsets = [0, 32], sizes = [4, 32], strides = [1, 1]} : vector<4x128xf32> to vector<4x32xf32>
    %564 = arith.negf %563 : vector<4x32xf32>
    %565 = math.exp %564 : vector<4x32xf32>
    %cst_180 = arith.constant 1.000000e+00 : f32
    %566 = vector.broadcast %cst_180 : f32 to vector<4x32xf32>
    %567 = arith.addf %566, %565 : vector<4x32xf32>
    %568 = arith.divf %566, %567 : vector<4x32xf32>
    %569 = vector.extract_strided_slice %556 {offsets = [0, 64], sizes = [4, 32], strides = [1, 1]} : vector<4x128xf32> to vector<4x32xf32>
    %570 = math.tanh %569 : vector<4x32xf32>
    %571 = vector.extract_strided_slice %556 {offsets = [0, 96], sizes = [4, 32], strides = [1, 1]} : vector<4x128xf32> to vector<4x32xf32>
    %572 = arith.negf %571 : vector<4x32xf32>
    %573 = math.exp %572 : vector<4x32xf32>
    %cst_181 = arith.constant 1.000000e+00 : f32
    %574 = vector.broadcast %cst_181 : f32 to vector<4x32xf32>
    %575 = arith.addf %574, %573 : vector<4x32xf32>
    %576 = arith.divf %574, %575 : vector<4x32xf32>
    %577 = arith.mulf %568, %550 : vector<4x32xf32>
    %578 = arith.mulf %562, %570 : vector<4x32xf32>
    %579 = arith.addf %577, %578 : vector<4x32xf32>
    %580 = math.tanh %579 : vector<4x32xf32>
    %581 = arith.mulf %576, %580 : vector<4x32xf32>
    %c12_182 = arith.constant 12 : index
    %c0_183 = arith.constant 0 : index
    %582 = vector.load %arg16[%c12_182, %c0_183] : memref<20x32xf32, #tpu.memory_space<vmem>>, vector<4x32xf32>
    tpu.vector_store %arg16[%c12_182, %c0_183], %581 {strides = array<i32>} : memref<20x32xf32, #tpu.memory_space<vmem>>, vector<4x32xf32>,
    %c16_184 = arith.constant 16 : index
    %c0_185 = arith.constant 0 : index
    %583 = vector.load %arg15[%c16_184, %c0_185] : memref<20x128xf32, #tpu.memory_space<vmem>>, vector<4x128xf32>
    %cst_186 = arith.constant dense<0.000000e+00> : vector<4x128xf32>
    %584 = tpu.matmul %581, %464, %cst_186 {dimension_numbers = #tpu.dot_dimension_numbers<[1], [0], [0], [1], [0, 0, 1, 1], [], []>} : vector<4x32xf32>, vector<32x128xf32>, vector<4x128xf32> -> vector<4x128xf32>
    %585 = arith.addf %583, %584 : vector<4x128xf32>
    %586 = vector.extract_strided_slice %585 {offsets = [0, 0], sizes = [4, 32], strides = [1, 1]} : vector<4x128xf32> to vector<4x32xf32>
    %587 = arith.negf %586 : vector<4x32xf32>
    %588 = math.exp %587 : vector<4x32xf32>
    %cst_187 = arith.constant 1.000000e+00 : f32
    %589 = vector.broadcast %cst_187 : f32 to vector<4x32xf32>
    %590 = arith.addf %589, %588 : vector<4x32xf32>
    %591 = arith.divf %589, %590 : vector<4x32xf32>
    %592 = vector.extract_strided_slice %585 {offsets = [0, 32], sizes = [4, 32], strides = [1, 1]} : vector<4x128xf32> to vector<4x32xf32>
    %593 = arith.negf %592 : vector<4x32xf32>
    %594 = math.exp %593 : vector<4x32xf32>
    %cst_188 = arith.constant 1.000000e+00 : f32
    %595 = vector.broadcast %cst_188 : f32 to vector<4x32xf32>
    %596 = arith.addf %595, %594 : vector<4x32xf32>
    %597 = arith.divf %595, %596 : vector<4x32xf32>
    %598 = vector.extract_strided_slice %585 {offsets = [0, 64], sizes = [4, 32], strides = [1, 1]} : vector<4x128xf32> to vector<4x32xf32>
    %599 = math.tanh %598 : vector<4x32xf32>
    %600 = vector.extract_strided_slice %585 {offsets = [0, 96], sizes = [4, 32], strides = [1, 1]} : vector<4x128xf32> to vector<4x32xf32>
    %601 = arith.negf %600 : vector<4x32xf32>
    %602 = math.exp %601 : vector<4x32xf32>
    %cst_189 = arith.constant 1.000000e+00 : f32
    %603 = vector.broadcast %cst_189 : f32 to vector<4x32xf32>
    %604 = arith.addf %603, %602 : vector<4x32xf32>
    %605 = arith.divf %603, %604 : vector<4x32xf32>
    %606 = arith.mulf %597, %579 : vector<4x32xf32>
    %607 = arith.mulf %591, %599 : vector<4x32xf32>
    %608 = arith.addf %606, %607 : vector<4x32xf32>
    %609 = math.tanh %608 : vector<4x32xf32>
    %610 = arith.mulf %605, %609 : vector<4x32xf32>
    %c16_190 = arith.constant 16 : index
    %c0_191 = arith.constant 0 : index
    %611 = vector.load %arg16[%c16_190, %c0_191] : memref<20x32xf32, #tpu.memory_space<vmem>>, vector<4x32xf32>
    tpu.vector_store %arg16[%c16_190, %c0_191], %610 {strides = array<i32>} : memref<20x32xf32, #tpu.memory_space<vmem>>, vector<4x32xf32>,
    %c0_192 = arith.constant 0 : index
    %c0_193 = arith.constant 0 : index
    %612 = vector.load %arg16[%c0_192, %c0_193] : memref<20x32xf32, #tpu.memory_space<vmem>>, vector<20x32xf32>
    %c0_194 = arith.constant 0 : index
    %c0_195 = arith.constant 0 : index
    %613 = vector.load %arg18[%c0_194, %c0_195] : memref<20x32xf32, #tpu.memory_space<vmem>>, vector<20x32xf32>
    %614 = arith.addf %612, %613 : vector<20x32xf32>
    %c0_196 = arith.constant 0 : index
    %c0_197 = arith.constant 0 : index
    %615 = vector.load %arg16[%c0_196, %c0_197] : memref<20x32xf32, #tpu.memory_space<vmem>>, vector<20x32xf32>
    tpu.vector_store %arg16[%c0_196, %c0_197], %614 {strides = array<i32>} : memref<20x32xf32, #tpu.memory_space<vmem>>, vector<20x32xf32>,
    %c0_198 = arith.constant 0 : index
    %c0_199 = arith.constant 0 : index
    %616 = vector.load %arg16[%c0_198, %c0_199] : memref<20x32xf32, #tpu.memory_space<vmem>>, vector<20x32xf32>
    %c0_200 = arith.constant 0 : index
    %c0_201 = arith.constant 0 : index
    %617 = vector.load %arg10[%c0_200, %c0_201] : memref<32x32xf32, #tpu.memory_space<vmem>>, vector<32x32xf32>
    %cst_202 = arith.constant dense<0.000000e+00> : vector<20x32xf32>
    %618 = tpu.matmul %616, %617, %cst_202 {dimension_numbers = #tpu.dot_dimension_numbers<[1], [0], [0], [1], [0, 0, 1, 1], [], []>} : vector<20x32xf32>, vector<32x32xf32>, vector<20x32xf32> -> vector<20x32xf32>
    %c0_203 = arith.constant 0 : index
    %c0_204 = arith.constant 0 : index
    %619 = vector.load %arg11[%c0_203, %c0_204] : memref<1x32xf32, #tpu.memory_space<vmem>>, vector<1x32xf32>
    %620 = vector.broadcast %619 : vector<1x32xf32> to vector<20x32xf32>
    %621 = arith.addf %618, %620 : vector<20x32xf32>
    %622 = math.tanh %621 : vector<20x32xf32>
    %c0_205 = arith.constant 0 : index
    %c0_206 = arith.constant 0 : index
    %623 = vector.load %arg12[%c0_205, %c0_206] : memref<32x128xf32, #tpu.memory_space<vmem>>, vector<32x128xf32>
    %cst_207 = arith.constant dense<0.000000e+00> : vector<20x128xf32>
    %624 = tpu.matmul %622, %623, %cst_207 {dimension_numbers = #tpu.dot_dimension_numbers<[1], [0], [0], [1], [0, 0, 1, 1], [], []>} : vector<20x32xf32>, vector<32x128xf32>, vector<20x128xf32> -> vector<20x128xf32>
    %c0_208 = arith.constant 0 : index
    %c0_209 = arith.constant 0 : index
    %625 = vector.load %arg13[%c0_208, %c0_209] : memref<1x128xf32, #tpu.memory_space<vmem>>, vector<1x128xf32>
    %626 = vector.broadcast %625 : vector<1x128xf32> to vector<20x128xf32>
    %627 = arith.addf %624, %626 : vector<20x128xf32>
    %c0_210 = arith.constant 0 : index
    %c0_211 = arith.constant 0 : index
    %628 = vector.load %arg14[%c0_210, %c0_211] : memref<20x128xf32, #tpu.memory_space<vmem>>, vector<20x128xf32>
    tpu.vector_store %arg14[%c0_210, %c0_211], %627 {strides = array<i32>} : memref<20x128xf32, #tpu.memory_space<vmem>>, vector<20x128xf32>,
    return
  }
}

</mosaic_0001>

<llo_original>
// kernel: fwd.1
$region0: #{fwd.1}
  #allocation0 [shape = 'u32[]', space=smem, size = 0x4, offset = 0x4, fixed_abs, tag = 'smem constant byte address 0x4 - core index']
  #allocation1 [shape = 'u32[144,128]{1,0:T(1,128)}', space=vmem, size = 0x12000, scoped, tag = 'internal scratch']
  #allocation2 [shape = 'f32[20,128]{1,0:T(8,128)}', space=vmem, size = 0x3000, scoped, tag = 'scratch operand']
  #allocation3 [shape = 'f32[20,32]{1,0:T(8,128)}', space=vmem, size = 0x3000, scoped, tag = 'scratch operand']
  #allocation4 [shape = 'f32[20,32]{1,0:T(8,128)}', space=vmem, size = 0x3000, scoped, tag = 'scratch operand']
  #allocation5 [shape = 'f32[20,32]{1,0:T(8,128)}', space=vmem, size = 0x3000, scoped, tag = 'scratch operand']
  %s0 = inlined_call_operand.vmem [shape: f32[20,10], index: 0, kind: input, shape index: {}]
  %s1 = inlined_call_operand.vmem [shape: f32[10,128], index: 1, kind: input, shape index: {}]
  %s2 = inlined_call_operand.vmem [shape: f32[32,128], index: 2, kind: input, shape index: {}]
  %s3 = inlined_call_operand.vmem [shape: f32[1,128], index: 3, kind: input, shape index: {}]
  %s4 = inlined_call_operand.vmem [shape: f32[32,128], index: 4, kind: input, shape index: {}]
  %s5 = inlined_call_operand.vmem [shape: f32[32,128], index: 5, kind: input, shape index: {}]
  %s6 = inlined_call_operand.vmem [shape: f32[1,128], index: 6, kind: input, shape index: {}]
  %s7 = inlined_call_operand.vmem [shape: f32[32,128], index: 7, kind: input, shape index: {}]
  %s8 = inlined_call_operand.vmem [shape: f32[32,128], index: 8, kind: input, shape index: {}]
  %s9 = inlined_call_operand.vmem [shape: f32[1,128], index: 9, kind: input, shape index: {}]
  %s10 = inlined_call_operand.vmem [shape: f32[32,32], index: 10, kind: input, shape index: {}]
  %s11 = inlined_call_operand.vmem [shape: f32[1,32], index: 11, kind: input, shape index: {}]
  %s12 = inlined_call_operand.vmem [shape: f32[32,128], index: 12, kind: input, shape index: {}]
  %s13 = inlined_call_operand.vmem [shape: f32[1,128], index: 13, kind: input, shape index: {}]
  %s14 = inlined_call_operand.vmem [shape: f32[20,128], index: 14, kind: output, shape index: {}]
  %s15 = sld [smem:[#allocation0]]
  $region66: #{fwd.1} parent=0
    _
  %s17 = ssub.s32 1, %s15
  %s18 = scalar_select 0, %s17, %s15
  // Predicated region
  $region2: #{fwd.1} parent=0 // pred_check
    _
  $region3: #{fwd.1} parent=0 // pred_check_branch
    %20 = sbr.rel (0) target = $region5
  $region4: #{fwd.1} parent=0 // pred_region
    _
  $region5: #{fwd.1} parent=0 // pred_fallthru
    _
  // Predicated region
  $region6: #{fwd.1} parent=0 // pred_check
    _
  $region7: #{fwd.1} parent=0 // pred_check_branch
    %22 = sbr.rel (0) target = $region9
  $region8: #{fwd.1} parent=0 // pred_region
    _
  $region9: #{fwd.1} parent=0 // pred_fallthru
    _
  // Predicated region
  $region10: #{fwd.1} parent=0 // pred_check
    _
  $region11: #{fwd.1} parent=0 // pred_check_branch
    %24 = sbr.rel (0) target = $region13
  $region12: #{fwd.1} parent=0 // pred_region
    _
  $region13: #{fwd.1} parent=0 // pred_fallthru
    _
  // Predicated region
  $region14: #{fwd.1} parent=0 // pred_check
    _
  $region15: #{fwd.1} parent=0 // pred_check_branch
    %26 = sbr.rel (0) target = $region17
  $region16: #{fwd.1} parent=0 // pred_region
    _
  $region17: #{fwd.1} parent=0 // pred_fallthru
    _
  // Predicated region
  $region18: #{fwd.1} parent=0 // pred_check
    _
  $region19: #{fwd.1} parent=0 // pred_check_branch
    %28 = sbr.rel (0) target = $region21
  $region20: #{fwd.1} parent=0 // pred_region
    _
  $region21: #{fwd.1} parent=0 // pred_fallthru
    _
  // Predicated region
  $region22: #{fwd.1} parent=0 // pred_check
    _
  $region23: #{fwd.1} parent=0 // pred_check_branch
    %30 = sbr.rel (0) target = $region25
  $region24: #{fwd.1} parent=0 // pred_region
    _
  $region25: #{fwd.1} parent=0 // pred_fallthru
    _
  // Predicated region
  $region26: #{fwd.1} parent=0 // pred_check
    _
  $region27: #{fwd.1} parent=0 // pred_check_branch
    %32 = sbr.rel (0) target = $region29
  $region28: #{fwd.1} parent=0 // pred_region
    _
  $region29: #{fwd.1} parent=0 // pred_fallthru
    _
  // Predicated region
  $region30: #{fwd.1} parent=0 // pred_check
    _
  $region31: #{fwd.1} parent=0 // pred_check_branch
    %34 = sbr.rel (0) target = $region33
  $region32: #{fwd.1} parent=0 // pred_region
    _
  $region33: #{fwd.1} parent=0 // pred_fallthru
    _
  // Predicated region
  $region34: #{fwd.1} parent=0 // pred_check
    _
  $region35: #{fwd.1} parent=0 // pred_check_branch
    %36 = sbr.rel (0) target = $region37
  $region36: #{fwd.1} parent=0 // pred_region
    _
  $region37: #{fwd.1} parent=0 // pred_fallthru
    _
  // Predicated region
  $region38: #{fwd.1} parent=0 // pred_check
    _
  $region39: #{fwd.1} parent=0 // pred_check_branch
    %38 = sbr.rel (0) target = $region41
  $region40: #{fwd.1} parent=0 // pred_region
    _
  $region41: #{fwd.1} parent=0 // pred_fallthru
    _
  // Predicated region
  $region42: #{fwd.1} parent=0 // pred_check
    _
  $region43: #{fwd.1} parent=0 // pred_check_branch
    %40 = sbr.rel (0) target = $region45
  $region44: #{fwd.1} parent=0 // pred_region
    _
  $region45: #{fwd.1} parent=0 // pred_fallthru
    _
  // Predicated region
  $region46: #{fwd.1} parent=0 // pred_check
    _
  $region47: #{fwd.1} parent=0 // pred_check_branch
    %42 = sbr.rel (0) target = $region49
  $region48: #{fwd.1} parent=0 // pred_region
    _
  $region49: #{fwd.1} parent=0 // pred_fallthru
    _
  // Predicated region
  $region50: #{fwd.1} parent=0 // pred_check
    _
  $region51: #{fwd.1} parent=0 // pred_check_branch
    %44 = sbr.rel (0) target = $region53
  $region52: #{fwd.1} parent=0 // pred_region
    _
  $region53: #{fwd.1} parent=0 // pred_fallthru
    _
  // Predicated region
  $region54: #{fwd.1} parent=0 // pred_check
    _
  $region55: #{fwd.1} parent=0 // pred_check_branch
    %46 = sbr.rel (0) target = $region57
  $region56: #{fwd.1} parent=0 // pred_region
    _
  $region57: #{fwd.1} parent=0 // pred_fallthru
    _
  %v47 = vld [vmem:[%s0] sm:$0xff]
  %v48 = vld [vmem:[%s0 + $0x8] sm:$0xff]
  %v49 = vld [vmem:[%s0 + $0x10] sm:$0xf]
  %v50 = vld [vmem:[%s1] sm:$0xff]
  %v51 = vld [vmem:[%s1 + $0x8] sm:$0x3]
  %v52 = vld [vmem:[%s3] sm:$0x1]
  %v54 = vlaneseq
  %v55 = vshrl.u32 %v54, 7
  %v56 = vsub.s32 0, %v55
  %v57 = vrot.slane %v52, %v56
  %vm59 = vcmask 80896
  %v61 = vsel %vm59, %v47, 0
  %v64 = vsel %vm59, %v48, 0
  %v67 = vsel %vm59, %v49, 0
  %vm69 = vcmask 1041408
  %v71 = vsel %vm69, %v51, 0
  %73 = vmatprep.subr.mxu0 0.0
  %74 = vmatpush1.msra.mxu0 %v50
  %75 = vmatprep.subr.mxu0 0.0
  %76 = vmatpush1.msra.mxu0 %v71
  %77 = vmatprep.subr.mxu0 0.0
  %78 = vmatpush1.msra.mxu0 0.0
  %79 = vmatprep.subr.mxu0 0.0
  %80 = vmatpush1.msra.mxu0 0.0
  %81 = vmatprep.subr.mxu0 0.0
  %82 = vmatpush1.msra.mxu0 0.0
  %83 = vmatprep.subr.mxu0 0.0
  %84 = vmatpush1.msra.mxu0 0.0
  %85 = vmatprep.subr.mxu0 0.0
  %86 = vmatpush1.msra.mxu0 0.0
  %87 = vmatprep.subr.mxu0 0.0
  %88 = vmatpush1.msra.mxu0 0.0
  %89 = vmatprep.subr.mxu0 0.0
  %90 = vmatpush1.msra.mxu0 0.0
  %91 = vmatprep.subr.mxu0 0.0
  %92 = vmatpush1.msra.mxu0 0.0
  %93 = vmatprep.subr.mxu0 0.0
  %94 = vmatpush1.msra.mxu0 0.0
  %95 = vmatprep.subr.mxu0 0.0
  %96 = vmatpush1.msra.mxu0 0.0
  %97 = vmatprep.subr.mxu0 0.0
  %98 = vmatpush1.msra.mxu0 0.0
  %99 = vmatprep.subr.mxu0 0.0
  %100 = vmatpush1.msra.mxu0 0.0
  %101 = vmatprep.subr.mxu0 0.0
  %102 = vmatpush1.msra.mxu0 0.0
  %103 = vmatprep.subr.mxu0 0.0
  %104 = vmatpush1.msra.mxu0 0.0
  %105 = vmatprep.subr.mxu0 0.0
  %106 = vmatpush1.msra.mxu0 0.0
  %107 = vmatprep.subr.mxu0 0.0
  %108 = vmatpush1.msra.mxu0 0.0
  %109 = vmatprep.subr.mxu0 0.0
  %110 = vmatpush1.msra.mxu0 0.0
  %111 = vmatprep.subr.mxu0 0.0
  %112 = vmatpush1.msra.mxu0 0.0
  %113 = vmatprep.subr.mxu0 0.0
  %114 = vmatpush1.msra.mxu0 0.0
  %115 = vmatprep.subr.mxu0 0.0
  %116 = vmatpush1.msra.mxu0 0.0
  %117 = vmatprep.subr.mxu0 0.0
  %118 = vmatpush1.msra.mxu0 0.0
  %119 = vmatprep.subr.mxu0 0.0
  %120 = vmatpush1.msra.mxu0 0.0
  %121 = vmatprep.subr.mxu0 0.0
  %122 = vmatpush1.msra.mxu0 0.0
  %123 = vmatprep.subr.mxu0 0.0
  %124 = vmatpush1.msra.mxu0 0.0
  %125 = vmatprep.subr.mxu0 0.0
  %126 = vmatpush1.msra.mxu0 0.0
  %127 = vmatprep.subr.mxu0 0.0
  %128 = vmatpush1.msra.mxu0 0.0
  %129 = vmatprep.subr.mxu0 0.0
  %130 = vmatpush1.msra.mxu0 0.0
  %131 = vmatprep.subr.mxu0 0.0
  %132 = vmatpush1.msra.mxu0 0.0
  %133 = vmatprep.subr.mxu0 0.0
  %134 = vmatpush1.msra.mxu0 0.0
  %135 = vmatprep.subr.mxu0 0.0
  %136 = vmatpush1.msra.mxu0 0.0
  %137 = vmatprep.mubr.f32.mxu0 0.0
  %138 = vmatmul.mubr.f32.gmra.mrb[0].mxu0 %v61
  %v139 = vpop.f32.mrb[0].mxu0
  %v140 = vadd.f32 %v57, %v139
  %v141 = vpop.f32.mrb[0].mxu0
  %142 = vmatprep.mubr.f32.mxu0 0.0
  %143 = vmatmul.mubr.f32.gmra.mrb[0].mxu0 %v64
  %v144 = vpop.f32.mrb[0].mxu0
  %v145 = vadd.f32 %v57, %v144
  %v146 = vpop.f32.mrb[0].mxu0
  %147 = vmatprep.mubr.f32.mxu0 0.0
  %148 = vmatmul.mubr.f32.gmra.mrb[0].mxu0 %v67
  %v149 = vpop.f32.mrb[0].mxu0
  %v150 = vadd.f32 %v57, %v149
  %v151 = vpop.f32.mrb[0].mxu0
  %152 = vdwg.mxu0
  %153 = vst [vmem:[#allocation2] sm:$0xff] %v140
  %154 = vst [vmem:[#allocation2 + $0x8] sm:$0xff] %v145
  %155 = vst [vmem:[#allocation2 + $0x10] sm:$0xf] %v150
  %v156 = vld [vmem:[%s2] sm:$0xff]
  %v157 = vld [vmem:[%s2 + $0x8] sm:$0xff]
  %v158 = vld [vmem:[%s2 + $0x10] sm:$0xff]
  %v159 = vld [vmem:[%s2 + $0x18] sm:$0xff]
  %v160 = vld [vmem:[#allocation2] sm:$0x3]
  %vm161 = vcmask 261120
  %v163 = vsel %vm161, 0.0, 0
  %165 = vmatprep.subr.mxu0 0.0
  %166 = vmatpush1.msra.mxu0 %v156
  %167 = vmatprep.subr.mxu0 0.0
  %168 = vmatpush1.msra.mxu0 %v157
  %169 = vmatprep.subr.mxu0 0.0
  %170 = vmatpush1.msra.mxu0 %v158
  %171 = vmatprep.subr.mxu0 0.0
  %172 = vmatpush1.msra.mxu0 %v159
  %173 = vmatprep.subr.mxu0 0.0
  %174 = vmatpush1.msra.mxu0 0.0
  %175 = vmatprep.subr.mxu0 0.0
  %176 = vmatpush1.msra.mxu0 0.0
  %177 = vmatprep.subr.mxu0 0.0
  %178 = vmatpush1.msra.mxu0 0.0
  %179 = vmatprep.subr.mxu0 0.0
  %180 = vmatpush1.msra.mxu0 0.0
  %181 = vmatprep.subr.mxu0 0.0
  %182 = vmatpush1.msra.mxu0 0.0
  %183 = vmatprep.subr.mxu0 0.0
  %184 = vmatpush1.msra.mxu0 0.0
  %185 = vmatprep.subr.mxu0 0.0
  %186 = vmatpush1.msra.mxu0 0.0
  %187 = vmatprep.subr.mxu0 0.0
  %188 = vmatpush1.msra.mxu0 0.0
  %189 = vmatprep.subr.mxu0 0.0
  %190 = vmatpush1.msra.mxu0 0.0
  %191 = vmatprep.subr.mxu0 0.0
  %192 = vmatpush1.msra.mxu0 0.0
  %193 = vmatprep.subr.mxu0 0.0
  %194 = vmatpush1.msra.mxu0 0.0
  %195 = vmatprep.subr.mxu0 0.0
  %196 = vmatpush1.msra.mxu0 0.0
  %197 = vmatprep.subr.mxu0 0.0
  %198 = vmatpush1.msra.mxu0 0.0
  %199 = vmatprep.subr.mxu0 0.0
  %200 = vmatpush1.msra.mxu0 0.0
  %201 = vmatprep.subr.mxu0 0.0
  %202 = vmatpush1.msra.mxu0 0.0
  %203 = vmatprep.subr.mxu0 0.0
  %204 = vmatpush1.msra.mxu0 0.0
  %205 = vmatprep.subr.mxu0 0.0
  %206 = vmatpush1.msra.mxu0 0.0
  %207 = vmatprep.subr.mxu0 0.0
  %208 = vmatpush1.msra.mxu0 0.0
  %209 = vmatprep.subr.mxu0 0.0
  %210 = vmatpush1.msra.mxu0 0.0
  %211 = vmatprep.subr.mxu0 0.0
  %212 = vmatpush1.msra.mxu0 0.0
  %213 = vmatprep.subr.mxu0 0.0
  %214 = vmatpush1.msra.mxu0 0.0
  %215 = vmatprep.subr.mxu0 0.0
  %216 = vmatpush1.msra.mxu0 0.0
  %217 = vmatprep.subr.mxu0 0.0
  %218 = vmatpush1.msra.mxu0 0.0
  %219 = vmatprep.subr.mxu0 0.0
  %220 = vmatpush1.msra.mxu0 0.0
  %221 = vmatprep.subr.mxu0 0.0
  %222 = vmatpush1.msra.mxu0 0.0
  %223 = vmatprep.subr.mxu0 0.0
  %224 = vmatpush1.msra.mxu0 0.0
  %225 = vmatprep.subr.mxu0 0.0
  %226 = vmatpush1.msra.mxu0 0.0
  %227 = vmatprep.subr.mxu0 0.0
  %228 = vmatpush1.msra.mxu0 0.0
  %229 = vmatprep.mubr.f32.mxu0 0.0
  %230 = vmatmul.mubr.f32.gmra.mrb[0].mxu0 %v163
  %v231 = vpop.f32.mrb[0].mxu0
  %v232 = vadd.f32 0.0, %v231
  %v233 = vpop.f32.mrb[0].mxu0
  %234 = vdwg.mxu0
  %v235 = vadd.f32 %v160, %v232
  %v236 = vxor.u32 %v235, 2147483648
  %v237 = vmul.f32 %v236, 1.442695
  %v238 = vpow.pop %v237
  %v239 = vadd.f32 %v238, 1.0
  %v240 = vrcp.pop %v239
  %v241 = vmul.f32 1.0, %v240
  %v242 = vtanh.pop %v235
  %v243 = vmul.f32 %v241, 0.0
  %245 = vrot.lane.b32.xlu0 %v242, 64
  %v246 = vpop.permute.xlu0 %245
  %v248 = vmul.f32 %v241, %v246
  %250 = vrot.lane.b32.xlu0 %v248, 32
  %v251 = vpop.permute.xlu0 %250
  %v253 = vadd.f32 %v243, %v251
  %v254 = vtanh.pop %v253
  %256 = vrot.lane.b32.xlu0 %v254, 64
  %v257 = vpop.permute.xlu0 %256
  %v259 = vmul.f32 %v241, %v257
  %261 = vrot.lane.b32.xlu0 %v259, 32
  %v262 = vpop.permute.xlu0 %261
  %vm264 = vcmask 254976
  %265 = vst.msk [vmem:[#allocation3] sm:$0x3] %vm264, %v262
  %v266 = vld [vmem:[#allocation2 + $0x2] sm:$0x3]
  %v267 = vsel %vm161, %v262, 0
  %269 = vmatprep.subr.mxu0 0.0
  %270 = vmatpush1.msra.mxu0 %v156
  %271 = vmatprep.subr.mxu0 0.0
  %272 = vmatpush1.msra.mxu0 %v157
  %273 = vmatprep.subr.mxu0 0.0
  %274 = vmatpush1.msra.mxu0 %v158
  %275 = vmatprep.subr.mxu0 0.0
  %276 = vmatpush1.msra.mxu0 %v159
  %277 = vmatprep.subr.mxu0 0.0
  %278 = vmatpush1.msra.mxu0 0.0
  %279 = vmatprep.subr.mxu0 0.0
  %280 = vmatpush1.msra.mxu0 0.0
  %281 = vmatprep.subr.mxu0 0.0
  %282 = vmatpush1.msra.mxu0 0.0
  %283 = vmatprep.subr.mxu0 0.0
  %284 = vmatpush1.msra.mxu0 0.0
  %285 = vmatprep.subr.mxu0 0.0
  %286 = vmatpush1.msra.mxu0 0.0
  %287 = vmatprep.subr.mxu0 0.0
  %288 = vmatpush1.msra.mxu0 0.0
  %289 = vmatprep.subr.mxu0 0.0
  %290 = vmatpush1.msra.mxu0 0.0
  %291 = vmatprep.subr.mxu0 0.0
  %292 = vmatpush1.msra.mxu0 0.0
  %293 = vmatprep.subr.mxu0 0.0
  %294 = vmatpush1.msra.mxu0 0.0
  %295 = vmatprep.subr.mxu0 0.0
  %296 = vmatpush1.msra.mxu0 0.0
  %297 = vmatprep.subr.mxu0 0.0
  %298 = vmatpush1.msra.mxu0 0.0
  %299 = vmatprep.subr.mxu0 0.0
  %300 = vmatpush1.msra.mxu0 0.0
  %301 = vmatprep.subr.mxu0 0.0
  %302 = vmatpush1.msra.mxu0 0.0
  %303 = vmatprep.subr.mxu0 0.0
  %304 = vmatpush1.msra.mxu0 0.0
  %305 = vmatprep.subr.mxu0 0.0
  %306 = vmatpush1.msra.mxu0 0.0
  %307 = vmatprep.subr.mxu0 0.0
  %308 = vmatpush1.msra.mxu0 0.0
  %309 = vmatprep.subr.mxu0 0.0
  %310 = vmatpush1.msra.mxu0 0.0
  %311 = vmatprep.subr.mxu0 0.0
  %312 = vmatpush1.msra.mxu0 0.0
  %313 = vmatprep.subr.mxu0 0.0
  %314 = vmatpush1.msra.mxu0 0.0
  %315 = vmatprep.subr.mxu0 0.0
  %316 = vmatpush1.msra.mxu0 0.0
  %317 = vmatprep.subr.mxu0 0.0
  %318 = vmatpush1.msra.mxu0 0.0
  %319 = vmatprep.subr.mxu0 0.0
  %320 = vmatpush1.msra.mxu0 0.0
  %321 = vmatprep.subr.mxu0 0.0
  %322 = vmatpush1.msra.mxu0 0.0
  %323 = vmatprep.subr.mxu0 0.0
  %324 = vmatpush1.msra.mxu0 0.0
  %325 = vmatprep.subr.mxu0 0.0
  %326 = vmatpush1.msra.mxu0 0.0
  %327 = vmatprep.subr.mxu0 0.0
  %328 = vmatpush1.msra.mxu0 0.0
  %329 = vmatprep.subr.mxu0 0.0
  %330 = vmatpush1.msra.mxu0 0.0
  %331 = vmatprep.subr.mxu0 0.0
  %332 = vmatpush1.msra.mxu0 0.0
  %333 = vmatprep.mubr.f32.mxu0 0.0
  %334 = vmatmul.mubr.f32.gmra.mrb[0].mxu0 %v267
  %v335 = vpop.f32.mrb[0].mxu0
  %v336 = vadd.f32 0.0, %v335
  %v337 = vpop.f32.mrb[0].mxu0
  %338 = vdwg.mxu0
  %v339 = vadd.f32 %v266, %v336
  %v340 = vxor.u32 %v339, 2147483648
  %v341 = vmul.f32 %v340, 1.442695
  %v342 = vpow.pop %v341
  %v343 = vadd.f32 %v342, 1.0
  %v344 = vrcp.pop %v343
  %v345 = vmul.f32 1.0, %v344
  %v346 = vtanh.pop %v339
  %v347 = vmul.f32 %v345, %v253
  %349 = vrot.lane.b32.xlu0 %v346, 64
  %v350 = vpop.permute.xlu0 %349
  %v352 = vmul.f32 %v345, %v350
  %354 = vrot.lane.b32.xlu0 %v352, 32
  %v355 = vpop.permute.xlu0 %354
  %v357 = vadd.f32 %v347, %v355
  %v358 = vtanh.pop %v357
  %360 = vrot.lane.b32.xlu0 %v358, 64
  %v361 = vpop.permute.xlu0 %360
  %v363 = vmul.f32 %v345, %v361
  %365 = vrot.lane.b32.xlu0 %v363, 32
  %v366 = vpop.permute.xlu0 %365
  %368 = vst.msk [vmem:[#allocation3 + $0x2] sm:$0x3] %vm264, %v366
  %v369 = vld [vmem:[#allocation2 + $0x4] sm:$0x3]
  %v370 = vsel %vm161, %v366, 0
  %372 = vmatprep.subr.mxu0 0.0
  %373 = vmatpush1.msra.mxu0 %v156
  %374 = vmatprep.subr.mxu0 0.0
  %375 = vmatpush1.msra.mxu0 %v157
  %376 = vmatprep.subr.mxu0 0.0
  %377 = vmatpush1.msra.mxu0 %v158
  %378 = vmatprep.subr.mxu0 0.0
  %379 = vmatpush1.msra.mxu0 %v159
  %380 = vmatprep.subr.mxu0 0.0
  %381 = vmatpush1.msra.mxu0 0.0
  %382 = vmatprep.subr.mxu0 0.0
  %383 = vmatpush1.msra.mxu0 0.0
  %384 = vmatprep.subr.mxu0 0.0
  %385 = vmatpush1.msra.mxu0 0.0
  %386 = vmatprep.subr.mxu0 0.0
  %387 = vmatpush1.msra.mxu0 0.0
  %388 = vmatprep.subr.mxu0 0.0
  %389 = vmatpush1.msra.mxu0 0.0
  %390 = vmatprep.subr.mxu0 0.0
  %391 = vmatpush1.msra.mxu0 0.0
  %392 = vmatprep.subr.mxu0 0.0
  %393 = vmatpush1.msra.mxu0 0.0
  %394 = vmatprep.subr.mxu0 0.0
  %395 = vmatpush1.msra.mxu0 0.0
  %396 = vmatprep.subr.mxu0 0.0
  %397 = vmatpush1.msra.mxu0 0.0
  %398 = vmatprep.subr.mxu0 0.0
  %399 = vmatpush1.msra.mxu0 0.0
  %400 = vmatprep.subr.mxu0 0.0
  %401 = vmatpush1.msra.mxu0 0.0
  %402 = vmatprep.subr.mxu0 0.0
  %403 = vmatpush1.msra.mxu0 0.0
  %404 = vmatprep.subr.mxu0 0.0
  %405 = vmatpush1.msra.mxu0 0.0
  %406 = vmatprep.subr.mxu0 0.0
  %407 = vmatpush1.msra.mxu0 0.0
  %408 = vmatprep.subr.mxu0 0.0
  %409 = vmatpush1.msra.mxu0 0.0
  %410 = vmatprep.subr.mxu0 0.0
  %411 = vmatpush1.msra.mxu0 0.0
  %412 = vmatprep.subr.mxu0 0.0
  %413 = vmatpush1.msra.mxu0 0.0
  %414 = vmatprep.subr.mxu0 0.0
  %415 = vmatpush1.msra.mxu0 0.0
  %416 = vmatprep.subr.mxu0 0.0
  %417 = vmatpush1.msra.mxu0 0.0
  %418 = vmatprep.subr.mxu0 0.0
  %419 = vmatpush1.msra.mxu0 0.0
  %420 = vmatprep.subr.mxu0 0.0
  %421 = vmatpush1.msra.mxu0 0.0
  %422 = vmatprep.subr.mxu0 0.0
  %423 = vmatpush1.msra.mxu0 0.0
  %424 = vmatprep.subr.mxu0 0.0
  %425 = vmatpush1.msra.mxu0 0.0
  %426 = vmatprep.subr.mxu0 0.0
  %427 = vmatpush1.msra.mxu0 0.0
  %428 = vmatprep.subr.mxu0 0.0
  %429 = vmatpush1.msra.mxu0 0.0
  %430 = vmatprep.subr.mxu0 0.0
  %431 = vmatpush1.msra.mxu0 0.0
  %432 = vmatprep.subr.mxu0 0.0
  %433 = vmatpush1.msra.mxu0 0.0
  %434 = vmatprep.subr.mxu0 0.0
  %435 = vmatpush1.msra.mxu0 0.0
  %436 = vmatprep.mubr.f32.mxu0 0.0
  %437 = vmatmul.mubr.f32.gmra.mrb[0].mxu0 %v370
  %v438 = vpop.f32.mrb[0].mxu0
  %v439 = vadd.f32 0.0, %v438
  %v440 = vpop.f32.mrb[0].mxu0
  %441 = vdwg.mxu0
  %v442 = vadd.f32 %v369, %v439
  %v443 = vxor.u32 %v442, 2147483648
  %v444 = vmul.f32 %v443, 1.442695
  %v445 = vpow.pop %v444
  %v446 = vadd.f32 %v445, 1.0
  %v447 = vrcp.pop %v446
  %v448 = vmul.f32 1.0, %v447
  %v449 = vtanh.pop %v442
  %v450 = vmul.f32 %v448, %v357
  %452 = vrot.lane.b32.xlu0 %v449, 64
  %v453 = vpop.permute.xlu0 %452
  %v455 = vmul.f32 %v448, %v453
  %457 = vrot.lane.b32.xlu0 %v455, 32
  %v458 = vpop.permute.xlu0 %457
  %v460 = vadd.f32 %v450, %v458
  %v461 = vtanh.pop %v460
  %463 = vrot.lane.b32.xlu0 %v461, 64
  %v464 = vpop.permute.xlu0 %463
  %v466 = vmul.f32 %v448, %v464
  %468 = vrot.lane.b32.xlu0 %v466, 32
  %v469 = vpop.permute.xlu0 %468
  %471 = vst.msk [vmem:[#allocation3 + $0x4] sm:$0x3] %vm264, %v469
  %v472 = vld [vmem:[#allocation2 + $0x6] sm:$0x3]
  %v473 = vsel %vm161, %v469, 0
  %475 = vmatprep.subr.mxu0 0.0
  %476 = vmatpush1.msra.mxu0 %v156
  %477 = vmatprep.subr.mxu0 0.0
  %478 = vmatpush1.msra.mxu0 %v157
  %479 = vmatprep.subr.mxu0 0.0
  %480 = vmatpush1.msra.mxu0 %v158
  %481 = vmatprep.subr.mxu0 0.0
  %482 = vmatpush1.msra.mxu0 %v159
  %483 = vmatprep.subr.mxu0 0.0
  %484 = vmatpush1.msra.mxu0 0.0
  %485 = vmatprep.subr.mxu0 0.0
  %486 = vmatpush1.msra.mxu0 0.0
  %487 = vmatprep.subr.mxu0 0.0
  %488 = vmatpush1.msra.mxu0 0.0
  %489 = vmatprep.subr.mxu0 0.0
  %490 = vmatpush1.msra.mxu0 0.0
  %491 = vmatprep.subr.mxu0 0.0
  %492 = vmatpush1.msra.mxu0 0.0
  %493 = vmatprep.subr.mxu0 0.0
  %494 = vmatpush1.msra.mxu0 0.0
  %495 = vmatprep.subr.mxu0 0.0
  %496 = vmatpush1.msra.mxu0 0.0
  %497 = vmatprep.subr.mxu0 0.0
  %498 = vmatpush1.msra.mxu0 0.0
  %499 = vmatprep.subr.mxu0 0.0
  %500 = vmatpush1.msra.mxu0 0.0
  %501 = vmatprep.subr.mxu0 0.0
  %502 = vmatpush1.msra.mxu0 0.0
  %503 = vmatprep.subr.mxu0 0.0
  %504 = vmatpush1.msra.mxu0 0.0
  %505 = vmatprep.subr.mxu0 0.0
  %506 = vmatpush1.msra.mxu0 0.0
  %507 = vmatprep.subr.mxu0 0.0
  %508 = vmatpush1.msra.mxu0 0.0
  %509 = vmatprep.subr.mxu0 0.0
  %510 = vmatpush1.msra.mxu0 0.0
  %511 = vmatprep.subr.mxu0 0.0
  %512 = vmatpush1.msra.mxu0 0.0
  %513 = vmatprep.subr.mxu0 0.0
  %514 = vmatpush1.msra.mxu0 0.0
  %515 = vmatprep.subr.mxu0 0.0
  %516 = vmatpush1.msra.mxu0 0.0
  %517 = vmatprep.subr.mxu0 0.0
  %518 = vmatpush1.msra.mxu0 0.0
  %519 = vmatprep.subr.mxu0 0.0
  %520 = vmatpush1.msra.mxu0 0.0
  %521 = vmatprep.subr.mxu0 0.0
  %522 = vmatpush1.msra.mxu0 0.0
  %523 = vmatprep.subr.mxu0 0.0
  %524 = vmatpush1.msra.mxu0 0.0
  %525 = vmatprep.subr.mxu0 0.0
  %526 = vmatpush1.msra.mxu0 0.0
  %527 = vmatprep.subr.mxu0 0.0
  %528 = vmatpush1.msra.mxu0 0.0
  %529 = vmatprep.subr.mxu0 0.0
  %530 = vmatpush1.msra.mxu0 0.0
  %531 = vmatprep.subr.mxu0 0.0
  %532 = vmatpush1.msra.mxu0 0.0
  %533 = vmatprep.subr.mxu0 0.0
  %534 = vmatpush1.msra.mxu0 0.0
  %535 = vmatprep.subr.mxu0 0.0
  %536 = vmatpush1.msra.mxu0 0.0
  %537 = vmatprep.subr.mxu0 0.0
  %538 = vmatpush1.msra.mxu0 0.0
  %539 = vmatprep.mubr.f32.mxu0 0.0
  %540 = vmatmul.mubr.f32.gmra.mrb[0].mxu0 %v473
  %v541 = vpop.f32.mrb[0].mxu0
  %v542 = vadd.f32 0.0, %v541
  %v543 = vpop.f32.mrb[0].mxu0
  %544 = vdwg.mxu0
  %v545 = vadd.f32 %v472, %v542
  %v546 = vxor.u32 %v545, 2147483648
  %v547 = vmul.f32 %v546, 1.442695
  %v548 = vpow.pop %v547
  %v549 = vadd.f32 %v548, 1.0
  %v550 = vrcp.pop %v549
  %v551 = vmul.f32 1.0, %v550
  %v552 = vtanh.pop %v545
  %v553 = vmul.f32 %v551, %v460
  %555 = vrot.lane.b32.xlu0 %v552, 64
  %v556 = vpop.permute.xlu0 %555
  %v558 = vmul.f32 %v551, %v556
  %560 = vrot.lane.b32.xlu0 %v558, 32
  %v561 = vpop.permute.xlu0 %560
  %v563 = vadd.f32 %v553, %v561
  %v564 = vtanh.pop %v563
  %566 = vrot.lane.b32.xlu0 %v564, 64
  %v567 = vpop.permute.xlu0 %566
  %v569 = vmul.f32 %v551, %v567
  %571 = vrot.lane.b32.xlu0 %v569, 32
  %v572 = vpop.permute.xlu0 %571
  %574 = vst.msk [vmem:[#allocation3 + $0x6] sm:$0x3] %vm264, %v572
  %v575 = vld [vmem:[#allocation2 + $0x8] sm:$0x3]
  %v576 = vsel %vm161, %v572, 0
  %578 = vmatprep.subr.mxu0 0.0
  %579 = vmatpush1.msra.mxu0 %v156
  %580 = vmatprep.subr.mxu0 0.0
  %581 = vmatpush1.msra.mxu0 %v157
  %582 = vmatprep.subr.mxu0 0.0
  %583 = vmatpush1.msra.mxu0 %v158
  %584 = vmatprep.subr.mxu0 0.0
  %585 = vmatpush1.msra.mxu0 %v159
  %586 = vmatprep.subr.mxu0 0.0
  %587 = vmatpush1.msra.mxu0 0.0
  %588 = vmatprep.subr.mxu0 0.0
  %589 = vmatpush1.msra.mxu0 0.0
  %590 = vmatprep.subr.mxu0 0.0
  %591 = vmatpush1.msra.mxu0 0.0
  %592 = vmatprep.subr.mxu0 0.0
  %593 = vmatpush1.msra.mxu0 0.0
  %594 = vmatprep.subr.mxu0 0.0
  %595 = vmatpush1.msra.mxu0 0.0
  %596 = vmatprep.subr.mxu0 0.0
  %597 = vmatpush1.msra.mxu0 0.0
  %598 = vmatprep.subr.mxu0 0.0
  %599 = vmatpush1.msra.mxu0 0.0
  %600 = vmatprep.subr.mxu0 0.0
  %601 = vmatpush1.msra.mxu0 0.0
  %602 = vmatprep.subr.mxu0 0.0
  %603 = vmatpush1.msra.mxu0 0.0
  %604 = vmatprep.subr.mxu0 0.0
  %605 = vmatpush1.msra.mxu0 0.0
  %606 = vmatprep.subr.mxu0 0.0
  %607 = vmatpush1.msra.mxu0 0.0
  %608 = vmatprep.subr.mxu0 0.0
  %609 = vmatpush1.msra.mxu0 0.0
  %610 = vmatprep.subr.mxu0 0.0
  %611 = vmatpush1.msra.mxu0 0.0
  %612 = vmatprep.subr.mxu0 0.0
  %613 = vmatpush1.msra.mxu0 0.0
  %614 = vmatprep.subr.mxu0 0.0
  %615 = vmatpush1.msra.mxu0 0.0
  %616 = vmatprep.subr.mxu0 0.0
  %617 = vmatpush1.msra.mxu0 0.0
  %618 = vmatprep.subr.mxu0 0.0
  %619 = vmatpush1.msra.mxu0 0.0
  %620 = vmatprep.subr.mxu0 0.0
  %621 = vmatpush1.msra.mxu0 0.0
  %622 = vmatprep.subr.mxu0 0.0
  %623 = vmatpush1.msra.mxu0 0.0
  %624 = vmatprep.subr.mxu0 0.0
  %625 = vmatpush1.msra.mxu0 0.0
  %626 = vmatprep.subr.mxu0 0.0
  %627 = vmatpush1.msra.mxu0 0.0
  %628 = vmatprep.subr.mxu0 0.0
  %629 = vmatpush1.msra.mxu0 0.0
  %630 = vmatprep.subr.mxu0 0.0
  %631 = vmatpush1.msra.mxu0 0.0
  %632 = vmatprep.subr.mxu0 0.0
  %633 = vmatpush1.msra.mxu0 0.0
  %634 = vmatprep.subr.mxu0 0.0
  %635 = vmatpush1.msra.mxu0 0.0
  %636 = vmatprep.subr.mxu0 0.0
  %637 = vmatpush1.msra.mxu0 0.0
  %638 = vmatprep.subr.mxu0 0.0
  %639 = vmatpush1.msra.mxu0 0.0
  %640 = vmatprep.subr.mxu0 0.0
  %641 = vmatpush1.msra.mxu0 0.0
  %642 = vmatprep.mubr.f32.mxu0 0.0
  %643 = vmatmul.mubr.f32.gmra.mrb[0].mxu0 %v576
  %v644 = vpop.f32.mrb[0].mxu0
  %v645 = vadd.f32 0.0, %v644
  %v646 = vpop.f32.mrb[0].mxu0
  %647 = vdwg.mxu0
  %v648 = vadd.f32 %v575, %v645
  %v649 = vxor.u32 %v648, 2147483648
  %v650 = vmul.f32 %v649, 1.442695
  %v651 = vpow.pop %v650
  %v652 = vadd.f32 %v651, 1.0
  %v653 = vrcp.pop %v652
  %v654 = vmul.f32 1.0, %v653
  %v655 = vtanh.pop %v648
  %v656 = vmul.f32 %v654, %v563
  %658 = vrot.lane.b32.xlu0 %v655, 64
  %v659 = vpop.permute.xlu0 %658
  %v661 = vmul.f32 %v654, %v659
  %663 = vrot.lane.b32.xlu0 %v661, 32
  %v664 = vpop.permute.xlu0 %663
  %v666 = vadd.f32 %v656, %v664
  %v667 = vtanh.pop %v666
  %669 = vrot.lane.b32.xlu0 %v667, 64
  %v670 = vpop.permute.xlu0 %669
  %v672 = vmul.f32 %v654, %v670
  %674 = vrot.lane.b32.xlu0 %v672, 32
  %v675 = vpop.permute.xlu0 %674
  %677 = vst.msk [vmem:[#allocation3 + $0x8] sm:$0x3] %vm264, %v675
  %v678 = vld [vmem:[#allocation2 + $0xa] sm:$0x3]
  %v679 = vsel %vm161, %v675, 0
  %681 = vmatprep.subr.mxu0 0.0
  %682 = vmatpush1.msra.mxu0 %v156
  %683 = vmatprep.subr.mxu0 0.0
  %684 = vmatpush1.msra.mxu0 %v157
  %685 = vmatprep.subr.mxu0 0.0
  %686 = vmatpush1.msra.mxu0 %v158
  %687 = vmatprep.subr.mxu0 0.0
  %688 = vmatpush1.msra.mxu0 %v159
  %689 = vmatprep.subr.mxu0 0.0
  %690 = vmatpush1.msra.mxu0 0.0
  %691 = vmatprep.subr.mxu0 0.0
  %692 = vmatpush1.msra.mxu0 0.0
  %693 = vmatprep.subr.mxu0 0.0
  %694 = vmatpush1.msra.mxu0 0.0
  %695 = vmatprep.subr.mxu0 0.0
  %696 = vmatpush1.msra.mxu0 0.0
  %697 = vmatprep.subr.mxu0 0.0
  %698 = vmatpush1.msra.mxu0 0.0
  %699 = vmatprep.subr.mxu0 0.0
  %700 = vmatpush1.msra.mxu0 0.0
  %701 = vmatprep.subr.mxu0 0.0
  %702 = vmatpush1.msra.mxu0 0.0
  %703 = vmatprep.subr.mxu0 0.0
  %704 = vmatpush1.msra.mxu0 0.0
  %705 = vmatprep.subr.mxu0 0.0
  %706 = vmatpush1.msra.mxu0 0.0
  %707 = vmatprep.subr.mxu0 0.0
  %708 = vmatpush1.msra.mxu0 0.0
  %709 = vmatprep.subr.mxu0 0.0
  %710 = vmatpush1.msra.mxu0 0.0
  %711 = vmatprep.subr.mxu0 0.0
  %712 = vmatpush1.msra.mxu0 0.0
  %713 = vmatprep.subr.mxu0 0.0
  %714 = vmatpush1.msra.mxu0 0.0
  %715 = vmatprep.subr.mxu0 0.0
  %716 = vmatpush1.msra.mxu0 0.0
  %717 = vmatprep.subr.mxu0 0.0
  %718 = vmatpush1.msra.mxu0 0.0
  %719 = vmatprep.subr.mxu0 0.0
  %720 = vmatpush1.msra.mxu0 0.0
  %721 = vmatprep.subr.mxu0 0.0
  %722 = vmatpush1.msra.mxu0 0.0
  %723 = vmatprep.subr.mxu0 0.0
  %724 = vmatpush1.msra.mxu0 0.0
  %725 = vmatprep.subr.mxu0 0.0
  %726 = vmatpush1.msra.mxu0 0.0
  %727 = vmatprep.subr.mxu0 0.0
  %728 = vmatpush1.msra.mxu0 0.0
  %729 = vmatprep.subr.mxu0 0.0
  %730 = vmatpush1.msra.mxu0 0.0
  %731 = vmatprep.subr.mxu0 0.0
  %732 = vmatpush1.msra.mxu0 0.0
  %733 = vmatprep.subr.mxu0 0.0
  %734 = vmatpush1.msra.mxu0 0.0
  %735 = vmatprep.subr.mxu0 0.0
  %736 = vmatpush1.msra.mxu0 0.0
  %737 = vmatprep.subr.mxu0 0.0
  %738 = vmatpush1.msra.mxu0 0.0
  %739 = vmatprep.subr.mxu0 0.0
  %740 = vmatpush1.msra.mxu0 0.0
  %741 = vmatprep.subr.mxu0 0.0
  %742 = vmatpush1.msra.mxu0 0.0
  %743 = vmatprep.subr.mxu0 0.0
  %744 = vmatpush1.msra.mxu0 0.0
  %745 = vmatprep.mubr.f32.mxu0 0.0
  %746 = vmatmul.mubr.f32.gmra.mrb[0].mxu0 %v679
  %v747 = vpop.f32.mrb[0].mxu0
  %v748 = vadd.f32 0.0, %v747
  %v749 = vpop.f32.mrb[0].mxu0
  %750 = vdwg.mxu0
  %v751 = vadd.f32 %v678, %v748
  %v752 = vxor.u32 %v751, 2147483648
  %v753 = vmul.f32 %v752, 1.442695
  %v754 = vpow.pop %v753
  %v755 = vadd.f32 %v754, 1.0
  %v756 = vrcp.pop %v755
  %v757 = vmul.f32 1.0, %v756
  %v758 = vtanh.pop %v751
  %v759 = vmul.f32 %v757, %v666
  %761 = vrot.lane.b32.xlu0 %v758, 64
  %v762 = vpop.permute.xlu0 %761
  %v764 = vmul.f32 %v757, %v762
  %766 = vrot.lane.b32.xlu0 %v764, 32
  %v767 = vpop.permute.xlu0 %766
  %v769 = vadd.f32 %v759, %v767
  %v770 = vtanh.pop %v769
  %772 = vrot.lane.b32.xlu0 %v770, 64
  %v773 = vpop.permute.xlu0 %772
  %v775 = vmul.f32 %v757, %v773
  %777 = vrot.lane.b32.xlu0 %v775, 32
  %v778 = vpop.permute.xlu0 %777
  %780 = vst.msk [vmem:[#allocation3 + $0xa] sm:$0x3] %vm264, %v778
  %v781 = vld [vmem:[#allocation2 + $0xc] sm:$0x3]
  %v782 = vsel %vm161, %v778, 0
  %784 = vmatprep.subr.mxu0 0.0
  %785 = vmatpush1.msra.mxu0 %v156
  %786 = vmatprep.subr.mxu0 0.0
  %787 = vmatpush1.msra.mxu0 %v157
  %788 = vmatprep.subr.mxu0 0.0
  %789 = vmatpush1.msra.mxu0 %v158
  %790 = vmatprep.subr.mxu0 0.0
  %791 = vmatpush1.msra.mxu0 %v159
  %792 = vmatprep.subr.mxu0 0.0
  %793 = vmatpush1.msra.mxu0 0.0
  %794 = vmatprep.subr.mxu0 0.0
  %795 = vmatpush1.msra.mxu0 0.0
  %796 = vmatprep.subr.mxu0 0.0
  %797 = vmatpush1.msra.mxu0 0.0
  %798 = vmatprep.subr.mxu0 0.0
  %799 = vmatpush1.msra.mxu0 0.0
  %800 = vmatprep.subr.mxu0 0.0
  %801 = vmatpush1.msra.mxu0 0.0
  %802 = vmatprep.subr.mxu0 0.0
  %803 = vmatpush1.msra.mxu0 0.0
  %804 = vmatprep.subr.mxu0 0.0
  %805 = vmatpush1.msra.mxu0 0.0
  %806 = vmatprep.subr.mxu0 0.0
  %807 = vmatpush1.msra.mxu0 0.0
  %808 = vmatprep.subr.mxu0 0.0
  %809 = vmatpush1.msra.mxu0 0.0
  %810 = vmatprep.subr.mxu0 0.0
  %811 = vmatpush1.msra.mxu0 0.0
  %812 = vmatprep.subr.mxu0 0.0
  %813 = vmatpush1.msra.mxu0 0.0
  %814 = vmatprep.subr.mxu0 0.0
  %815 = vmatpush1.msra.mxu0 0.0
  %816 = vmatprep.subr.mxu0 0.0
  %817 = vmatpush1.msra.mxu0 0.0
  %818 = vmatprep.subr.mxu0 0.0
  %819 = vmatpush1.msra.mxu0 0.0
  %820 = vmatprep.subr.mxu0 0.0
  %821 = vmatpush1.msra.mxu0 0.0
  %822 = vmatprep.subr.mxu0 0.0
  %823 = vmatpush1.msra.mxu0 0.0
  %824 = vmatprep.subr.mxu0 0.0
  %825 = vmatpush1.msra.mxu0 0.0
  %826 = vmatprep.subr.mxu0 0.0
  %827 = vmatpush1.msra.mxu0 0.0
  %828 = vmatprep.subr.mxu0 0.0
  %829 = vmatpush1.msra.mxu0 0.0
  %830 = vmatprep.subr.mxu0 0.0
  %831 = vmatpush1.msra.mxu0 0.0
  %832 = vmatprep.subr.mxu0 0.0
  %833 = vmatpush1.msra.mxu0 0.0
  %834 = vmatprep.subr.mxu0 0.0
  %835 = vmatpush1.msra.mxu0 0.0
  %836 = vmatprep.subr.mxu0 0.0
  %837 = vmatpush1.msra.mxu0 0.0
  %838 = vmatprep.subr.mxu0 0.0
  %839 = vmatpush1.msra.mxu0 0.0
  %840 = vmatprep.subr.mxu0 0.0
  %841 = vmatpush1.msra.mxu0 0.0
  %842 = vmatprep.subr.mxu0 0.0
  %843 = vmatpush1.msra.mxu0 0.0
  %844 = vmatprep.subr.mxu0 0.0
  %845 = vmatpush1.msra.mxu0 0.0
  %846 = vmatprep.subr.mxu0 0.0
  %847 = vmatpush1.msra.mxu0 0.0
  %848 = vmatprep.mubr.f32.mxu0 0.0
  %849 = vmatmul.mubr.f32.gmra.mrb[0].mxu0 %v782
  %v850 = vpop.f32.mrb[0].mxu0
  %v851 = vadd.f32 0.0, %v850
  %v852 = vpop.f32.mrb[0].mxu0
  %853 = vdwg.mxu0
  %v854 = vadd.f32 %v781, %v851
  %v855 = vxor.u32 %v854, 2147483648
  %v856 = vmul.f32 %v855, 1.442695
  %v857 = vpow.pop %v856
  %v858 = vadd.f32 %v857, 1.0
  %v859 = vrcp.pop %v858
  %v860 = vmul.f32 1.0, %v859
  %v861 = vtanh.pop %v854
  %v862 = vmul.f32 %v860, %v769
  %864 = vrot.lane.b32.xlu0 %v861, 64
  %v865 = vpop.permute.xlu0 %864
  %v867 = vmul.f32 %v860, %v865
  %869 = vrot.lane.b32.xlu0 %v867, 32
  %v870 = vpop.permute.xlu0 %869
  %v872 = vadd.f32 %v862, %v870
  %v873 = vtanh.pop %v872
  %875 = vrot.lane.b32.xlu0 %v873, 64
  %v876 = vpop.permute.xlu0 %875
  %v878 = vmul.f32 %v860, %v876
  %880 = vrot.lane.b32.xlu0 %v878, 32
  %v881 = vpop.permute.xlu0 %880
  %883 = vst.msk [vmem:[#allocation3 + $0xc] sm:$0x3] %vm264, %v881
  %v884 = vld [vmem:[#allocation2 + $0xe] sm:$0x3]
  %v885 = vsel %vm161, %v881, 0
  %887 = vmatprep.subr.mxu0 0.0
  %888 = vmatpush1.msra.mxu0 %v156
  %889 = vmatprep.subr.mxu0 0.0
  %890 = vmatpush1.msra.mxu0 %v157
  %891 = vmatprep.subr.mxu0 0.0
  %892 = vmatpush1.msra.mxu0 %v158
  %893 = vmatprep.subr.mxu0 0.0
  %894 = vmatpush1.msra.mxu0 %v159
  %895 = vmatprep.subr.mxu0 0.0
  %896 = vmatpush1.msra.mxu0 0.0
  %897 = vmatprep.subr.mxu0 0.0
  %898 = vmatpush1.msra.mxu0 0.0
  %899 = vmatprep.subr.mxu0 0.0
  %900 = vmatpush1.msra.mxu0 0.0
  %901 = vmatprep.subr.mxu0 0.0
  %902 = vmatpush1.msra.mxu0 0.0
  %903 = vmatprep.subr.mxu0 0.0
  %904 = vmatpush1.msra.mxu0 0.0
  %905 = vmatprep.subr.mxu0 0.0
  %906 = vmatpush1.msra.mxu0 0.0
  %907 = vmatprep.subr.mxu0 0.0
  %908 = vmatpush1.msra.mxu0 0.0
  %909 = vmatprep.subr.mxu0 0.0
  %910 = vmatpush1.msra.mxu0 0.0
  %911 = vmatprep.subr.mxu0 0.0
  %912 = vmatpush1.msra.mxu0 0.0
  %913 = vmatprep.subr.mxu0 0.0
  %914 = vmatpush1.msra.mxu0 0.0
  %915 = vmatprep.subr.mxu0 0.0
  %916 = vmatpush1.msra.mxu0 0.0
  %917 = vmatprep.subr.mxu0 0.0
  %918 = vmatpush1.msra.mxu0 0.0
  %919 = vmatprep.subr.mxu0 0.0
  %920 = vmatpush1.msra.mxu0 0.0
  %921 = vmatprep.subr.mxu0 0.0
  %922 = vmatpush1.msra.mxu0 0.0
  %923 = vmatprep.subr.mxu0 0.0
  %924 = vmatpush1.msra.mxu0 0.0
  %925 = vmatprep.subr.mxu0 0.0
  %926 = vmatpush1.msra.mxu0 0.0
  %927 = vmatprep.subr.mxu0 0.0
  %928 = vmatpush1.msra.mxu0 0.0
  %929 = vmatprep.subr.mxu0 0.0
  %930 = vmatpush1.msra.mxu0 0.0
  %931 = vmatprep.subr.mxu0 0.0
  %932 = vmatpush1.msra.mxu0 0.0
  %933 = vmatprep.subr.mxu0 0.0
  %934 = vmatpush1.msra.mxu0 0.0
  %935 = vmatprep.subr.mxu0 0.0
  %936 = vmatpush1.msra.mxu0 0.0
  %937 = vmatprep.subr.mxu0 0.0
  %938 = vmatpush1.msra.mxu0 0.0
  %939 = vmatprep.subr.mxu0 0.0
  %940 = vmatpush1.msra.mxu0 0.0
  %941 = vmatprep.subr.mxu0 0.0
  %942 = vmatpush1.msra.mxu0 0.0
  %943 = vmatprep.subr.mxu0 0.0
  %944 = vmatpush1.msra.mxu0 0.0
  %945 = vmatprep.subr.mxu0 0.0
  %946 = vmatpush1.msra.mxu0 0.0
  %947 = vmatprep.subr.mxu0 0.0
  %948 = vmatpush1.msra.mxu0 0.0
  %949 = vmatprep.subr.mxu0 0.0
  %950 = vmatpush1.msra.mxu0 0.0
  %951 = vmatprep.mubr.f32.mxu0 0.0
  %952 = vmatmul.mubr.f32.gmra.mrb[0].mxu0 %v885
  %v953 = vpop.f32.mrb[0].mxu0
  %v954 = vadd.f32 0.0, %v953
  %v955 = vpop.f32.mrb[0].mxu0
  %956 = vdwg.mxu0
  %v957 = vadd.f32 %v884, %v954
  %v958 = vxor.u32 %v957, 2147483648
  %v959 = vmul.f32 %v958, 1.442695
  %v960 = vpow.pop %v959
  %v961 = vadd.f32 %v960, 1.0
  %v962 = vrcp.pop %v961
  %v963 = vmul.f32 1.0, %v962
  %v964 = vtanh.pop %v957
  %v965 = vmul.f32 %v963, %v872
  %967 = vrot.lane.b32.xlu0 %v964, 64
  %v968 = vpop.permute.xlu0 %967
  %v970 = vmul.f32 %v963, %v968
  %972 = vrot.lane.b32.xlu0 %v970, 32
  %v973 = vpop.permute.xlu0 %972
  %v975 = vadd.f32 %v965, %v973
  %v976 = vtanh.pop %v975
  %978 = vrot.lane.b32.xlu0 %v976, 64
  %v979 = vpop.permute.xlu0 %978
  %v981 = vmul.f32 %v963, %v979
  %983 = vrot.lane.b32.xlu0 %v981, 32
  %v984 = vpop.permute.xlu0 %983
  %986 = vst.msk [vmem:[#allocation3 + $0xe] sm:$0x3] %vm264, %v984
  %v987 = vld [vmem:[#allocation2 + $0x10] sm:$0x3]
  %v988 = vsel %vm161, %v984, 0
  %990 = vmatprep.subr.mxu0 0.0
  %991 = vmatpush1.msra.mxu0 %v156
  %992 = vmatprep.subr.mxu0 0.0
  %993 = vmatpush1.msra.mxu0 %v157
  %994 = vmatprep.subr.mxu0 0.0
  %995 = vmatpush1.msra.mxu0 %v158
  %996 = vmatprep.subr.mxu0 0.0
  %997 = vmatpush1.msra.mxu0 %v159
  %998 = vmatprep.subr.mxu0 0.0
  %999 = vmatpush1.msra.mxu0 0.0
  %1000 = vmatprep.subr.mxu0 0.0
  %1001 = vmatpush1.msra.mxu0 0.0
  %1002 = vmatprep.subr.mxu0 0.0
  %1003 = vmatpush1.msra.mxu0 0.0
  %1004 = vmatprep.subr.mxu0 0.0
  %1005 = vmatpush1.msra.mxu0 0.0
  %1006 = vmatprep.subr.mxu0 0.0
  %1007 = vmatpush1.msra.mxu0 0.0
  %1008 = vmatprep.subr.mxu0 0.0
  %1009 = vmatpush1.msra.mxu0 0.0
  %1010 = vmatprep.subr.mxu0 0.0
  %1011 = vmatpush1.msra.mxu0 0.0
  %1012 = vmatprep.subr.mxu0 0.0
  %1013 = vmatpush1.msra.mxu0 0.0
  %1014 = vmatprep.subr.mxu0 0.0
  %1015 = vmatpush1.msra.mxu0 0.0
  %1016 = vmatprep.subr.mxu0 0.0
  %1017 = vmatpush1.msra.mxu0 0.0
  %1018 = vmatprep.subr.mxu0 0.0
  %1019 = vmatpush1.msra.mxu0 0.0
  %1020 = vmatprep.subr.mxu0 0.0
  %1021 = vmatpush1.msra.mxu0 0.0
  %1022 = vmatprep.subr.mxu0 0.0
  %1023 = vmatpush1.msra.mxu0 0.0
  %1024 = vmatprep.subr.mxu0 0.0
  %1025 = vmatpush1.msra.mxu0 0.0
  %1026 = vmatprep.subr.mxu0 0.0
  %1027 = vmatpush1.msra.mxu0 0.0
  %1028 = vmatprep.subr.mxu0 0.0
  %1029 = vmatpush1.msra.mxu0 0.0
  %1030 = vmatprep.subr.mxu0 0.0
  %1031 = vmatpush1.msra.mxu0 0.0
  %1032 = vmatprep.subr.mxu0 0.0
  %1033 = vmatpush1.msra.mxu0 0.0
  %1034 = vmatprep.subr.mxu0 0.0
  %1035 = vmatpush1.msra.mxu0 0.0
  %1036 = vmatprep.subr.mxu0 0.0
  %1037 = vmatpush1.msra.mxu0 0.0
  %1038 = vmatprep.subr.mxu0 0.0
  %1039 = vmatpush1.msra.mxu0 0.0
  %1040 = vmatprep.subr.mxu0 0.0
  %1041 = vmatpush1.msra.mxu0 0.0
  %1042 = vmatprep.subr.mxu0 0.0
  %1043 = vmatpush1.msra.mxu0 0.0
  %1044 = vmatprep.subr.mxu0 0.0
  %1045 = vmatpush1.msra.mxu0 0.0
  %1046 = vmatprep.subr.mxu0 0.0
  %1047 = vmatpush1.msra.mxu0 0.0
  %1048 = vmatprep.subr.mxu0 0.0
  %1049 = vmatpush1.msra.mxu0 0.0
  %1050 = vmatprep.subr.mxu0 0.0
  %1051 = vmatpush1.msra.mxu0 0.0
  %1052 = vmatprep.subr.mxu0 0.0
  %1053 = vmatpush1.msra.mxu0 0.0
  %1054 = vmatprep.mubr.f32.mxu0 0.0
  %1055 = vmatmul.mubr.f32.gmra.mrb[0].mxu0 %v988
  %v1056 = vpop.f32.mrb[0].mxu0
  %v1057 = vadd.f32 0.0, %v1056
  %v1058 = vpop.f32.mrb[0].mxu0
  %1059 = vdwg.mxu0
  %v1060 = vadd.f32 %v987, %v1057
  %v1061 = vxor.u32 %v1060, 2147483648
  %v1062 = vmul.f32 %v1061, 1.442695
  %v1063 = vpow.pop %v1062
  %v1064 = vadd.f32 %v1063, 1.0
  %v1065 = vrcp.pop %v1064
  %v1066 = vmul.f32 1.0, %v1065
  %v1067 = vtanh.pop %v1060
  %v1068 = vmul.f32 %v1066, %v975
  %1070 = vrot.lane.b32.xlu0 %v1067, 64
  %v1071 = vpop.permute.xlu0 %1070
  %v1073 = vmul.f32 %v1066, %v1071
  %1075 = vrot.lane.b32.xlu0 %v1073, 32
  %v1076 = vpop.permute.xlu0 %1075
  %v1078 = vadd.f32 %v1068, %v1076
  %v1079 = vtanh.pop %v1078
  %1081 = vrot.lane.b32.xlu0 %v1079, 64
  %v1082 = vpop.permute.xlu0 %1081
  %v1084 = vmul.f32 %v1066, %v1082
  %1086 = vrot.lane.b32.xlu0 %v1084, 32
  %v1087 = vpop.permute.xlu0 %1086
  %1089 = vst.msk [vmem:[#allocation3 + $0x10] sm:$0x3] %vm264, %v1087
  %v1090 = vld [vmem:[#allocation2 + $0x12] sm:$0x3]
  %v1091 = vsel %vm161, %v1087, 0
  %1093 = vmatprep.subr.mxu0 0.0
  %1094 = vmatpush1.msra.mxu0 %v156
  %1095 = vmatprep.subr.mxu0 0.0
  %1096 = vmatpush1.msra.mxu0 %v157
  %1097 = vmatprep.subr.mxu0 0.0
  %1098 = vmatpush1.msra.mxu0 %v158
  %1099 = vmatprep.subr.mxu0 0.0
  %1100 = vmatpush1.msra.mxu0 %v159
  %1101 = vmatprep.subr.mxu0 0.0
  %1102 = vmatpush1.msra.mxu0 0.0
  %1103 = vmatprep.subr.mxu0 0.0
  %1104 = vmatpush1.msra.mxu0 0.0
  %1105 = vmatprep.subr.mxu0 0.0
  %1106 = vmatpush1.msra.mxu0 0.0
  %1107 = vmatprep.subr.mxu0 0.0
  %1108 = vmatpush1.msra.mxu0 0.0
  %1109 = vmatprep.subr.mxu0 0.0
  %1110 = vmatpush1.msra.mxu0 0.0
  %1111 = vmatprep.subr.mxu0 0.0
  %1112 = vmatpush1.msra.mxu0 0.0
  %1113 = vmatprep.subr.mxu0 0.0
  %1114 = vmatpush1.msra.mxu0 0.0
  %1115 = vmatprep.subr.mxu0 0.0
  %1116 = vmatpush1.msra.mxu0 0.0
  %1117 = vmatprep.subr.mxu0 0.0
  %1118 = vmatpush1.msra.mxu0 0.0
  %1119 = vmatprep.subr.mxu0 0.0
  %1120 = vmatpush1.msra.mxu0 0.0
  %1121 = vmatprep.subr.mxu0 0.0
  %1122 = vmatpush1.msra.mxu0 0.0
  %1123 = vmatprep.subr.mxu0 0.0
  %1124 = vmatpush1.msra.mxu0 0.0
  %1125 = vmatprep.subr.mxu0 0.0
  %1126 = vmatpush1.msra.mxu0 0.0
  %1127 = vmatprep.subr.mxu0 0.0
  %1128 = vmatpush1.msra.mxu0 0.0
  %1129 = vmatprep.subr.mxu0 0.0
  %1130 = vmatpush1.msra.mxu0 0.0
  %1131 = vmatprep.subr.mxu0 0.0
  %1132 = vmatpush1.msra.mxu0 0.0
  %1133 = vmatprep.subr.mxu0 0.0
  %1134 = vmatpush1.msra.mxu0 0.0
  %1135 = vmatprep.subr.mxu0 0.0
  %1136 = vmatpush1.msra.mxu0 0.0
  %1137 = vmatprep.subr.mxu0 0.0
  %1138 = vmatpush1.msra.mxu0 0.0
  %1139 = vmatprep.subr.mxu0 0.0
  %1140 = vmatpush1.msra.mxu0 0.0
  %1141 = vmatprep.subr.mxu0 0.0
  %1142 = vmatpush1.msra.mxu0 0.0
  %1143 = vmatprep.subr.mxu0 0.0
  %1144 = vmatpush1.msra.mxu0 0.0
  %1145 = vmatprep.subr.mxu0 0.0
  %1146 = vmatpush1.msra.mxu0 0.0
  %1147 = vmatprep.subr.mxu0 0.0
  %1148 = vmatpush1.msra.mxu0 0.0
  %1149 = vmatprep.subr.mxu0 0.0
  %1150 = vmatpush1.msra.mxu0 0.0
  %1151 = vmatprep.subr.mxu0 0.0
  %1152 = vmatpush1.msra.mxu0 0.0
  %1153 = vmatprep.subr.mxu0 0.0
  %1154 = vmatpush1.msra.mxu0 0.0
  %1155 = vmatprep.subr.mxu0 0.0
  %1156 = vmatpush1.msra.mxu0 0.0
  %1157 = vmatprep.mubr.f32.mxu0 0.0
  %1158 = vmatmul.mubr.f32.gmra.mrb[0].mxu0 %v1091
  %v1159 = vpop.f32.mrb[0].mxu0
  %v1160 = vadd.f32 0.0, %v1159
  %v1161 = vpop.f32.mrb[0].mxu0
  %1162 = vdwg.mxu0
  %v1163 = vadd.f32 %v1090, %v1160
  %v1164 = vxor.u32 %v1163, 2147483648
  %v1165 = vmul.f32 %v1164, 1.442695
  %v1166 = vpow.pop %v1165
  %v1167 = vadd.f32 %v1166, 1.0
  %v1168 = vrcp.pop %v1167
  %v1169 = vmul.f32 1.0, %v1168
  %v1170 = vtanh.pop %v1163
  %v1171 = vmul.f32 %v1169, %v1078
  %1173 = vrot.lane.b32.xlu0 %v1170, 64
  %v1174 = vpop.permute.xlu0 %1173
  %v1176 = vmul.f32 %v1169, %v1174
  %1178 = vrot.lane.b32.xlu0 %v1176, 32
  %v1179 = vpop.permute.xlu0 %1178
  %v1181 = vadd.f32 %v1171, %v1179
  %v1182 = vtanh.pop %v1181
  %1184 = vrot.lane.b32.xlu0 %v1182, 64
  %v1185 = vpop.permute.xlu0 %1184
  %v1187 = vmul.f32 %v1169, %v1185
  %1189 = vrot.lane.b32.xlu0 %v1187, 32
  %v1190 = vpop.permute.xlu0 %1189
  %1192 = vst.msk [vmem:[#allocation3 + $0x12] sm:$0x3] %vm264, %v1190
  %v1193 = vld [vmem:[#allocation3] sm:$0xff]
  %v1194 = vld [vmem:[#allocation3 + $0x8] sm:$0xff]
  %v1195 = vld [vmem:[#allocation3 + $0x10] sm:$0xf]
  %v1196 = vld [vmem:[%s4] sm:$0xff]
  %v1197 = vld [vmem:[%s4 + $0x8] sm:$0xff]
  %v1198 = vld [vmem:[%s4 + $0x10] sm:$0xff]
  %v1199 = vld [vmem:[%s4 + $0x18] sm:$0xff]
  %v1200 = vld [vmem:[%s6] sm:$0x1]
  %v1202 = vlaneseq
  %v1203 = vshrl.u32 %v1202, 7
  %v1204 = vsub.s32 0, %v1203
  %v1205 = vrot.slane %v1200, %v1204
  %v1208 = vsel %vm161, %v1193, 0
  %v1211 = vsel %vm161, %v1194, 0
  %v1214 = vsel %vm161, %v1195, 0
  %1216 = vmatprep.subr.mxu0 0.0
  %1217 = vmatpush1.msra.mxu0 %v1196
  %1218 = vmatprep.subr.mxu0 0.0
  %1219 = vmatpush1.msra.mxu0 %v1197
  %1220 = vmatprep.subr.mxu0 0.0
  %1221 = vmatpush1.msra.mxu0 %v1198
  %1222 = vmatprep.subr.mxu0 0.0
  %1223 = vmatpush1.msra.mxu0 %v1199
  %1224 = vmatprep.subr.mxu0 0.0
  %1225 = vmatpush1.msra.mxu0 0.0
  %1226 = vmatprep.subr.mxu0 0.0
  %1227 = vmatpush1.msra.mxu0 0.0
  %1228 = vmatprep.subr.mxu0 0.0
  %1229 = vmatpush1.msra.mxu0 0.0
  %1230 = vmatprep.subr.mxu0 0.0
  %1231 = vmatpush1.msra.mxu0 0.0
  %1232 = vmatprep.subr.mxu0 0.0
  %1233 = vmatpush1.msra.mxu0 0.0
  %1234 = vmatprep.subr.mxu0 0.0
  %1235 = vmatpush1.msra.mxu0 0.0
  %1236 = vmatprep.subr.mxu0 0.0
  %1237 = vmatpush1.msra.mxu0 0.0
  %1238 = vmatprep.subr.mxu0 0.0
  %1239 = vmatpush1.msra.mxu0 0.0
  %1240 = vmatprep.subr.mxu0 0.0
  %1241 = vmatpush1.msra.mxu0 0.0
  %1242 = vmatprep.subr.mxu0 0.0
  %1243 = vmatpush1.msra.mxu0 0.0
  %1244 = vmatprep.subr.mxu0 0.0
  %1245 = vmatpush1.msra.mxu0 0.0
  %1246 = vmatprep.subr.mxu0 0.0
  %1247 = vmatpush1.msra.mxu0 0.0
  %1248 = vmatprep.subr.mxu0 0.0
  %1249 = vmatpush1.msra.mxu0 0.0
  %1250 = vmatprep.subr.mxu0 0.0
  %1251 = vmatpush1.msra.mxu0 0.0
  %1252 = vmatprep.subr.mxu0 0.0
  %1253 = vmatpush1.msra.mxu0 0.0
  %1254 = vmatprep.subr.mxu0 0.0
  %1255 = vmatpush1.msra.mxu0 0.0
  %1256 = vmatprep.subr.mxu0 0.0
  %1257 = vmatpush1.msra.mxu0 0.0
  %1258 = vmatprep.subr.mxu0 0.0
  %1259 = vmatpush1.msra.mxu0 0.0
  %1260 = vmatprep.subr.mxu0 0.0
  %1261 = vmatpush1.msra.mxu0 0.0
  %1262 = vmatprep.subr.mxu0 0.0
  %1263 = vmatpush1.msra.mxu0 0.0
  %1264 = vmatprep.subr.mxu0 0.0
  %1265 = vmatpush1.msra.mxu0 0.0
  %1266 = vmatprep.subr.mxu0 0.0
  %1267 = vmatpush1.msra.mxu0 0.0
  %1268 = vmatprep.subr.mxu0 0.0
  %1269 = vmatpush1.msra.mxu0 0.0
  %1270 = vmatprep.subr.mxu0 0.0
  %1271 = vmatpush1.msra.mxu0 0.0
  %1272 = vmatprep.subr.mxu0 0.0
  %1273 = vmatpush1.msra.mxu0 0.0
  %1274 = vmatprep.subr.mxu0 0.0
  %1275 = vmatpush1.msra.mxu0 0.0
  %1276 = vmatprep.subr.mxu0 0.0
  %1277 = vmatpush1.msra.mxu0 0.0
  %1278 = vmatprep.subr.mxu0 0.0
  %1279 = vmatpush1.msra.mxu0 0.0
  %1280 = vmatprep.mubr.f32.mxu0 0.0
  %1281 = vmatmul.mubr.f32.gmra.mrb[0].mxu0 %v1208
  %v1282 = vpop.f32.mrb[0].mxu0
  %v1283 = vadd.f32 %v1205, %v1282
  %v1284 = vpop.f32.mrb[0].mxu0
  %1285 = vmatprep.mubr.f32.mxu0 0.0
  %1286 = vmatmul.mubr.f32.gmra.mrb[0].mxu0 %v1211
  %v1287 = vpop.f32.mrb[0].mxu0
  %v1288 = vadd.f32 %v1205, %v1287
  %v1289 = vpop.f32.mrb[0].mxu0
  %1290 = vmatprep.mubr.f32.mxu0 0.0
  %1291 = vmatmul.mubr.f32.gmra.mrb[0].mxu0 %v1214
  %v1292 = vpop.f32.mrb[0].mxu0
  %v1293 = vadd.f32 %v1205, %v1292
  %v1294 = vpop.f32.mrb[0].mxu0
  %1295 = vdwg.mxu0
  %1296 = vst [vmem:[#allocation2] sm:$0xff] %v1283
  %1297 = vst [vmem:[#allocation2 + $0x8] sm:$0xff] %v1288
  %1298 = vst [vmem:[#allocation2 + $0x10] sm:$0xf] %v1293
  %v1299 = vld [vmem:[%s5] sm:$0xff]
  %v1300 = vld [vmem:[%s5 + $0x8] sm:$0xff]
  %v1301 = vld [vmem:[%s5 + $0x10] sm:$0xff]
  %v1302 = vld [vmem:[%s5 + $0x18] sm:$0xff]
  %v1303 = vld [vmem:[#allocation2] sm:$0xf]
  %1304 = vmatprep.subr.mxu0 0.0
  %1305 = vmatpush1.msra.mxu0 %v1299
  %1306 = vmatprep.subr.mxu0 0.0
  %1307 = vmatpush1.msra.mxu0 %v1300
  %1308 = vmatprep.subr.mxu0 0.0
  %1309 = vmatpush1.msra.mxu0 %v1301
  %1310 = vmatprep.subr.mxu0 0.0
  %1311 = vmatpush1.msra.mxu0 %v1302
  %1312 = vmatprep.subr.mxu0 0.0
  %1313 = vmatpush1.msra.mxu0 0.0
  %1314 = vmatprep.subr.mxu0 0.0
  %1315 = vmatpush1.msra.mxu0 0.0
  %1316 = vmatprep.subr.mxu0 0.0
  %1317 = vmatpush1.msra.mxu0 0.0
  %1318 = vmatprep.subr.mxu0 0.0
  %1319 = vmatpush1.msra.mxu0 0.0
  %1320 = vmatprep.subr.mxu0 0.0
  %1321 = vmatpush1.msra.mxu0 0.0
  %1322 = vmatprep.subr.mxu0 0.0
  %1323 = vmatpush1.msra.mxu0 0.0
  %1324 = vmatprep.subr.mxu0 0.0
  %1325 = vmatpush1.msra.mxu0 0.0
  %1326 = vmatprep.subr.mxu0 0.0
  %1327 = vmatpush1.msra.mxu0 0.0
  %1328 = vmatprep.subr.mxu0 0.0
  %1329 = vmatpush1.msra.mxu0 0.0
  %1330 = vmatprep.subr.mxu0 0.0
  %1331 = vmatpush1.msra.mxu0 0.0
  %1332 = vmatprep.subr.mxu0 0.0
  %1333 = vmatpush1.msra.mxu0 0.0
  %1334 = vmatprep.subr.mxu0 0.0
  %1335 = vmatpush1.msra.mxu0 0.0
  %1336 = vmatprep.subr.mxu0 0.0
  %1337 = vmatpush1.msra.mxu0 0.0
  %1338 = vmatprep.subr.mxu0 0.0
  %1339 = vmatpush1.msra.mxu0 0.0
  %1340 = vmatprep.subr.mxu0 0.0
  %1341 = vmatpush1.msra.mxu0 0.0
  %1342 = vmatprep.subr.mxu0 0.0
  %1343 = vmatpush1.msra.mxu0 0.0
  %1344 = vmatprep.subr.mxu0 0.0
  %1345 = vmatpush1.msra.mxu0 0.0
  %1346 = vmatprep.subr.mxu0 0.0
  %1347 = vmatpush1.msra.mxu0 0.0
  %1348 = vmatprep.subr.mxu0 0.0
  %1349 = vmatpush1.msra.mxu0 0.0
  %1350 = vmatprep.subr.mxu0 0.0
  %1351 = vmatpush1.msra.mxu0 0.0
  %1352 = vmatprep.subr.mxu0 0.0
  %1353 = vmatpush1.msra.mxu0 0.0
  %1354 = vmatprep.subr.mxu0 0.0
  %1355 = vmatpush1.msra.mxu0 0.0
  %1356 = vmatprep.subr.mxu0 0.0
  %1357 = vmatpush1.msra.mxu0 0.0
  %1358 = vmatprep.subr.mxu0 0.0
  %1359 = vmatpush1.msra.mxu0 0.0
  %1360 = vmatprep.subr.mxu0 0.0
  %1361 = vmatpush1.msra.mxu0 0.0
  %1362 = vmatprep.subr.mxu0 0.0
  %1363 = vmatpush1.msra.mxu0 0.0
  %1364 = vmatprep.subr.mxu0 0.0
  %1365 = vmatpush1.msra.mxu0 0.0
  %1366 = vmatprep.subr.mxu0 0.0
  %1367 = vmatpush1.msra.mxu0 0.0
  %1368 = vmatprep.mubr.f32.mxu0 0.0
  %1369 = vmatmul.mubr.f32.gmra.mrb[0].mxu0 %v163
  %v1370 = vpop.f32.mrb[0].mxu0
  %v1371 = vadd.f32 0.0, %v1370
  %v1372 = vpop.f32.mrb[0].mxu0
  %1373 = vdwg.mxu0
  %v1374 = vadd.f32 %v1303, %v1371
  %v1375 = vxor.u32 %v1374, 2147483648
  %v1376 = vmul.f32 %v1375, 1.442695
  %v1377 = vpow.pop %v1376
  %v1378 = vadd.f32 %v1377, 1.0
  %v1379 = vrcp.pop %v1378
  %v1380 = vmul.f32 1.0, %v1379
  %v1381 = vtanh.pop %v1374
  %v1382 = vmul.f32 %v1380, 0.0
  %1384 = vrot.lane.b32.xlu0 %v1381, 64
  %v1385 = vpop.permute.xlu0 %1384
  %v1387 = vmul.f32 %v1380, %v1385
  %1389 = vrot.lane.b32.xlu0 %v1387, 32
  %v1390 = vpop.permute.xlu0 %1389
  %v1392 = vadd.f32 %v1382, %v1390
  %v1393 = vtanh.pop %v1392
  %1395 = vrot.lane.b32.xlu0 %v1393, 64
  %v1396 = vpop.permute.xlu0 %1395
  %v1398 = vmul.f32 %v1380, %v1396
  %1400 = vrot.lane.b32.xlu0 %v1398, 32
  %v1401 = vpop.permute.xlu0 %1400
  %vm1403 = vcmask 257024
  %1404 = vst.msk [vmem:[#allocation4] sm:$0xf] %vm1403, %v1401
  %v1405 = vld [vmem:[#allocation2 + $0x4] sm:$0xf]
  %v1406 = vsel %vm161, %v1401, 0
  %1408 = vmatprep.subr.mxu0 0.0
  %1409 = vmatpush1.msra.mxu0 %v1299
  %1410 = vmatprep.subr.mxu0 0.0
  %1411 = vmatpush1.msra.mxu0 %v1300
  %1412 = vmatprep.subr.mxu0 0.0
  %1413 = vmatpush1.msra.mxu0 %v1301
  %1414 = vmatprep.subr.mxu0 0.0
  %1415 = vmatpush1.msra.mxu0 %v1302
  %1416 = vmatprep.subr.mxu0 0.0
  %1417 = vmatpush1.msra.mxu0 0.0
  %1418 = vmatprep.subr.mxu0 0.0
  %1419 = vmatpush1.msra.mxu0 0.0
  %1420 = vmatprep.subr.mxu0 0.0
  %1421 = vmatpush1.msra.mxu0 0.0
  %1422 = vmatprep.subr.mxu0 0.0
  %1423 = vmatpush1.msra.mxu0 0.0
  %1424 = vmatprep.subr.mxu0 0.0
  %1425 = vmatpush1.msra.mxu0 0.0
  %1426 = vmatprep.subr.mxu0 0.0
  %1427 = vmatpush1.msra.mxu0 0.0
  %1428 = vmatprep.subr.mxu0 0.0
  %1429 = vmatpush1.msra.mxu0 0.0
  %1430 = vmatprep.subr.mxu0 0.0
  %1431 = vmatpush1.msra.mxu0 0.0
  %1432 = vmatprep.subr.mxu0 0.0
  %1433 = vmatpush1.msra.mxu0 0.0
  %1434 = vmatprep.subr.mxu0 0.0
  %1435 = vmatpush1.msra.mxu0 0.0
  %1436 = vmatprep.subr.mxu0 0.0
  %1437 = vmatpush1.msra.mxu0 0.0
  %1438 = vmatprep.subr.mxu0 0.0
  %1439 = vmatpush1.msra.mxu0 0.0
  %1440 = vmatprep.subr.mxu0 0.0
  %1441 = vmatpush1.msra.mxu0 0.0
  %1442 = vmatprep.subr.mxu0 0.0
  %1443 = vmatpush1.msra.mxu0 0.0
  %1444 = vmatprep.subr.mxu0 0.0
  %1445 = vmatpush1.msra.mxu0 0.0
  %1446 = vmatprep.subr.mxu0 0.0
  %1447 = vmatpush1.msra.mxu0 0.0
  %1448 = vmatprep.subr.mxu0 0.0
  %1449 = vmatpush1.msra.mxu0 0.0
  %1450 = vmatprep.subr.mxu0 0.0
  %1451 = vmatpush1.msra.mxu0 0.0
  %1452 = vmatprep.subr.mxu0 0.0
  %1453 = vmatpush1.msra.mxu0 0.0
  %1454 = vmatprep.subr.mxu0 0.0
  %1455 = vmatpush1.msra.mxu0 0.0
  %1456 = vmatprep.subr.mxu0 0.0
  %1457 = vmatpush1.msra.mxu0 0.0
  %1458 = vmatprep.subr.mxu0 0.0
  %1459 = vmatpush1.msra.mxu0 0.0
  %1460 = vmatprep.subr.mxu0 0.0
  %1461 = vmatpush1.msra.mxu0 0.0
  %1462 = vmatprep.subr.mxu0 0.0
  %1463 = vmatpush1.msra.mxu0 0.0
  %1464 = vmatprep.subr.mxu0 0.0
  %1465 = vmatpush1.msra.mxu0 0.0
  %1466 = vmatprep.subr.mxu0 0.0
  %1467 = vmatpush1.msra.mxu0 0.0
  %1468 = vmatprep.subr.mxu0 0.0
  %1469 = vmatpush1.msra.mxu0 0.0
  %1470 = vmatprep.subr.mxu0 0.0
  %1471 = vmatpush1.msra.mxu0 0.0
  %1472 = vmatprep.mubr.f32.mxu0 0.0
  %1473 = vmatmul.mubr.f32.gmra.mrb[0].mxu0 %v1406
  %v1474 = vpop.f32.mrb[0].mxu0
  %v1475 = vadd.f32 0.0, %v1474
  %v1476 = vpop.f32.mrb[0].mxu0
  %1477 = vdwg.mxu0
  %v1478 = vadd.f32 %v1405, %v1475
  %v1479 = vxor.u32 %v1478, 2147483648
  %v1480 = vmul.f32 %v1479, 1.442695
  %v1481 = vpow.pop %v1480
  %v1482 = vadd.f32 %v1481, 1.0
  %v1483 = vrcp.pop %v1482
  %v1484 = vmul.f32 1.0, %v1483
  %v1485 = vtanh.pop %v1478
  %v1486 = vmul.f32 %v1484, %v1392
  %1488 = vrot.lane.b32.xlu0 %v1485, 64
  %v1489 = vpop.permute.xlu0 %1488
  %v1491 = vmul.f32 %v1484, %v1489
  %1493 = vrot.lane.b32.xlu0 %v1491, 32
  %v1494 = vpop.permute.xlu0 %1493
  %v1496 = vadd.f32 %v1486, %v1494
  %v1497 = vtanh.pop %v1496
  %1499 = vrot.lane.b32.xlu0 %v1497, 64
  %v1500 = vpop.permute.xlu0 %1499
  %v1502 = vmul.f32 %v1484, %v1500
  %1504 = vrot.lane.b32.xlu0 %v1502, 32
  %v1505 = vpop.permute.xlu0 %1504
  %1507 = vst.msk [vmem:[#allocation4 + $0x4] sm:$0xf] %vm1403, %v1505
  %v1508 = vld [vmem:[#allocation2 + $0x8] sm:$0xf]
  %v1509 = vsel %vm161, %v1505, 0
  %1511 = vmatprep.subr.mxu0 0.0
  %1512 = vmatpush1.msra.mxu0 %v1299
  %1513 = vmatprep.subr.mxu0 0.0
  %1514 = vmatpush1.msra.mxu0 %v1300
  %1515 = vmatprep.subr.mxu0 0.0
  %1516 = vmatpush1.msra.mxu0 %v1301
  %1517 = vmatprep.subr.mxu0 0.0
  %1518 = vmatpush1.msra.mxu0 %v1302
  %1519 = vmatprep.subr.mxu0 0.0
  %1520 = vmatpush1.msra.mxu0 0.0
  %1521 = vmatprep.subr.mxu0 0.0
  %1522 = vmatpush1.msra.mxu0 0.0
  %1523 = vmatprep.subr.mxu0 0.0
  %1524 = vmatpush1.msra.mxu0 0.0
  %1525 = vmatprep.subr.mxu0 0.0
  %1526 = vmatpush1.msra.mxu0 0.0
  %1527 = vmatprep.subr.mxu0 0.0
  %1528 = vmatpush1.msra.mxu0 0.0
  %1529 = vmatprep.subr.mxu0 0.0
  %1530 = vmatpush1.msra.mxu0 0.0
  %1531 = vmatprep.subr.mxu0 0.0
  %1532 = vmatpush1.msra.mxu0 0.0
  %1533 = vmatprep.subr.mxu0 0.0
  %1534 = vmatpush1.msra.mxu0 0.0
  %1535 = vmatprep.subr.mxu0 0.0
  %1536 = vmatpush1.msra.mxu0 0.0
  %1537 = vmatprep.subr.mxu0 0.0
  %1538 = vmatpush1.msra.mxu0 0.0
  %1539 = vmatprep.subr.mxu0 0.0
  %1540 = vmatpush1.msra.mxu0 0.0
  %1541 = vmatprep.subr.mxu0 0.0
  %1542 = vmatpush1.msra.mxu0 0.0
  %1543 = vmatprep.subr.mxu0 0.0
  %1544 = vmatpush1.msra.mxu0 0.0
  %1545 = vmatprep.subr.mxu0 0.0
  %1546 = vmatpush1.msra.mxu0 0.0
  %1547 = vmatprep.subr.mxu0 0.0
  %1548 = vmatpush1.msra.mxu0 0.0
  %1549 = vmatprep.subr.mxu0 0.0
  %1550 = vmatpush1.msra.mxu0 0.0
  %1551 = vmatprep.subr.mxu0 0.0
  %1552 = vmatpush1.msra.mxu0 0.0
  %1553 = vmatprep.subr.mxu0 0.0
  %1554 = vmatpush1.msra.mxu0 0.0
  %1555 = vmatprep.subr.mxu0 0.0
  %1556 = vmatpush1.msra.mxu0 0.0
  %1557 = vmatprep.subr.mxu0 0.0
  %1558 = vmatpush1.msra.mxu0 0.0
  %1559 = vmatprep.subr.mxu0 0.0
  %1560 = vmatpush1.msra.mxu0 0.0
  %1561 = vmatprep.subr.mxu0 0.0
  %1562 = vmatpush1.msra.mxu0 0.0
  %1563 = vmatprep.subr.mxu0 0.0
  %1564 = vmatpush1.msra.mxu0 0.0
  %1565 = vmatprep.subr.mxu0 0.0
  %1566 = vmatpush1.msra.mxu0 0.0
  %1567 = vmatprep.subr.mxu0 0.0
  %1568 = vmatpush1.msra.mxu0 0.0
  %1569 = vmatprep.subr.mxu0 0.0
  %1570 = vmatpush1.msra.mxu0 0.0
  %1571 = vmatprep.subr.mxu0 0.0
  %1572 = vmatpush1.msra.mxu0 0.0
  %1573 = vmatprep.subr.mxu0 0.0
  %1574 = vmatpush1.msra.mxu0 0.0
  %1575 = vmatprep.mubr.f32.mxu0 0.0
  %1576 = vmatmul.mubr.f32.gmra.mrb[0].mxu0 %v1509
  %v1577 = vpop.f32.mrb[0].mxu0
  %v1578 = vadd.f32 0.0, %v1577
  %v1579 = vpop.f32.mrb[0].mxu0
  %1580 = vdwg.mxu0
  %v1581 = vadd.f32 %v1508, %v1578
  %v1582 = vxor.u32 %v1581, 2147483648
  %v1583 = vmul.f32 %v1582, 1.442695
  %v1584 = vpow.pop %v1583
  %v1585 = vadd.f32 %v1584, 1.0
  %v1586 = vrcp.pop %v1585
  %v1587 = vmul.f32 1.0, %v1586
  %v1588 = vtanh.pop %v1581
  %v1589 = vmul.f32 %v1587, %v1496
  %1591 = vrot.lane.b32.xlu0 %v1588, 64
  %v1592 = vpop.permute.xlu0 %1591
  %v1594 = vmul.f32 %v1587, %v1592
  %1596 = vrot.lane.b32.xlu0 %v1594, 32
  %v1597 = vpop.permute.xlu0 %1596
  %v1599 = vadd.f32 %v1589, %v1597
  %v1600 = vtanh.pop %v1599
  %1602 = vrot.lane.b32.xlu0 %v1600, 64
  %v1603 = vpop.permute.xlu0 %1602
  %v1605 = vmul.f32 %v1587, %v1603
  %1607 = vrot.lane.b32.xlu0 %v1605, 32
  %v1608 = vpop.permute.xlu0 %1607
  %1610 = vst.msk [vmem:[#allocation4 + $0x8] sm:$0xf] %vm1403, %v1608
  %v1611 = vld [vmem:[#allocation2 + $0xc] sm:$0xf]
  %v1612 = vsel %vm161, %v1608, 0
  %1614 = vmatprep.subr.mxu0 0.0
  %1615 = vmatpush1.msra.mxu0 %v1299
  %1616 = vmatprep.subr.mxu0 0.0
  %1617 = vmatpush1.msra.mxu0 %v1300
  %1618 = vmatprep.subr.mxu0 0.0
  %1619 = vmatpush1.msra.mxu0 %v1301
  %1620 = vmatprep.subr.mxu0 0.0
  %1621 = vmatpush1.msra.mxu0 %v1302
  %1622 = vmatprep.subr.mxu0 0.0
  %1623 = vmatpush1.msra.mxu0 0.0
  %1624 = vmatprep.subr.mxu0 0.0
  %1625 = vmatpush1.msra.mxu0 0.0
  %1626 = vmatprep.subr.mxu0 0.0
  %1627 = vmatpush1.msra.mxu0 0.0
  %1628 = vmatprep.subr.mxu0 0.0
  %1629 = vmatpush1.msra.mxu0 0.0
  %1630 = vmatprep.subr.mxu0 0.0
  %1631 = vmatpush1.msra.mxu0 0.0
  %1632 = vmatprep.subr.mxu0 0.0
  %1633 = vmatpush1.msra.mxu0 0.0
  %1634 = vmatprep.subr.mxu0 0.0
  %1635 = vmatpush1.msra.mxu0 0.0
  %1636 = vmatprep.subr.mxu0 0.0
  %1637 = vmatpush1.msra.mxu0 0.0
  %1638 = vmatprep.subr.mxu0 0.0
  %1639 = vmatpush1.msra.mxu0 0.0
  %1640 = vmatprep.subr.mxu0 0.0
  %1641 = vmatpush1.msra.mxu0 0.0
  %1642 = vmatprep.subr.mxu0 0.0
  %1643 = vmatpush1.msra.mxu0 0.0
  %1644 = vmatprep.subr.mxu0 0.0
  %1645 = vmatpush1.msra.mxu0 0.0
  %1646 = vmatprep.subr.mxu0 0.0
  %1647 = vmatpush1.msra.mxu0 0.0
  %1648 = vmatprep.subr.mxu0 0.0
  %1649 = vmatpush1.msra.mxu0 0.0
  %1650 = vmatprep.subr.mxu0 0.0
  %1651 = vmatpush1.msra.mxu0 0.0
  %1652 = vmatprep.subr.mxu0 0.0
  %1653 = vmatpush1.msra.mxu0 0.0
  %1654 = vmatprep.subr.mxu0 0.0
  %1655 = vmatpush1.msra.mxu0 0.0
  %1656 = vmatprep.subr.mxu0 0.0
  %1657 = vmatpush1.msra.mxu0 0.0
  %1658 = vmatprep.subr.mxu0 0.0
  %1659 = vmatpush1.msra.mxu0 0.0
  %1660 = vmatprep.subr.mxu0 0.0
  %1661 = vmatpush1.msra.mxu0 0.0
  %1662 = vmatprep.subr.mxu0 0.0
  %1663 = vmatpush1.msra.mxu0 0.0
  %1664 = vmatprep.subr.mxu0 0.0
  %1665 = vmatpush1.msra.mxu0 0.0
  %1666 = vmatprep.subr.mxu0 0.0
  %1667 = vmatpush1.msra.mxu0 0.0
  %1668 = vmatprep.subr.mxu0 0.0
  %1669 = vmatpush1.msra.mxu0 0.0
  %1670 = vmatprep.subr.mxu0 0.0
  %1671 = vmatpush1.msra.mxu0 0.0
  %1672 = vmatprep.subr.mxu0 0.0
  %1673 = vmatpush1.msra.mxu0 0.0
  %1674 = vmatprep.subr.mxu0 0.0
  %1675 = vmatpush1.msra.mxu0 0.0
  %1676 = vmatprep.subr.mxu0 0.0
  %1677 = vmatpush1.msra.mxu0 0.0
  %1678 = vmatprep.mubr.f32.mxu0 0.0
  %1679 = vmatmul.mubr.f32.gmra.mrb[0].mxu0 %v1612
  %v1680 = vpop.f32.mrb[0].mxu0
  %v1681 = vadd.f32 0.0, %v1680
  %v1682 = vpop.f32.mrb[0].mxu0
  %1683 = vdwg.mxu0
  %v1684 = vadd.f32 %v1611, %v1681
  %v1685 = vxor.u32 %v1684, 2147483648
  %v1686 = vmul.f32 %v1685, 1.442695
  %v1687 = vpow.pop %v1686
  %v1688 = vadd.f32 %v1687, 1.0
  %v1689 = vrcp.pop %v1688
  %v1690 = vmul.f32 1.0, %v1689
  %v1691 = vtanh.pop %v1684
  %v1692 = vmul.f32 %v1690, %v1599
  %1694 = vrot.lane.b32.xlu0 %v1691, 64
  %v1695 = vpop.permute.xlu0 %1694
  %v1697 = vmul.f32 %v1690, %v1695
  %1699 = vrot.lane.b32.xlu0 %v1697, 32
  %v1700 = vpop.permute.xlu0 %1699
  %v1702 = vadd.f32 %v1692, %v1700
  %v1703 = vtanh.pop %v1702
  %1705 = vrot.lane.b32.xlu0 %v1703, 64
  %v1706 = vpop.permute.xlu0 %1705
  %v1708 = vmul.f32 %v1690, %v1706
  %1710 = vrot.lane.b32.xlu0 %v1708, 32
  %v1711 = vpop.permute.xlu0 %1710
  %1713 = vst.msk [vmem:[#allocation4 + $0xc] sm:$0xf] %vm1403, %v1711
  %v1714 = vld [vmem:[#allocation2 + $0x10] sm:$0xf]
  %v1715 = vsel %vm161, %v1711, 0
  %1717 = vmatprep.subr.mxu0 0.0
  %1718 = vmatpush1.msra.mxu0 %v1299
  %1719 = vmatprep.subr.mxu0 0.0
  %1720 = vmatpush1.msra.mxu0 %v1300
  %1721 = vmatprep.subr.mxu0 0.0
  %1722 = vmatpush1.msra.mxu0 %v1301
  %1723 = vmatprep.subr.mxu0 0.0
  %1724 = vmatpush1.msra.mxu0 %v1302
  %1725 = vmatprep.subr.mxu0 0.0
  %1726 = vmatpush1.msra.mxu0 0.0
  %1727 = vmatprep.subr.mxu0 0.0
  %1728 = vmatpush1.msra.mxu0 0.0
  %1729 = vmatprep.subr.mxu0 0.0
  %1730 = vmatpush1.msra.mxu0 0.0
  %1731 = vmatprep.subr.mxu0 0.0
  %1732 = vmatpush1.msra.mxu0 0.0
  %1733 = vmatprep.subr.mxu0 0.0
  %1734 = vmatpush1.msra.mxu0 0.0
  %1735 = vmatprep.subr.mxu0 0.0
  %1736 = vmatpush1.msra.mxu0 0.0
  %1737 = vmatprep.subr.mxu0 0.0
  %1738 = vmatpush1.msra.mxu0 0.0
  %1739 = vmatprep.subr.mxu0 0.0
  %1740 = vmatpush1.msra.mxu0 0.0
  %1741 = vmatprep.subr.mxu0 0.0
  %1742 = vmatpush1.msra.mxu0 0.0
  %1743 = vmatprep.subr.mxu0 0.0
  %1744 = vmatpush1.msra.mxu0 0.0
  %1745 = vmatprep.subr.mxu0 0.0
  %1746 = vmatpush1.msra.mxu0 0.0
  %1747 = vmatprep.subr.mxu0 0.0
  %1748 = vmatpush1.msra.mxu0 0.0
  %1749 = vmatprep.subr.mxu0 0.0
  %1750 = vmatpush1.msra.mxu0 0.0
  %1751 = vmatprep.subr.mxu0 0.0
  %1752 = vmatpush1.msra.mxu0 0.0
  %1753 = vmatprep.subr.mxu0 0.0
  %1754 = vmatpush1.msra.mxu0 0.0
  %1755 = vmatprep.subr.mxu0 0.0
  %1756 = vmatpush1.msra.mxu0 0.0
  %1757 = vmatprep.subr.mxu0 0.0
  %1758 = vmatpush1.msra.mxu0 0.0
  %1759 = vmatprep.subr.mxu0 0.0
  %1760 = vmatpush1.msra.mxu0 0.0
  %1761 = vmatprep.subr.mxu0 0.0
  %1762 = vmatpush1.msra.mxu0 0.0
  %1763 = vmatprep.subr.mxu0 0.0
  %1764 = vmatpush1.msra.mxu0 0.0
  %1765 = vmatprep.subr.mxu0 0.0
  %1766 = vmatpush1.msra.mxu0 0.0
  %1767 = vmatprep.subr.mxu0 0.0
  %1768 = vmatpush1.msra.mxu0 0.0
  %1769 = vmatprep.subr.mxu0 0.0
  %1770 = vmatpush1.msra.mxu0 0.0
  %1771 = vmatprep.subr.mxu0 0.0
  %1772 = vmatpush1.msra.mxu0 0.0
  %1773 = vmatprep.subr.mxu0 0.0
  %1774 = vmatpush1.msra.mxu0 0.0
  %1775 = vmatprep.subr.mxu0 0.0
  %1776 = vmatpush1.msra.mxu0 0.0
  %1777 = vmatprep.subr.mxu0 0.0
  %1778 = vmatpush1.msra.mxu0 0.0
  %1779 = vmatprep.subr.mxu0 0.0
  %1780 = vmatpush1.msra.mxu0 0.0
  %1781 = vmatprep.mubr.f32.mxu0 0.0
  %1782 = vmatmul.mubr.f32.gmra.mrb[0].mxu0 %v1715
  %v1783 = vpop.f32.mrb[0].mxu0
  %v1784 = vadd.f32 0.0, %v1783
  %v1785 = vpop.f32.mrb[0].mxu0
  %1786 = vdwg.mxu0
  %v1787 = vadd.f32 %v1714, %v1784
  %v1788 = vxor.u32 %v1787, 2147483648
  %v1789 = vmul.f32 %v1788, 1.442695
  %v1790 = vpow.pop %v1789
  %v1791 = vadd.f32 %v1790, 1.0
  %v1792 = vrcp.pop %v1791
  %v1793 = vmul.f32 1.0, %v1792
  %v1794 = vtanh.pop %v1787
  %v1795 = vmul.f32 %v1793, %v1702
  %1797 = vrot.lane.b32.xlu0 %v1794, 64
  %v1798 = vpop.permute.xlu0 %1797
  %v1800 = vmul.f32 %v1793, %v1798
  %1802 = vrot.lane.b32.xlu0 %v1800, 32
  %v1803 = vpop.permute.xlu0 %1802
  %v1805 = vadd.f32 %v1795, %v1803
  %v1806 = vtanh.pop %v1805
  %1808 = vrot.lane.b32.xlu0 %v1806, 64
  %v1809 = vpop.permute.xlu0 %1808
  %v1811 = vmul.f32 %v1793, %v1809
  %1813 = vrot.lane.b32.xlu0 %v1811, 32
  %v1814 = vpop.permute.xlu0 %1813
  %1816 = vst.msk [vmem:[#allocation4 + $0x10] sm:$0xf] %vm1403, %v1814
  %v1817 = vld [vmem:[#allocation4] sm:$0xff]
  %v1818 = vld [vmem:[#allocation4 + $0x8] sm:$0xff]
  %v1819 = vld [vmem:[#allocation4 + $0x10] sm:$0xf]
  %1820 = vst.msk [vmem:[#allocation5] sm:$0xff] %vm161, %v1817
  %1821 = vst.msk [vmem:[#allocation5 + $0x8] sm:$0xff] %vm161, %v1818
  %1822 = vst.msk [vmem:[#allocation5 + $0x10] sm:$0xf] %vm1403, %v1819
  %v1823 = vld [vmem:[#allocation4] sm:$0xff]
  %v1824 = vld [vmem:[#allocation4 + $0x8] sm:$0xff]
  %v1825 = vld [vmem:[#allocation4 + $0x10] sm:$0xf]
  %v1826 = vld [vmem:[%s7] sm:$0xff]
  %v1827 = vld [vmem:[%s7 + $0x8] sm:$0xff]
  %v1828 = vld [vmem:[%s7 + $0x10] sm:$0xff]
  %v1829 = vld [vmem:[%s7 + $0x18] sm:$0xff]
  %v1830 = vld [vmem:[%s9] sm:$0x1]
  %v1832 = vlaneseq
  %v1833 = vshrl.u32 %v1832, 7
  %v1834 = vsub.s32 0, %v1833
  %v1835 = vrot.slane %v1830, %v1834
  %v1838 = vsel %vm161, %v1823, 0
  %v1841 = vsel %vm161, %v1824, 0
  %v1844 = vsel %vm161, %v1825, 0
  %1846 = vmatprep.subr.mxu0 0.0
  %1847 = vmatpush1.msra.mxu0 %v1826
  %1848 = vmatprep.subr.mxu0 0.0
  %1849 = vmatpush1.msra.mxu0 %v1827
  %1850 = vmatprep.subr.mxu0 0.0
  %1851 = vmatpush1.msra.mxu0 %v1828
  %1852 = vmatprep.subr.mxu0 0.0
  %1853 = vmatpush1.msra.mxu0 %v1829
  %1854 = vmatprep.subr.mxu0 0.0
  %1855 = vmatpush1.msra.mxu0 0.0
  %1856 = vmatprep.subr.mxu0 0.0
  %1857 = vmatpush1.msra.mxu0 0.0
  %1858 = vmatprep.subr.mxu0 0.0
  %1859 = vmatpush1.msra.mxu0 0.0
  %1860 = vmatprep.subr.mxu0 0.0
  %1861 = vmatpush1.msra.mxu0 0.0
  %1862 = vmatprep.subr.mxu0 0.0
  %1863 = vmatpush1.msra.mxu0 0.0
  %1864 = vmatprep.subr.mxu0 0.0
  %1865 = vmatpush1.msra.mxu0 0.0
  %1866 = vmatprep.subr.mxu0 0.0
  %1867 = vmatpush1.msra.mxu0 0.0
  %1868 = vmatprep.subr.mxu0 0.0
  %1869 = vmatpush1.msra.mxu0 0.0
  %1870 = vmatprep.subr.mxu0 0.0
  %1871 = vmatpush1.msra.mxu0 0.0
  %1872 = vmatprep.subr.mxu0 0.0
  %1873 = vmatpush1.msra.mxu0 0.0
  %1874 = vmatprep.subr.mxu0 0.0
  %1875 = vmatpush1.msra.mxu0 0.0
  %1876 = vmatprep.subr.mxu0 0.0
  %1877 = vmatpush1.msra.mxu0 0.0
  %1878 = vmatprep.subr.mxu0 0.0
  %1879 = vmatpush1.msra.mxu0 0.0
  %1880 = vmatprep.subr.mxu0 0.0
  %1881 = vmatpush1.msra.mxu0 0.0
  %1882 = vmatprep.subr.mxu0 0.0
  %1883 = vmatpush1.msra.mxu0 0.0
  %1884 = vmatprep.subr.mxu0 0.0
  %1885 = vmatpush1.msra.mxu0 0.0
  %1886 = vmatprep.subr.mxu0 0.0
  %1887 = vmatpush1.msra.mxu0 0.0
  %1888 = vmatprep.subr.mxu0 0.0
  %1889 = vmatpush1.msra.mxu0 0.0
  %1890 = vmatprep.subr.mxu0 0.0
  %1891 = vmatpush1.msra.mxu0 0.0
  %1892 = vmatprep.subr.mxu0 0.0
  %1893 = vmatpush1.msra.mxu0 0.0
  %1894 = vmatprep.subr.mxu0 0.0
  %1895 = vmatpush1.msra.mxu0 0.0
  %1896 = vmatprep.subr.mxu0 0.0
  %1897 = vmatpush1.msra.mxu0 0.0
  %1898 = vmatprep.subr.mxu0 0.0
  %1899 = vmatpush1.msra.mxu0 0.0
  %1900 = vmatprep.subr.mxu0 0.0
  %1901 = vmatpush1.msra.mxu0 0.0
  %1902 = vmatprep.subr.mxu0 0.0
  %1903 = vmatpush1.msra.mxu0 0.0
  %1904 = vmatprep.subr.mxu0 0.0
  %1905 = vmatpush1.msra.mxu0 0.0
  %1906 = vmatprep.subr.mxu0 0.0
  %1907 = vmatpush1.msra.mxu0 0.0
  %1908 = vmatprep.subr.mxu0 0.0
  %1909 = vmatpush1.msra.mxu0 0.0
  %1910 = vmatprep.mubr.f32.mxu0 0.0
  %1911 = vmatmul.mubr.f32.gmra.mrb[0].mxu0 %v1838
  %v1912 = vpop.f32.mrb[0].mxu0
  %v1913 = vadd.f32 %v1835, %v1912
  %v1914 = vpop.f32.mrb[0].mxu0
  %1915 = vmatprep.mubr.f32.mxu0 0.0
  %1916 = vmatmul.mubr.f32.gmra.mrb[0].mxu0 %v1841
  %v1917 = vpop.f32.mrb[0].mxu0
  %v1918 = vadd.f32 %v1835, %v1917
  %v1919 = vpop.f32.mrb[0].mxu0
  %1920 = vmatprep.mubr.f32.mxu0 0.0
  %1921 = vmatmul.mubr.f32.gmra.mrb[0].mxu0 %v1844
  %v1922 = vpop.f32.mrb[0].mxu0
  %v1923 = vadd.f32 %v1835, %v1922
  %v1924 = vpop.f32.mrb[0].mxu0
  %1925 = vdwg.mxu0
  %1926 = vst [vmem:[#allocation2] sm:$0xff] %v1913
  %1927 = vst [vmem:[#allocation2 + $0x8] sm:$0xff] %v1918
  %1928 = vst [vmem:[#allocation2 + $0x10] sm:$0xf] %v1923
  %v1929 = vld [vmem:[%s8] sm:$0xff]
  %v1930 = vld [vmem:[%s8 + $0x8] sm:$0xff]
  %v1931 = vld [vmem:[%s8 + $0x10] sm:$0xff]
  %v1932 = vld [vmem:[%s8 + $0x18] sm:$0xff]
  %v1933 = vld [vmem:[#allocation2] sm:$0xf]
  %1934 = vmatprep.subr.mxu0 0.0
  %1935 = vmatpush1.msra.mxu0 %v1929
  %1936 = vmatprep.subr.mxu0 0.0
  %1937 = vmatpush1.msra.mxu0 %v1930
  %1938 = vmatprep.subr.mxu0 0.0
  %1939 = vmatpush1.msra.mxu0 %v1931
  %1940 = vmatprep.subr.mxu0 0.0
  %1941 = vmatpush1.msra.mxu0 %v1932
  %1942 = vmatprep.subr.mxu0 0.0
  %1943 = vmatpush1.msra.mxu0 0.0
  %1944 = vmatprep.subr.mxu0 0.0
  %1945 = vmatpush1.msra.mxu0 0.0
  %1946 = vmatprep.subr.mxu0 0.0
  %1947 = vmatpush1.msra.mxu0 0.0
  %1948 = vmatprep.subr.mxu0 0.0
  %1949 = vmatpush1.msra.mxu0 0.0
  %1950 = vmatprep.subr.mxu0 0.0
  %1951 = vmatpush1.msra.mxu0 0.0
  %1952 = vmatprep.subr.mxu0 0.0
  %1953 = vmatpush1.msra.mxu0 0.0
  %1954 = vmatprep.subr.mxu0 0.0
  %1955 = vmatpush1.msra.mxu0 0.0
  %1956 = vmatprep.subr.mxu0 0.0
  %1957 = vmatpush1.msra.mxu0 0.0
  %1958 = vmatprep.subr.mxu0 0.0
  %1959 = vmatpush1.msra.mxu0 0.0
  %1960 = vmatprep.subr.mxu0 0.0
  %1961 = vmatpush1.msra.mxu0 0.0
  %1962 = vmatprep.subr.mxu0 0.0
  %1963 = vmatpush1.msra.mxu0 0.0
  %1964 = vmatprep.subr.mxu0 0.0
  %1965 = vmatpush1.msra.mxu0 0.0
  %1966 = vmatprep.subr.mxu0 0.0
  %1967 = vmatpush1.msra.mxu0 0.0
  %1968 = vmatprep.subr.mxu0 0.0
  %1969 = vmatpush1.msra.mxu0 0.0
  %1970 = vmatprep.subr.mxu0 0.0
  %1971 = vmatpush1.msra.mxu0 0.0
  %1972 = vmatprep.subr.mxu0 0.0
  %1973 = vmatpush1.msra.mxu0 0.0
  %1974 = vmatprep.subr.mxu0 0.0
  %1975 = vmatpush1.msra.mxu0 0.0
  %1976 = vmatprep.subr.mxu0 0.0
  %1977 = vmatpush1.msra.mxu0 0.0
  %1978 = vmatprep.subr.mxu0 0.0
  %1979 = vmatpush1.msra.mxu0 0.0
  %1980 = vmatprep.subr.mxu0 0.0
  %1981 = vmatpush1.msra.mxu0 0.0
  %1982 = vmatprep.subr.mxu0 0.0
  %1983 = vmatpush1.msra.mxu0 0.0
  %1984 = vmatprep.subr.mxu0 0.0
  %1985 = vmatpush1.msra.mxu0 0.0
  %1986 = vmatprep.subr.mxu0 0.0
  %1987 = vmatpush1.msra.mxu0 0.0
  %1988 = vmatprep.subr.mxu0 0.0
  %1989 = vmatpush1.msra.mxu0 0.0
  %1990 = vmatprep.subr.mxu0 0.0
  %1991 = vmatpush1.msra.mxu0 0.0
  %1992 = vmatprep.subr.mxu0 0.0
  %1993 = vmatpush1.msra.mxu0 0.0
  %1994 = vmatprep.subr.mxu0 0.0
  %1995 = vmatpush1.msra.mxu0 0.0
  %1996 = vmatprep.subr.mxu0 0.0
  %1997 = vmatpush1.msra.mxu0 0.0
  %1998 = vmatprep.mubr.f32.mxu0 0.0
  %1999 = vmatmul.mubr.f32.gmra.mrb[0].mxu0 %v163
  %v2000 = vpop.f32.mrb[0].mxu0
  %v2001 = vadd.f32 0.0, %v2000
  %v2002 = vpop.f32.mrb[0].mxu0
  %2003 = vdwg.mxu0
  %v2004 = vadd.f32 %v1933, %v2001
  %v2005 = vxor.u32 %v2004, 2147483648
  %v2006 = vmul.f32 %v2005, 1.442695
  %v2007 = vpow.pop %v2006
  %v2008 = vadd.f32 %v2007, 1.0
  %v2009 = vrcp.pop %v2008
  %v2010 = vmul.f32 1.0, %v2009
  %v2011 = vtanh.pop %v2004
  %v2012 = vmul.f32 %v2010, 0.0
  %2014 = vrot.lane.b32.xlu0 %v2011, 64
  %v2015 = vpop.permute.xlu0 %2014
  %v2017 = vmul.f32 %v2010, %v2015
  %2019 = vrot.lane.b32.xlu0 %v2017, 32
  %v2020 = vpop.permute.xlu0 %2019
  %v2022 = vadd.f32 %v2012, %v2020
  %v2023 = vtanh.pop %v2022
  %2025 = vrot.lane.b32.xlu0 %v2023, 64
  %v2026 = vpop.permute.xlu0 %2025
  %v2028 = vmul.f32 %v2010, %v2026
  %2030 = vrot.lane.b32.xlu0 %v2028, 32
  %v2031 = vpop.permute.xlu0 %2030
  %2033 = vst.msk [vmem:[#allocation3] sm:$0xf] %vm1403, %v2031
  %v2034 = vld [vmem:[#allocation2 + $0x4] sm:$0xf]
  %v2035 = vsel %vm161, %v2031, 0
  %2037 = vmatprep.subr.mxu0 0.0
  %2038 = vmatpush1.msra.mxu0 %v1929
  %2039 = vmatprep.subr.mxu0 0.0
  %2040 = vmatpush1.msra.mxu0 %v1930
  %2041 = vmatprep.subr.mxu0 0.0
  %2042 = vmatpush1.msra.mxu0 %v1931
  %2043 = vmatprep.subr.mxu0 0.0
  %2044 = vmatpush1.msra.mxu0 %v1932
  %2045 = vmatprep.subr.mxu0 0.0
  %2046 = vmatpush1.msra.mxu0 0.0
  %2047 = vmatprep.subr.mxu0 0.0
  %2048 = vmatpush1.msra.mxu0 0.0
  %2049 = vmatprep.subr.mxu0 0.0
  %2050 = vmatpush1.msra.mxu0 0.0
  %2051 = vmatprep.subr.mxu0 0.0
  %2052 = vmatpush1.msra.mxu0 0.0
  %2053 = vmatprep.subr.mxu0 0.0
  %2054 = vmatpush1.msra.mxu0 0.0
  %2055 = vmatprep.subr.mxu0 0.0
  %2056 = vmatpush1.msra.mxu0 0.0
  %2057 = vmatprep.subr.mxu0 0.0
  %2058 = vmatpush1.msra.mxu0 0.0
  %2059 = vmatprep.subr.mxu0 0.0
  %2060 = vmatpush1.msra.mxu0 0.0
  %2061 = vmatprep.subr.mxu0 0.0
  %2062 = vmatpush1.msra.mxu0 0.0
  %2063 = vmatprep.subr.mxu0 0.0
  %2064 = vmatpush1.msra.mxu0 0.0
  %2065 = vmatprep.subr.mxu0 0.0
  %2066 = vmatpush1.msra.mxu0 0.0
  %2067 = vmatprep.subr.mxu0 0.0
  %2068 = vmatpush1.msra.mxu0 0.0
  %2069 = vmatprep.subr.mxu0 0.0
  %2070 = vmatpush1.msra.mxu0 0.0
  %2071 = vmatprep.subr.mxu0 0.0
  %2072 = vmatpush1.msra.mxu0 0.0
  %2073 = vmatprep.subr.mxu0 0.0
  %2074 = vmatpush1.msra.mxu0 0.0
  %2075 = vmatprep.subr.mxu0 0.0
  %2076 = vmatpush1.msra.mxu0 0.0
  %2077 = vmatprep.subr.mxu0 0.0
  %2078 = vmatpush1.msra.mxu0 0.0
  %2079 = vmatprep.subr.mxu0 0.0
  %2080 = vmatpush1.msra.mxu0 0.0
  %2081 = vmatprep.subr.mxu0 0.0
  %2082 = vmatpush1.msra.mxu0 0.0
  %2083 = vmatprep.subr.mxu0 0.0
  %2084 = vmatpush1.msra.mxu0 0.0
  %2085 = vmatprep.subr.mxu0 0.0
  %2086 = vmatpush1.msra.mxu0 0.0
  %2087 = vmatprep.subr.mxu0 0.0
  %2088 = vmatpush1.msra.mxu0 0.0
  %2089 = vmatprep.subr.mxu0 0.0
  %2090 = vmatpush1.msra.mxu0 0.0
  %2091 = vmatprep.subr.mxu0 0.0
  %2092 = vmatpush1.msra.mxu0 0.0
  %2093 = vmatprep.subr.mxu0 0.0
  %2094 = vmatpush1.msra.mxu0 0.0
  %2095 = vmatprep.subr.mxu0 0.0
  %2096 = vmatpush1.msra.mxu0 0.0
  %2097 = vmatprep.subr.mxu0 0.0
  %2098 = vmatpush1.msra.mxu0 0.0
  %2099 = vmatprep.subr.mxu0 0.0
  %2100 = vmatpush1.msra.mxu0 0.0
  %2101 = vmatprep.mubr.f32.mxu0 0.0
  %2102 = vmatmul.mubr.f32.gmra.mrb[0].mxu0 %v2035
  %v2103 = vpop.f32.mrb[0].mxu0
  %v2104 = vadd.f32 0.0, %v2103
  %v2105 = vpop.f32.mrb[0].mxu0
  %2106 = vdwg.mxu0
  %v2107 = vadd.f32 %v2034, %v2104
  %v2108 = vxor.u32 %v2107, 2147483648
  %v2109 = vmul.f32 %v2108, 1.442695
  %v2110 = vpow.pop %v2109
  %v2111 = vadd.f32 %v2110, 1.0
  %v2112 = vrcp.pop %v2111
  %v2113 = vmul.f32 1.0, %v2112
  %v2114 = vtanh.pop %v2107
  %v2115 = vmul.f32 %v2113, %v2022
  %2117 = vrot.lane.b32.xlu0 %v2114, 64
  %v2118 = vpop.permute.xlu0 %2117
  %v2120 = vmul.f32 %v2113, %v2118
  %2122 = vrot.lane.b32.xlu0 %v2120, 32
  %v2123 = vpop.permute.xlu0 %2122
  %v2125 = vadd.f32 %v2115, %v2123
  %v2126 = vtanh.pop %v2125
  %2128 = vrot.lane.b32.xlu0 %v2126, 64
  %v2129 = vpop.permute.xlu0 %2128
  %v2131 = vmul.f32 %v2113, %v2129
  %2133 = vrot.lane.b32.xlu0 %v2131, 32
  %v2134 = vpop.permute.xlu0 %2133
  %2136 = vst.msk [vmem:[#allocation3 + $0x4] sm:$0xf] %vm1403, %v2134
  %v2137 = vld [vmem:[#allocation2 + $0x8] sm:$0xf]
  %v2138 = vsel %vm161, %v2134, 0
  %2140 = vmatprep.subr.mxu0 0.0
  %2141 = vmatpush1.msra.mxu0 %v1929
  %2142 = vmatprep.subr.mxu0 0.0
  %2143 = vmatpush1.msra.mxu0 %v1930
  %2144 = vmatprep.subr.mxu0 0.0
  %2145 = vmatpush1.msra.mxu0 %v1931
  %2146 = vmatprep.subr.mxu0 0.0
  %2147 = vmatpush1.msra.mxu0 %v1932
  %2148 = vmatprep.subr.mxu0 0.0
  %2149 = vmatpush1.msra.mxu0 0.0
  %2150 = vmatprep.subr.mxu0 0.0
  %2151 = vmatpush1.msra.mxu0 0.0
  %2152 = vmatprep.subr.mxu0 0.0
  %2153 = vmatpush1.msra.mxu0 0.0
  %2154 = vmatprep.subr.mxu0 0.0
  %2155 = vmatpush1.msra.mxu0 0.0
  %2156 = vmatprep.subr.mxu0 0.0
  %2157 = vmatpush1.msra.mxu0 0.0
  %2158 = vmatprep.subr.mxu0 0.0
  %2159 = vmatpush1.msra.mxu0 0.0
  %2160 = vmatprep.subr.mxu0 0.0
  %2161 = vmatpush1.msra.mxu0 0.0
  %2162 = vmatprep.subr.mxu0 0.0
  %2163 = vmatpush1.msra.mxu0 0.0
  %2164 = vmatprep.subr.mxu0 0.0
  %2165 = vmatpush1.msra.mxu0 0.0
  %2166 = vmatprep.subr.mxu0 0.0
  %2167 = vmatpush1.msra.mxu0 0.0
  %2168 = vmatprep.subr.mxu0 0.0
  %2169 = vmatpush1.msra.mxu0 0.0
  %2170 = vmatprep.subr.mxu0 0.0
  %2171 = vmatpush1.msra.mxu0 0.0
  %2172 = vmatprep.subr.mxu0 0.0
  %2173 = vmatpush1.msra.mxu0 0.0
  %2174 = vmatprep.subr.mxu0 0.0
  %2175 = vmatpush1.msra.mxu0 0.0
  %2176 = vmatprep.subr.mxu0 0.0
  %2177 = vmatpush1.msra.mxu0 0.0
  %2178 = vmatprep.subr.mxu0 0.0
  %2179 = vmatpush1.msra.mxu0 0.0
  %2180 = vmatprep.subr.mxu0 0.0
  %2181 = vmatpush1.msra.mxu0 0.0
  %2182 = vmatprep.subr.mxu0 0.0
  %2183 = vmatpush1.msra.mxu0 0.0
  %2184 = vmatprep.subr.mxu0 0.0
  %2185 = vmatpush1.msra.mxu0 0.0
  %2186 = vmatprep.subr.mxu0 0.0
  %2187 = vmatpush1.msra.mxu0 0.0
  %2188 = vmatprep.subr.mxu0 0.0
  %2189 = vmatpush1.msra.mxu0 0.0
  %2190 = vmatprep.subr.mxu0 0.0
  %2191 = vmatpush1.msra.mxu0 0.0
  %2192 = vmatprep.subr.mxu0 0.0
  %2193 = vmatpush1.msra.mxu0 0.0
  %2194 = vmatprep.subr.mxu0 0.0
  %2195 = vmatpush1.msra.mxu0 0.0
  %2196 = vmatprep.subr.mxu0 0.0
  %2197 = vmatpush1.msra.mxu0 0.0
  %2198 = vmatprep.subr.mxu0 0.0
  %2199 = vmatpush1.msra.mxu0 0.0
  %2200 = vmatprep.subr.mxu0 0.0
  %2201 = vmatpush1.msra.mxu0 0.0
  %2202 = vmatprep.subr.mxu0 0.0
  %2203 = vmatpush1.msra.mxu0 0.0
  %2204 = vmatprep.mubr.f32.mxu0 0.0
  %2205 = vmatmul.mubr.f32.gmra.mrb[0].mxu0 %v2138
  %v2206 = vpop.f32.mrb[0].mxu0
  %v2207 = vadd.f32 0.0, %v2206
  %v2208 = vpop.f32.mrb[0].mxu0
  %2209 = vdwg.mxu0
  %v2210 = vadd.f32 %v2137, %v2207
  %v2211 = vxor.u32 %v2210, 2147483648
  %v2212 = vmul.f32 %v2211, 1.442695
  %v2213 = vpow.pop %v2212
  %v2214 = vadd.f32 %v2213, 1.0
  %v2215 = vrcp.pop %v2214
  %v2216 = vmul.f32 1.0, %v2215
  %v2217 = vtanh.pop %v2210
  %v2218 = vmul.f32 %v2216, %v2125
  %2220 = vrot.lane.b32.xlu0 %v2217, 64
  %v2221 = vpop.permute.xlu0 %2220
  %v2223 = vmul.f32 %v2216, %v2221
  %2225 = vrot.lane.b32.xlu0 %v2223, 32
  %v2226 = vpop.permute.xlu0 %2225
  %v2228 = vadd.f32 %v2218, %v2226
  %v2229 = vtanh.pop %v2228
  %2231 = vrot.lane.b32.xlu0 %v2229, 64
  %v2232 = vpop.permute.xlu0 %2231
  %v2234 = vmul.f32 %v2216, %v2232
  %2236 = vrot.lane.b32.xlu0 %v2234, 32
  %v2237 = vpop.permute.xlu0 %2236
  %2239 = vst.msk [vmem:[#allocation3 + $0x8] sm:$0xf] %vm1403, %v2237
  %v2240 = vld [vmem:[#allocation2 + $0xc] sm:$0xf]
  %v2241 = vsel %vm161, %v2237, 0
  %2243 = vmatprep.subr.mxu0 0.0
  %2244 = vmatpush1.msra.mxu0 %v1929
  %2245 = vmatprep.subr.mxu0 0.0
  %2246 = vmatpush1.msra.mxu0 %v1930
  %2247 = vmatprep.subr.mxu0 0.0
  %2248 = vmatpush1.msra.mxu0 %v1931
  %2249 = vmatprep.subr.mxu0 0.0
  %2250 = vmatpush1.msra.mxu0 %v1932
  %2251 = vmatprep.subr.mxu0 0.0
  %2252 = vmatpush1.msra.mxu0 0.0
  %2253 = vmatprep.subr.mxu0 0.0
  %2254 = vmatpush1.msra.mxu0 0.0
  %2255 = vmatprep.subr.mxu0 0.0
  %2256 = vmatpush1.msra.mxu0 0.0
  %2257 = vmatprep.subr.mxu0 0.0
  %2258 = vmatpush1.msra.mxu0 0.0
  %2259 = vmatprep.subr.mxu0 0.0
  %2260 = vmatpush1.msra.mxu0 0.0
  %2261 = vmatprep.subr.mxu0 0.0
  %2262 = vmatpush1.msra.mxu0 0.0
  %2263 = vmatprep.subr.mxu0 0.0
  %2264 = vmatpush1.msra.mxu0 0.0
  %2265 = vmatprep.subr.mxu0 0.0
  %2266 = vmatpush1.msra.mxu0 0.0
  %2267 = vmatprep.subr.mxu0 0.0
  %2268 = vmatpush1.msra.mxu0 0.0
  %2269 = vmatprep.subr.mxu0 0.0
  %2270 = vmatpush1.msra.mxu0 0.0
  %2271 = vmatprep.subr.mxu0 0.0
  %2272 = vmatpush1.msra.mxu0 0.0
  %2273 = vmatprep.subr.mxu0 0.0
  %2274 = vmatpush1.msra.mxu0 0.0
  %2275 = vmatprep.subr.mxu0 0.0
  %2276 = vmatpush1.msra.mxu0 0.0
  %2277 = vmatprep.subr.mxu0 0.0
  %2278 = vmatpush1.msra.mxu0 0.0
  %2279 = vmatprep.subr.mxu0 0.0
  %2280 = vmatpush1.msra.mxu0 0.0
  %2281 = vmatprep.subr.mxu0 0.0
  %2282 = vmatpush1.msra.mxu0 0.0
  %2283 = vmatprep.subr.mxu0 0.0
  %2284 = vmatpush1.msra.mxu0 0.0
  %2285 = vmatprep.subr.mxu0 0.0
  %2286 = vmatpush1.msra.mxu0 0.0
  %2287 = vmatprep.subr.mxu0 0.0
  %2288 = vmatpush1.msra.mxu0 0.0
  %2289 = vmatprep.subr.mxu0 0.0
  %2290 = vmatpush1.msra.mxu0 0.0
  %2291 = vmatprep.subr.mxu0 0.0
  %2292 = vmatpush1.msra.mxu0 0.0
  %2293 = vmatprep.subr.mxu0 0.0
  %2294 = vmatpush1.msra.mxu0 0.0
  %2295 = vmatprep.subr.mxu0 0.0
  %2296 = vmatpush1.msra.mxu0 0.0
  %2297 = vmatprep.subr.mxu0 0.0
  %2298 = vmatpush1.msra.mxu0 0.0
  %2299 = vmatprep.subr.mxu0 0.0
  %2300 = vmatpush1.msra.mxu0 0.0
  %2301 = vmatprep.subr.mxu0 0.0
  %2302 = vmatpush1.msra.mxu0 0.0
  %2303 = vmatprep.subr.mxu0 0.0
  %2304 = vmatpush1.msra.mxu0 0.0
  %2305 = vmatprep.subr.mxu0 0.0
  %2306 = vmatpush1.msra.mxu0 0.0
  %2307 = vmatprep.mubr.f32.mxu0 0.0
  %2308 = vmatmul.mubr.f32.gmra.mrb[0].mxu0 %v2241
  %v2309 = vpop.f32.mrb[0].mxu0
  %v2310 = vadd.f32 0.0, %v2309
  %v2311 = vpop.f32.mrb[0].mxu0
  %2312 = vdwg.mxu0
  %v2313 = vadd.f32 %v2240, %v2310
  %v2314 = vxor.u32 %v2313, 2147483648
  %v2315 = vmul.f32 %v2314, 1.442695
  %v2316 = vpow.pop %v2315
  %v2317 = vadd.f32 %v2316, 1.0
  %v2318 = vrcp.pop %v2317
  %v2319 = vmul.f32 1.0, %v2318
  %v2320 = vtanh.pop %v2313
  %v2321 = vmul.f32 %v2319, %v2228
  %2323 = vrot.lane.b32.xlu0 %v2320, 64
  %v2324 = vpop.permute.xlu0 %2323
  %v2326 = vmul.f32 %v2319, %v2324
  %2328 = vrot.lane.b32.xlu0 %v2326, 32
  %v2329 = vpop.permute.xlu0 %2328
  %v2331 = vadd.f32 %v2321, %v2329
  %v2332 = vtanh.pop %v2331
  %2334 = vrot.lane.b32.xlu0 %v2332, 64
  %v2335 = vpop.permute.xlu0 %2334
  %v2337 = vmul.f32 %v2319, %v2335
  %2339 = vrot.lane.b32.xlu0 %v2337, 32
  %v2340 = vpop.permute.xlu0 %2339
  %2342 = vst.msk [vmem:[#allocation3 + $0xc] sm:$0xf] %vm1403, %v2340
  %v2343 = vld [vmem:[#allocation2 + $0x10] sm:$0xf]
  %v2344 = vsel %vm161, %v2340, 0
  %2346 = vmatprep.subr.mxu0 0.0
  %2347 = vmatpush1.msra.mxu0 %v1929
  %2348 = vmatprep.subr.mxu0 0.0
  %2349 = vmatpush1.msra.mxu0 %v1930
  %2350 = vmatprep.subr.mxu0 0.0
  %2351 = vmatpush1.msra.mxu0 %v1931
  %2352 = vmatprep.subr.mxu0 0.0
  %2353 = vmatpush1.msra.mxu0 %v1932
  %2354 = vmatprep.subr.mxu0 0.0
  %2355 = vmatpush1.msra.mxu0 0.0
  %2356 = vmatprep.subr.mxu0 0.0
  %2357 = vmatpush1.msra.mxu0 0.0
  %2358 = vmatprep.subr.mxu0 0.0
  %2359 = vmatpush1.msra.mxu0 0.0
  %2360 = vmatprep.subr.mxu0 0.0
  %2361 = vmatpush1.msra.mxu0 0.0
  %2362 = vmatprep.subr.mxu0 0.0
  %2363 = vmatpush1.msra.mxu0 0.0
  %2364 = vmatprep.subr.mxu0 0.0
  %2365 = vmatpush1.msra.mxu0 0.0
  %2366 = vmatprep.subr.mxu0 0.0
  %2367 = vmatpush1.msra.mxu0 0.0
  %2368 = vmatprep.subr.mxu0 0.0
  %2369 = vmatpush1.msra.mxu0 0.0
  %2370 = vmatprep.subr.mxu0 0.0
  %2371 = vmatpush1.msra.mxu0 0.0
  %2372 = vmatprep.subr.mxu0 0.0
  %2373 = vmatpush1.msra.mxu0 0.0
  %2374 = vmatprep.subr.mxu0 0.0
  %2375 = vmatpush1.msra.mxu0 0.0
  %2376 = vmatprep.subr.mxu0 0.0
  %2377 = vmatpush1.msra.mxu0 0.0
  %2378 = vmatprep.subr.mxu0 0.0
  %2379 = vmatpush1.msra.mxu0 0.0
  %2380 = vmatprep.subr.mxu0 0.0
  %2381 = vmatpush1.msra.mxu0 0.0
  %2382 = vmatprep.subr.mxu0 0.0
  %2383 = vmatpush1.msra.mxu0 0.0
  %2384 = vmatprep.subr.mxu0 0.0
  %2385 = vmatpush1.msra.mxu0 0.0
  %2386 = vmatprep.subr.mxu0 0.0
  %2387 = vmatpush1.msra.mxu0 0.0
  %2388 = vmatprep.subr.mxu0 0.0
  %2389 = vmatpush1.msra.mxu0 0.0
  %2390 = vmatprep.subr.mxu0 0.0
  %2391 = vmatpush1.msra.mxu0 0.0
  %2392 = vmatprep.subr.mxu0 0.0
  %2393 = vmatpush1.msra.mxu0 0.0
  %2394 = vmatprep.subr.mxu0 0.0
  %2395 = vmatpush1.msra.mxu0 0.0
  %2396 = vmatprep.subr.mxu0 0.0
  %2397 = vmatpush1.msra.mxu0 0.0
  %2398 = vmatprep.subr.mxu0 0.0
  %2399 = vmatpush1.msra.mxu0 0.0
  %2400 = vmatprep.subr.mxu0 0.0
  %2401 = vmatpush1.msra.mxu0 0.0
  %2402 = vmatprep.subr.mxu0 0.0
  %2403 = vmatpush1.msra.mxu0 0.0
  %2404 = vmatprep.subr.mxu0 0.0
  %2405 = vmatpush1.msra.mxu0 0.0
  %2406 = vmatprep.subr.mxu0 0.0
  %2407 = vmatpush1.msra.mxu0 0.0
  %2408 = vmatprep.subr.mxu0 0.0
  %2409 = vmatpush1.msra.mxu0 0.0
  %2410 = vmatprep.mubr.f32.mxu0 0.0
  %2411 = vmatmul.mubr.f32.gmra.mrb[0].mxu0 %v2344
  %v2412 = vpop.f32.mrb[0].mxu0
  %v2413 = vadd.f32 0.0, %v2412
  %v2414 = vpop.f32.mrb[0].mxu0
  %2415 = vdwg.mxu0
  %v2416 = vadd.f32 %v2343, %v2413
  %v2417 = vxor.u32 %v2416, 2147483648
  %v2418 = vmul.f32 %v2417, 1.442695
  %v2419 = vpow.pop %v2418
  %v2420 = vadd.f32 %v2419, 1.0
  %v2421 = vrcp.pop %v2420
  %v2422 = vmul.f32 1.0, %v2421
  %v2423 = vtanh.pop %v2416
  %v2424 = vmul.f32 %v2422, %v2331
  %2426 = vrot.lane.b32.xlu0 %v2423, 64
  %v2427 = vpop.permute.xlu0 %2426
  %v2429 = vmul.f32 %v2422, %v2427
  %2431 = vrot.lane.b32.xlu0 %v2429, 32
  %v2432 = vpop.permute.xlu0 %2431
  %v2434 = vadd.f32 %v2424, %v2432
  %v2435 = vtanh.pop %v2434
  %2437 = vrot.lane.b32.xlu0 %v2435, 64
  %v2438 = vpop.permute.xlu0 %2437
  %v2440 = vmul.f32 %v2422, %v2438
  %2442 = vrot.lane.b32.xlu0 %v2440, 32
  %v2443 = vpop.permute.xlu0 %2442
  %2445 = vst.msk [vmem:[#allocation3 + $0x10] sm:$0xf] %vm1403, %v2443
  %v2446 = vld [vmem:[#allocation3] sm:$0xff]
  %v2447 = vld [vmem:[#allocation3 + $0x8] sm:$0xff]
  %v2448 = vld [vmem:[#allocation3 + $0x10] sm:$0xf]
  %v2449 = vld [vmem:[#allocation5] sm:$0xff]
  %v2450 = vld [vmem:[#allocation5 + $0x8] sm:$0xff]
  %v2451 = vld [vmem:[#allocation5 + $0x10] sm:$0xf]
  %v2452 = vadd.f32 %v2446, %v2449
  %v2453 = vadd.f32 %v2447, %v2450
  %v2454 = vadd.f32 %v2448, %v2451
  %2455 = vst.msk [vmem:[#allocation3] sm:$0xff] %vm161, %v2452
  %2456 = vst.msk [vmem:[#allocation3 + $0x8] sm:$0xff] %vm161, %v2453
  %2457 = vst.msk [vmem:[#allocation3 + $0x10] sm:$0xf] %vm1403, %v2454
  %v2458 = vld [vmem:[#allocation3] sm:$0xff]
  %v2459 = vld [vmem:[#allocation3 + $0x8] sm:$0xff]
  %v2460 = vld [vmem:[#allocation3 + $0x10] sm:$0xf]
  %v2461 = vld [vmem:[%s10] sm:$0xff]
  %v2462 = vld [vmem:[%s10 + $0x8] sm:$0xff]
  %v2463 = vld [vmem:[%s10 + $0x10] sm:$0xff]
  %v2464 = vld [vmem:[%s10 + $0x18] sm:$0xff]
  %v2465 = vld [vmem:[%s11] sm:$0x1]
  %v2467 = vlaneseq
  %v2468 = vshrl.u32 %v2467, 7
  %v2469 = vsub.s32 0, %v2468
  %v2470 = vrot.slane %v2465, %v2469
  %v2473 = vsel %vm161, %v2458, 0
  %v2476 = vsel %vm161, %v2459, 0
  %v2479 = vsel %vm161, %v2460, 0
  %2481 = vmatprep.subr.mxu0 0.0
  %2482 = vmatpush1.msra.mxu0 %v2461
  %2483 = vmatprep.subr.mxu0 0.0
  %2484 = vmatpush1.msra.mxu0 %v2462
  %2485 = vmatprep.subr.mxu0 0.0
  %2486 = vmatpush1.msra.mxu0 %v2463
  %2487 = vmatprep.subr.mxu0 0.0
  %2488 = vmatpush1.msra.mxu0 %v2464
  %2489 = vmatprep.subr.mxu0 0.0
  %2490 = vmatpush1.msra.mxu0 0.0
  %2491 = vmatprep.subr.mxu0 0.0
  %2492 = vmatpush1.msra.mxu0 0.0
  %2493 = vmatprep.subr.mxu0 0.0
  %2494 = vmatpush1.msra.mxu0 0.0
  %2495 = vmatprep.subr.mxu0 0.0
  %2496 = vmatpush1.msra.mxu0 0.0
  %2497 = vmatprep.subr.mxu0 0.0
  %2498 = vmatpush1.msra.mxu0 0.0
  %2499 = vmatprep.subr.mxu0 0.0
  %2500 = vmatpush1.msra.mxu0 0.0
  %2501 = vmatprep.subr.mxu0 0.0
  %2502 = vmatpush1.msra.mxu0 0.0
  %2503 = vmatprep.subr.mxu0 0.0
  %2504 = vmatpush1.msra.mxu0 0.0
  %2505 = vmatprep.subr.mxu0 0.0
  %2506 = vmatpush1.msra.mxu0 0.0
  %2507 = vmatprep.subr.mxu0 0.0
  %2508 = vmatpush1.msra.mxu0 0.0
  %2509 = vmatprep.subr.mxu0 0.0
  %2510 = vmatpush1.msra.mxu0 0.0
  %2511 = vmatprep.subr.mxu0 0.0
  %2512 = vmatpush1.msra.mxu0 0.0
  %2513 = vmatprep.subr.mxu0 0.0
  %2514 = vmatpush1.msra.mxu0 0.0
  %2515 = vmatprep.subr.mxu0 0.0
  %2516 = vmatpush1.msra.mxu0 0.0
  %2517 = vmatprep.subr.mxu0 0.0
  %2518 = vmatpush1.msra.mxu0 0.0
  %2519 = vmatprep.subr.mxu0 0.0
  %2520 = vmatpush1.msra.mxu0 0.0
  %2521 = vmatprep.subr.mxu0 0.0
  %2522 = vmatpush1.msra.mxu0 0.0
  %2523 = vmatprep.subr.mxu0 0.0
  %2524 = vmatpush1.msra.mxu0 0.0
  %2525 = vmatprep.subr.mxu0 0.0
  %2526 = vmatpush1.msra.mxu0 0.0
  %2527 = vmatprep.subr.mxu0 0.0
  %2528 = vmatpush1.msra.mxu0 0.0
  %2529 = vmatprep.subr.mxu0 0.0
  %2530 = vmatpush1.msra.mxu0 0.0
  %2531 = vmatprep.subr.mxu0 0.0
  %2532 = vmatpush1.msra.mxu0 0.0
  %2533 = vmatprep.subr.mxu0 0.0
  %2534 = vmatpush1.msra.mxu0 0.0
  %2535 = vmatprep.subr.mxu0 0.0
  %2536 = vmatpush1.msra.mxu0 0.0
  %2537 = vmatprep.subr.mxu0 0.0
  %2538 = vmatpush1.msra.mxu0 0.0
  %2539 = vmatprep.subr.mxu0 0.0
  %2540 = vmatpush1.msra.mxu0 0.0
  %2541 = vmatprep.subr.mxu0 0.0
  %2542 = vmatpush1.msra.mxu0 0.0
  %2543 = vmatprep.subr.mxu0 0.0
  %2544 = vmatpush1.msra.mxu0 0.0
  %2545 = vmatprep.mubr.f32.mxu0 0.0
  %2546 = vmatmul.mubr.f32.gmra.mrb[0].mxu0 %v2473
  %v2547 = vpop.f32.mrb[0].mxu0
  %v2548 = vadd.f32 %v2470, %v2547
  %v2549 = vpop.f32.mrb[0].mxu0
  %2550 = vmatprep.mubr.f32.mxu0 0.0
  %2551 = vmatmul.mubr.f32.gmra.mrb[0].mxu0 %v2476
  %v2552 = vpop.f32.mrb[0].mxu0
  %v2553 = vadd.f32 %v2470, %v2552
  %v2554 = vpop.f32.mrb[0].mxu0
  %2555 = vmatprep.mubr.f32.mxu0 0.0
  %2556 = vmatmul.mubr.f32.gmra.mrb[0].mxu0 %v2479
  %v2557 = vpop.f32.mrb[0].mxu0
  %v2558 = vadd.f32 %v2470, %v2557
  %v2559 = vpop.f32.mrb[0].mxu0
  %2560 = vdwg.mxu0
  %v2561 = vtanh.pop %v2548
  %v2562 = vtanh.pop %v2553
  %v2563 = vtanh.pop %v2558
  %v2564 = vld [vmem:[%s12] sm:$0xff]
  %v2565 = vld [vmem:[%s12 + $0x8] sm:$0xff]
  %v2566 = vld [vmem:[%s12 + $0x10] sm:$0xff]
  %v2567 = vld [vmem:[%s12 + $0x18] sm:$0xff]
  %v2568 = vld [vmem:[%s13] sm:$0x1]
  %v2570 = vlaneseq
  %v2571 = vshrl.u32 %v2570, 7
  %v2572 = vsub.s32 0, %v2571
  %v2573 = vrot.slane %v2568, %v2572
  %v2576 = vsel %vm161, %v2561, 0
  %v2579 = vsel %vm161, %v2562, 0
  %v2582 = vsel %vm161, %v2563, 0
  %2584 = vmatprep.subr.mxu0 0.0
  %2585 = vmatpush1.msra.mxu0 %v2564
  %2586 = vmatprep.subr.mxu0 0.0
  %2587 = vmatpush1.msra.mxu0 %v2565
  %2588 = vmatprep.subr.mxu0 0.0
  %2589 = vmatpush1.msra.mxu0 %v2566
  %2590 = vmatprep.subr.mxu0 0.0
  %2591 = vmatpush1.msra.mxu0 %v2567
  %2592 = vmatprep.subr.mxu0 0.0
  %2593 = vmatpush1.msra.mxu0 0.0
  %2594 = vmatprep.subr.mxu0 0.0
  %2595 = vmatpush1.msra.mxu0 0.0
  %2596 = vmatprep.subr.mxu0 0.0
  %2597 = vmatpush1.msra.mxu0 0.0
  %2598 = vmatprep.subr.mxu0 0.0
  %2599 = vmatpush1.msra.mxu0 0.0
  %2600 = vmatprep.subr.mxu0 0.0
  %2601 = vmatpush1.msra.mxu0 0.0
  %2602 = vmatprep.subr.mxu0 0.0
  %2603 = vmatpush1.msra.mxu0 0.0
  %2604 = vmatprep.subr.mxu0 0.0
  %2605 = vmatpush1.msra.mxu0 0.0
  %2606 = vmatprep.subr.mxu0 0.0
  %2607 = vmatpush1.msra.mxu0 0.0
  %2608 = vmatprep.subr.mxu0 0.0
  %2609 = vmatpush1.msra.mxu0 0.0
  %2610 = vmatprep.subr.mxu0 0.0
  %2611 = vmatpush1.msra.mxu0 0.0
  %2612 = vmatprep.subr.mxu0 0.0
  %2613 = vmatpush1.msra.mxu0 0.0
  %2614 = vmatprep.subr.mxu0 0.0
  %2615 = vmatpush1.msra.mxu0 0.0
  %2616 = vmatprep.subr.mxu0 0.0
  %2617 = vmatpush1.msra.mxu0 0.0
  %2618 = vmatprep.subr.mxu0 0.0
  %2619 = vmatpush1.msra.mxu0 0.0
  %2620 = vmatprep.subr.mxu0 0.0
  %2621 = vmatpush1.msra.mxu0 0.0
  %2622 = vmatprep.subr.mxu0 0.0
  %2623 = vmatpush1.msra.mxu0 0.0
  %2624 = vmatprep.subr.mxu0 0.0
  %2625 = vmatpush1.msra.mxu0 0.0
  %2626 = vmatprep.subr.mxu0 0.0
  %2627 = vmatpush1.msra.mxu0 0.0
  %2628 = vmatprep.subr.mxu0 0.0
  %2629 = vmatpush1.msra.mxu0 0.0
  %2630 = vmatprep.subr.mxu0 0.0
  %2631 = vmatpush1.msra.mxu0 0.0
  %2632 = vmatprep.subr.mxu0 0.0
  %2633 = vmatpush1.msra.mxu0 0.0
  %2634 = vmatprep.subr.mxu0 0.0
  %2635 = vmatpush1.msra.mxu0 0.0
  %2636 = vmatprep.subr.mxu0 0.0
  %2637 = vmatpush1.msra.mxu0 0.0
  %2638 = vmatprep.subr.mxu0 0.0
  %2639 = vmatpush1.msra.mxu0 0.0
  %2640 = vmatprep.subr.mxu0 0.0
  %2641 = vmatpush1.msra.mxu0 0.0
  %2642 = vmatprep.subr.mxu0 0.0
  %2643 = vmatpush1.msra.mxu0 0.0
  %2644 = vmatprep.subr.mxu0 0.0
  %2645 = vmatpush1.msra.mxu0 0.0
  %2646 = vmatprep.subr.mxu0 0.0
  %2647 = vmatpush1.msra.mxu0 0.0
  %2648 = vmatprep.mubr.f32.mxu0 0.0
  %2649 = vmatmul.mubr.f32.gmra.mrb[0].mxu0 %v2576
  %v2650 = vpop.f32.mrb[0].mxu0
  %v2651 = vadd.f32 %v2573, %v2650
  %v2652 = vpop.f32.mrb[0].mxu0
  %2653 = vmatprep.mubr.f32.mxu0 0.0
  %2654 = vmatmul.mubr.f32.gmra.mrb[0].mxu0 %v2579
  %v2655 = vpop.f32.mrb[0].mxu0
  %v2656 = vadd.f32 %v2573, %v2655
  %v2657 = vpop.f32.mrb[0].mxu0
  %2658 = vmatprep.mubr.f32.mxu0 0.0
  %2659 = vmatmul.mubr.f32.gmra.mrb[0].mxu0 %v2582
  %v2660 = vpop.f32.mrb[0].mxu0
  %v2661 = vadd.f32 %v2573, %v2660
  %v2662 = vpop.f32.mrb[0].mxu0
  %2663 = vdwg.mxu0
  %2664 = vst [vmem:[%s14] sm:$0xff] %v2651
  %2665 = vst [vmem:[%s14 + $0x8] sm:$0xff] %v2656
  %2666 = vst [vmem:[%s14 + $0x10] sm:$0xf] %v2661
  // Predicated region
  $region58: #{fwd.1} parent=0 // pred_check
    _
  $region59: #{fwd.1} parent=0 // pred_check_branch
    %2668 = sbr.rel (0) target = $region61
  $region60: #{fwd.1} parent=0 // pred_region
    _
  $region61: #{fwd.1} parent=0 // pred_fallthru
    _
  // Predicated region
  $region62: #{fwd.1} parent=0 // pred_check
    _
  $region63: #{fwd.1} parent=0 // pred_check_branch
    %2670 = sbr.rel (0) target = $region65
  $region64: #{fwd.1} parent=0 // pred_region
    _
  $region65: #{fwd.1} parent=0 // pred_fallthru
    _

</llo_original>
